<compile_context>
chip_gen: v7x
topology: tpu7x:2x2x1
jax: 0.10.0
libtpu: 0.0.40
codegen_flags: <defaults>
</compile_context>

<pallas_src>
import functools

import jax
import jax.numpy as jnp
from jax.experimental import pallas as pl
from jax.experimental.pallas import tpu as pltpu


def _encoder_kernel(num_heads, approx_recip,
                    x_ref,
                    wqkv_ref, bqkv_ref, wo_ref, bo_ref,
                    gamma_ref, beta_ref,
                    w1_ref, b1_ref, w2_ref, b2_ref,
                    o_ref,
                    qkv_ref):
    qi = pl.program_id(1)
    S, D = x_ref.shape                        # full sequence for this batch element
    tq = o_ref.shape[0]                       # query-tile rows
    H = num_heads
    hd = D // H

    # --- Fused QKV projection: ONE (S,D)@(D,3D) matmul per batch element. ---
    # 1/sqrt(hd) is pre-folded into the q columns of wqkv/bqkv (pack_params).
    @pl.when(qi == 0)
    def _():
        x_bf = x_ref[...].astype(jnp.bfloat16)
        qkv = jnp.dot(x_bf, wqkv_ref[...],
                      preferred_element_type=jnp.float32) + bqkv_ref[...]
        qkv_ref[...] = qkv.astype(jnp.bfloat16)

    row0 = pl.multiple_of(qi * tq, tq)
    q_rows = qkv_ref[pl.ds(row0, tq), :]                       # (tq, 3D) bf16
    kv_all = qkv_ref[...]                                      # (S, 3D) bf16
    q2 = q_rows[:, 0:D]                                        # (tq, D) scaled q
    k2 = kv_all[:, D:2 * D]                                    # (S, D)
    v2 = kv_all[:, 2 * D:3 * D]                                # (S, D)

    # --- Head-batched attention: head axis is the dot_general batch dim. ---
    q3 = jnp.stack([q2[:, h * hd:(h + 1) * hd] for h in range(H)], axis=0)   # (H, tq, hd)
    k3 = jnp.stack([k2[:, h * hd:(h + 1) * hd] for h in range(H)], axis=0)   # (H, S, hd)
    v3 = jnp.stack([v2[:, h * hd:(h + 1) * hd] for h in range(H)], axis=0)   # (H, S, hd)

    s = jax.lax.dot_general(q3, k3, (((2,), (2,)), ((0,), (0,))),
                            preferred_element_type=jnp.float32)              # (H, tq, S)
    s = s - jnp.max(s, axis=-1, keepdims=True)
    p = jnp.exp(s)
    denom = jnp.sum(p, axis=-1, keepdims=True)
    if approx_recip:
        p = p * pl.reciprocal(denom, approx=True)
    else:
        p = p / denom
    ctx3 = jax.lax.dot_general(p.astype(jnp.bfloat16), v3,
                               (((2,), (1,)), ((0,), (0,))),
                               preferred_element_type=jnp.float32)           # (H, tq, hd)

    # Assemble (tq, D) context, then ONE dense K=D output projection.
    ctx = jnp.concatenate([ctx3[h] for h in range(H)], axis=-1)              # (tq, D) f32
    attn = jnp.dot(ctx.astype(jnp.bfloat16), wo_ref[...],
                   preferred_element_type=jnp.float32) + bo_ref[...]

    # --- Residual + LayerNorm (kept f32). ---
    x_q = x_ref[pl.ds(row0, tq), :]                                          # (tq, D) f32
    x1 = x_q + attn
    mean = jnp.mean(x1, axis=-1, keepdims=True)
    cent = x1 - mean
    var = jnp.mean(cent * cent, axis=-1, keepdims=True)
    xn = cent * jax.lax.rsqrt(var + 1e-5)
    xn = xn * gamma_ref[...] + beta_ref[...]

    # --- FFN: Linear -> ReLU -> Linear -> ReLU, residual from post-LN xn. ---
    h1 = jnp.dot(xn.astype(jnp.bfloat16), w1_ref[...],
                 preferred_element_type=jnp.float32) + b1_ref[...]
    h1 = jnp.maximum(h1, 0.0)
    h2 = jnp.dot(h1.astype(jnp.bfloat16), w2_ref[...],
                 preferred_element_type=jnp.float32) + b2_ref[...]
    h2 = jnp.maximum(h2, 0.0)

    o_ref[...] = (h2 + xn).astype(o_ref.dtype)


def _vmem_limit_bytes():
    """Derive a per-chip VMEM budget: ~109 MiB on v5e/v6e, ~54 MiB on v7x."""
    try:
        cap = int(pltpu.get_tpu_info().vmem_capacity_bytes)
    except Exception:
        cap = 64 * 1024 * 1024
    return max(32 * 1024 * 1024, min(int(cap * 0.85), 112 * 1024 * 1024))


def encoder_block(x, kparams, num_heads, *, tq=None, approx_recip=True):
    """x: (B, S, D) float32. kparams: dict from pack_params()."""
    B, S, D = x.shape
    assert D % num_heads == 0, "num_heads must divide dim"
    if tq is None:
        tq = S                      # whole-sequence query tile (review: never tq=64)
    assert S % tq == 0, "tq must divide S"
    n_qt = S // tq
    # TODO(synk): for very long S on v7x (64 MiB VMEM), add a KV-tile grid axis
    # with online (flash-style) softmax instead of the whole-sequence (S,3D) scratch.

    def resident():
        # Whole-array, single-buffered VMEM-resident weights (no per-step DMA).
        return pl.BlockSpec(memory_space=pltpu.MemorySpace.VMEM)

    param_order = ["wqkv", "bqkv", "wo", "bo", "gamma", "beta",
                   "w1", "b1", "w2", "b2"]

    # Single x stream: full (S, D) block per batch element; its block index does
    # not change with qi, so it is not re-fetched across query tiles.
    in_specs = [pl.BlockSpec((None, S, D), lambda b, qi: (b, 0, 0))]
    args = [x]
    for name in param_order:
        in_specs.append(resident())
        args.append(kparams[name])

    return pl.pallas_call(
        functools.partial(_encoder_kernel, num_heads, approx_recip),
        out_shape=jax.ShapeDtypeStruct((B, S, D), x.dtype),
        grid_spec=pltpu.PrefetchScalarGridSpec(
            num_scalar_prefetch=0,
            grid=(B, n_qt),
            in_specs=in_specs,
            out_specs=pl.BlockSpec((None, tq, D), lambda b, qi: (b, qi, 0)),
            scratch_shapes=[pltpu.VMEM((S, 3 * D), jnp.bfloat16)],  # cached QKV
        ),
        compiler_params=pltpu.CompilerParams(
            # qi axis carries the QKV scratch cache -> "arbitrary".
            dimension_semantics=("parallel", "arbitrary"),
            vmem_limit_bytes=_vmem_limit_bytes(),
        ),
    )(*args)


def init_params(key, dim):
    """Deterministic synthetic f32 parameters (shapes follow the PyTorch module)."""
    ks = jax.random.split(key, 8)
    scl = 0.1

    def mat(k):
        return (scl * jax.random.normal(k, (dim, dim))).astype(jnp.float32)

    def vec(k):
        return (scl * jax.random.normal(k, (1, dim))).astype(jnp.float32)

    return {
        "wq": mat(ks[0]), "bq": vec(ks[0]),
        "wk": mat(ks[1]), "bk": vec(ks[1]),
        "wv": mat(ks[2]), "bv": vec(ks[2]),
        "wo": mat(ks[3]), "bo": vec(ks[3]),
        "gamma": jnp.ones((1, dim), jnp.float32),
        "beta": jnp.zeros((1, dim), jnp.float32),
        "w1": mat(ks[4]), "b1": vec(ks[5]),
        "w2": mat(ks[6]), "b2": vec(ks[7]),
    }


def pack_params(p, num_heads):
    """Kernel-side layout: fused Q|K|V weight with 1/sqrt(hd) folded into the
    q columns, bf16 weights (MXU operands), f32 biases/LN params."""
    dim = p["wq"].shape[0]
    hd = dim // num_heads
    scale = 1.0 / jnp.sqrt(jnp.float32(hd))

    def bf(a):
        return a.astype(jnp.bfloat16)

    wqkv = jnp.concatenate([p["wq"] * scale, p["wk"], p["wv"]], axis=1)   # (D, 3D)
    bqkv = jnp.concatenate([p["bq"] * scale, p["bk"], p["bv"]], axis=1)   # (1, 3D)
    return {
        "wqkv": bf(wqkv), "bqkv": bqkv,
        "wo": bf(p["wo"]), "bo": p["bo"],
        "gamma": p["gamma"], "beta": p["beta"],
        "w1": bf(p["w1"]), "b1": p["b1"],
        "w2": bf(p["w2"]), "b2": p["b2"],
    }


def encoder_block_ref(x, p, num_heads):
    """Pure-JAX f32 reference for correctness checking."""
    B, S, D = x.shape
    hd = D // num_heads
    q = x @ p["wq"] + p["bq"][0]
    k = x @ p["wk"] + p["bk"][0]
    v = x @ p["wv"] + p["bv"][0]

    def split(t):
        return t.reshape(B, S, num_heads, hd).transpose(0, 2, 1, 3)  # (B,H,S,hd)

    qh, kh, vh = split(q), split(k), split(v)
    s = jnp.einsum("bhqd,bhkd->bhqk", qh, kh) / jnp.sqrt(jnp.float32(hd))
    pmat = jax.nn.softmax(s, axis=-1)
    attn = jnp.einsum("bhqk,bhkd->bhqd", pmat, vh).transpose(0, 2, 1, 3).reshape(B, S, D)
    attn = attn @ p["wo"] + p["bo"][0]

    x1 = x + attn
    mean = jnp.mean(x1, axis=-1, keepdims=True)
    var = jnp.mean((x1 - mean) ** 2, axis=-1, keepdims=True)
    xn = (x1 - mean) / jnp.sqrt(var + 1e-5) * p["gamma"][0] + p["beta"][0]

    h1 = jnp.maximum(xn @ p["w1"] + p["b1"][0], 0.0)
    h2 = jnp.maximum(h1 @ p["w2"] + p["b2"][0], 0.0)
    return h2 + xn


if __name__ == "__main__":
    # Lane-dense model dim (D = 128); tq defaults to S (whole-sequence tile),
    # grid = (B, 1) with the batch axis "parallel".
    B, S, D, H = 2, 128, 128, 8
    key = jax.random.PRNGKey(0)
    kx, kp = jax.random.split(key)
    x = jax.random.normal(kx, (B, S, D), jnp.float32)
    params = init_params(kp, D)

    out = encoder_block(x, pack_params(params, H), H)
    out = jax.block_until_ready(out)

    ref = encoder_block_ref(x, params, H)
    assert out.shape == (B, S, D)
    max_err = jnp.max(jnp.abs(out - ref))
    # bf16 MXU operands with f32 accumulation -> looser tolerance than pure f32.
    assert jnp.allclose(out, ref, atol=5e-2, rtol=5e-2), f"max abs err {max_err}"
    print("KERNEL_OK")
</pallas_src>

<mosaic_0001>
module attributes {stable_mosaic.version = 11 : i64} {
  func.func @_encoder_kernel(%arg0: i32, %arg1: i32, %arg2: memref<1x128x128xf32, #tpu.memory_space<vmem>>, %arg3: memref<128x384xbf16, #tpu.memory_space<vmem>>, %arg4: memref<1x384xf32, #tpu.memory_space<vmem>>, %arg5: memref<128x128xbf16, #tpu.memory_space<vmem>>, %arg6: memref<1x128xf32, #tpu.memory_space<vmem>>, %arg7: memref<1x128xf32, #tpu.memory_space<vmem>>, %arg8: memref<1x128xf32, #tpu.memory_space<vmem>>, %arg9: memref<128x128xbf16, #tpu.memory_space<vmem>>, %arg10: memref<1x128xf32, #tpu.memory_space<vmem>>, %arg11: memref<128x128xbf16, #tpu.memory_space<vmem>>, %arg12: memref<1x128xf32, #tpu.memory_space<vmem>>, %arg13: memref<1x128x128xf32, #tpu.memory_space<vmem>>, %arg14: memref<128x384xbf16, #tpu.memory_space<vmem>>) attributes {dimension_semantics = [#tpu.dimension_semantics<parallel>, #tpu.dimension_semantics<arbitrary>], iteration_bounds = array<i64: 2, 1>, scalar_prefetch = 0 : i64, scratch_operands = 1 : i64, tpu.core_type = #tpu.core_type<tc>, window_params = [{transform_indices = @transform_0, window_bounds = array<i64: 1, 128, 128>}, {pipeline_mode = #tpu.pipeline_mode<synchronous>, transform_indices = @transform_1, window_bounds = array<i64: 128, 384>}, {pipeline_mode = #tpu.pipeline_mode<synchronous>, transform_indices = @transform_2, window_bounds = array<i64: 1, 384>}, {pipeline_mode = #tpu.pipeline_mode<synchronous>, transform_indices = @transform_3, window_bounds = array<i64: 128, 128>}, {pipeline_mode = #tpu.pipeline_mode<synchronous>, transform_indices = @transform_4, window_bounds = array<i64: 1, 128>}, {pipeline_mode = #tpu.pipeline_mode<synchronous>, transform_indices = @transform_5, window_bounds = array<i64: 1, 128>}, {pipeline_mode = #tpu.pipeline_mode<synchronous>, transform_indices = @transform_6, window_bounds = array<i64: 1, 128>}, {pipeline_mode = #tpu.pipeline_mode<synchronous>, transform_indices = @transform_7, window_bounds = array<i64: 128, 128>}, {pipeline_mode = #tpu.pipeline_mode<synchronous>, transform_indices = @transform_8, window_bounds = array<i64: 1, 128>}, {pipeline_mode = #tpu.pipeline_mode<synchronous>, transform_indices = @transform_9, window_bounds = array<i64: 128, 128>}, {pipeline_mode = #tpu.pipeline_mode<synchronous>, transform_indices = @transform_10, window_bounds = array<i64: 1, 128>}, {transform_indices = @transform_11, window_bounds = array<i64: 1, 128, 128>}]} {
    %c0_i32 = arith.constant 0 : i32
    %0 = arith.cmpi eq, %arg1, %c0_i32 : i32
    %1 = arith.extui %0 : i1 to i32
    %c0_i32_0 = arith.constant 0 : i32
    %2 = arith.cmpi ne, %1, %c0_i32_0 : i32
    scf.if %2 {
      %c0_37 = arith.constant 0 : index
      %c0_38 = arith.constant 0 : index
      %c0_39 = arith.constant 0 : index
      %144 = vector.load %arg2[%c0_37, %c0_38, %c0_39] : memref<1x128x128xf32, #tpu.memory_space<vmem>>, vector<1x128x128xf32>
      %145 = vector.shape_cast %144 : vector<1x128x128xf32> to vector<128x128xf32>
      %146 = arith.truncf %145 : vector<128x128xf32> to vector<128x128xbf16>
      %c0_40 = arith.constant 0 : index
      %c0_41 = arith.constant 0 : index
      %147 = vector.load %arg3[%c0_40, %c0_41] : memref<128x384xbf16, #tpu.memory_space<vmem>>, vector<128x384xbf16>
      %cst_42 = arith.constant dense<0.000000e+00> : vector<128x384xf32>
      %148 = tpu.matmul %146, %147, %cst_42 {dimension_numbers = #tpu.dot_dimension_numbers<[1], [0], [0], [1], [0, 0, 1, 1], [], []>} : vector<128x128xbf16>, vector<128x384xbf16>, vector<128x384xf32> -> vector<128x384xf32>
      %c0_43 = arith.constant 0 : index
      %c0_44 = arith.constant 0 : index
      %149 = vector.load %arg4[%c0_43, %c0_44] : memref<1x384xf32, #tpu.memory_space<vmem>>, vector<1x384xf32>
      %150 = vector.broadcast %149 : vector<1x384xf32> to vector<128x384xf32>
      %151 = arith.addf %148, %150 : vector<128x384xf32>
      %152 = arith.truncf %151 : vector<128x384xf32> to vector<128x384xbf16>
      %c0_45 = arith.constant 0 : index
      %c0_46 = arith.constant 0 : index
      %153 = vector.load %arg14[%c0_45, %c0_46] : memref<128x384xbf16, #tpu.memory_space<vmem>>, vector<128x384xbf16>
      tpu.vector_store %arg14[%c0_45, %c0_46], %152 {strides = array<i32>} : memref<128x384xbf16, #tpu.memory_space<vmem>>, vector<128x384xbf16>,
    } else {
    }
    %c128_i32 = arith.constant 128 : i32
    %3 = arith.muli %arg1, %c128_i32 : i32
    %4 = tpu.assume_multiple %3, 128 : i32
    %5 = arith.index_cast %4 : i32 to index
    %c0 = arith.constant 0 : index
    %6 = vector.load %arg14[%5, %c0] : memref<128x384xbf16, #tpu.memory_space<vmem>>, vector<128x384xbf16>
    %c0_1 = arith.constant 0 : index
    %c0_2 = arith.constant 0 : index
    %7 = vector.load %arg14[%c0_1, %c0_2] : memref<128x384xbf16, #tpu.memory_space<vmem>>, vector<128x384xbf16>
    %8 = vector.extract_strided_slice %6 {offsets = [0, 0], sizes = [128, 128], strides = [1, 1]} : vector<128x384xbf16> to vector<128x128xbf16>
    %9 = vector.extract_strided_slice %7 {offsets = [0, 128], sizes = [128, 128], strides = [1, 1]} : vector<128x384xbf16> to vector<128x128xbf16>
    %10 = vector.extract_strided_slice %7 {offsets = [0, 256], sizes = [128, 128], strides = [1, 1]} : vector<128x384xbf16> to vector<128x128xbf16>
    %11 = vector.extract_strided_slice %8 {offsets = [0, 0], sizes = [128, 16], strides = [1, 1]} : vector<128x128xbf16> to vector<128x16xbf16>
    %12 = vector.extract_strided_slice %8 {offsets = [0, 16], sizes = [128, 16], strides = [1, 1]} : vector<128x128xbf16> to vector<128x16xbf16>
    %13 = vector.extract_strided_slice %8 {offsets = [0, 32], sizes = [128, 16], strides = [1, 1]} : vector<128x128xbf16> to vector<128x16xbf16>
    %14 = vector.extract_strided_slice %8 {offsets = [0, 48], sizes = [128, 16], strides = [1, 1]} : vector<128x128xbf16> to vector<128x16xbf16>
    %15 = vector.extract_strided_slice %8 {offsets = [0, 64], sizes = [128, 16], strides = [1, 1]} : vector<128x128xbf16> to vector<128x16xbf16>
    %16 = vector.extract_strided_slice %8 {offsets = [0, 80], sizes = [128, 16], strides = [1, 1]} : vector<128x128xbf16> to vector<128x16xbf16>
    %17 = vector.extract_strided_slice %8 {offsets = [0, 96], sizes = [128, 16], strides = [1, 1]} : vector<128x128xbf16> to vector<128x16xbf16>
    %18 = vector.extract_strided_slice %8 {offsets = [0, 112], sizes = [128, 16], strides = [1, 1]} : vector<128x128xbf16> to vector<128x16xbf16>
    %19 = vector.shape_cast %11 : vector<128x16xbf16> to vector<1x128x16xbf16>
    %20 = vector.shape_cast %12 : vector<128x16xbf16> to vector<1x128x16xbf16>
    %21 = vector.shape_cast %13 : vector<128x16xbf16> to vector<1x128x16xbf16>
    %22 = vector.shape_cast %14 : vector<128x16xbf16> to vector<1x128x16xbf16>
    %23 = vector.shape_cast %15 : vector<128x16xbf16> to vector<1x128x16xbf16>
    %24 = vector.shape_cast %16 : vector<128x16xbf16> to vector<1x128x16xbf16>
    %25 = vector.shape_cast %17 : vector<128x16xbf16> to vector<1x128x16xbf16>
    %26 = vector.shape_cast %18 : vector<128x16xbf16> to vector<1x128x16xbf16>
    %27 = tpu.concatenate %19, %20, %21, %22, %23, %24, %25, %26 in 0 : vector<1x128x16xbf16>, vector<1x128x16xbf16>, vector<1x128x16xbf16>, vector<1x128x16xbf16>, vector<1x128x16xbf16>, vector<1x128x16xbf16>, vector<1x128x16xbf16>, vector<1x128x16xbf16> -> vector<8x128x16xbf16>
    %28 = vector.extract_strided_slice %9 {offsets = [0, 0], sizes = [128, 16], strides = [1, 1]} : vector<128x128xbf16> to vector<128x16xbf16>
    %29 = vector.extract_strided_slice %9 {offsets = [0, 16], sizes = [128, 16], strides = [1, 1]} : vector<128x128xbf16> to vector<128x16xbf16>
    %30 = vector.extract_strided_slice %9 {offsets = [0, 32], sizes = [128, 16], strides = [1, 1]} : vector<128x128xbf16> to vector<128x16xbf16>
    %31 = vector.extract_strided_slice %9 {offsets = [0, 48], sizes = [128, 16], strides = [1, 1]} : vector<128x128xbf16> to vector<128x16xbf16>
    %32 = vector.extract_strided_slice %9 {offsets = [0, 64], sizes = [128, 16], strides = [1, 1]} : vector<128x128xbf16> to vector<128x16xbf16>
    %33 = vector.extract_strided_slice %9 {offsets = [0, 80], sizes = [128, 16], strides = [1, 1]} : vector<128x128xbf16> to vector<128x16xbf16>
    %34 = vector.extract_strided_slice %9 {offsets = [0, 96], sizes = [128, 16], strides = [1, 1]} : vector<128x128xbf16> to vector<128x16xbf16>
    %35 = vector.extract_strided_slice %9 {offsets = [0, 112], sizes = [128, 16], strides = [1, 1]} : vector<128x128xbf16> to vector<128x16xbf16>
    %36 = vector.shape_cast %28 : vector<128x16xbf16> to vector<1x128x16xbf16>
    %37 = vector.shape_cast %29 : vector<128x16xbf16> to vector<1x128x16xbf16>
    %38 = vector.shape_cast %30 : vector<128x16xbf16> to vector<1x128x16xbf16>
    %39 = vector.shape_cast %31 : vector<128x16xbf16> to vector<1x128x16xbf16>
    %40 = vector.shape_cast %32 : vector<128x16xbf16> to vector<1x128x16xbf16>
    %41 = vector.shape_cast %33 : vector<128x16xbf16> to vector<1x128x16xbf16>
    %42 = vector.shape_cast %34 : vector<128x16xbf16> to vector<1x128x16xbf16>
    %43 = vector.shape_cast %35 : vector<128x16xbf16> to vector<1x128x16xbf16>
    %44 = tpu.concatenate %36, %37, %38, %39, %40, %41, %42, %43 in 0 : vector<1x128x16xbf16>, vector<1x128x16xbf16>, vector<1x128x16xbf16>, vector<1x128x16xbf16>, vector<1x128x16xbf16>, vector<1x128x16xbf16>, vector<1x128x16xbf16>, vector<1x128x16xbf16> -> vector<8x128x16xbf16>
    %45 = vector.extract_strided_slice %10 {offsets = [0, 0], sizes = [128, 16], strides = [1, 1]} : vector<128x128xbf16> to vector<128x16xbf16>
    %46 = vector.extract_strided_slice %10 {offsets = [0, 16], sizes = [128, 16], strides = [1, 1]} : vector<128x128xbf16> to vector<128x16xbf16>
    %47 = vector.extract_strided_slice %10 {offsets = [0, 32], sizes = [128, 16], strides = [1, 1]} : vector<128x128xbf16> to vector<128x16xbf16>
    %48 = vector.extract_strided_slice %10 {offsets = [0, 48], sizes = [128, 16], strides = [1, 1]} : vector<128x128xbf16> to vector<128x16xbf16>
    %49 = vector.extract_strided_slice %10 {offsets = [0, 64], sizes = [128, 16], strides = [1, 1]} : vector<128x128xbf16> to vector<128x16xbf16>
    %50 = vector.extract_strided_slice %10 {offsets = [0, 80], sizes = [128, 16], strides = [1, 1]} : vector<128x128xbf16> to vector<128x16xbf16>
    %51 = vector.extract_strided_slice %10 {offsets = [0, 96], sizes = [128, 16], strides = [1, 1]} : vector<128x128xbf16> to vector<128x16xbf16>
    %52 = vector.extract_strided_slice %10 {offsets = [0, 112], sizes = [128, 16], strides = [1, 1]} : vector<128x128xbf16> to vector<128x16xbf16>
    %53 = vector.shape_cast %45 : vector<128x16xbf16> to vector<1x128x16xbf16>
    %54 = vector.shape_cast %46 : vector<128x16xbf16> to vector<1x128x16xbf16>
    %55 = vector.shape_cast %47 : vector<128x16xbf16> to vector<1x128x16xbf16>
    %56 = vector.shape_cast %48 : vector<128x16xbf16> to vector<1x128x16xbf16>
    %57 = vector.shape_cast %49 : vector<128x16xbf16> to vector<1x128x16xbf16>
    %58 = vector.shape_cast %50 : vector<128x16xbf16> to vector<1x128x16xbf16>
    %59 = vector.shape_cast %51 : vector<128x16xbf16> to vector<1x128x16xbf16>
    %60 = vector.shape_cast %52 : vector<128x16xbf16> to vector<1x128x16xbf16>
    %61 = tpu.concatenate %53, %54, %55, %56, %57, %58, %59, %60 in 0 : vector<1x128x16xbf16>, vector<1x128x16xbf16>, vector<1x128x16xbf16>, vector<1x128x16xbf16>, vector<1x128x16xbf16>, vector<1x128x16xbf16>, vector<1x128x16xbf16>, vector<1x128x16xbf16> -> vector<8x128x16xbf16>
    %cst = arith.constant dense<0.000000e+00> : vector<8x128x128xf32>
    %62 = tpu.matmul %27, %44, %cst {dimension_numbers = #tpu.dot_dimension_numbers<[2], [2], [1], [1], [0, 0, 0, 1, 1, 1], [0], [0]>} : vector<8x128x16xbf16>, vector<8x128x16xbf16>, vector<8x128x128xf32> -> vector<8x128x128xf32>
    %cst_3 = arith.constant dense<0xFF800000> : vector<8x128xf32>
    %63 = vector.multi_reduction <maximumf>, %62, %cst_3 [2] : vector<8x128x128xf32> to vector<8x128xf32>
    %64 = vector.shape_cast %63 : vector<8x128xf32> to vector<8x128x1xf32>
    %65 = vector.broadcast %64 : vector<8x128x1xf32> to vector<8x128x128xf32>
    %66 = arith.subf %62, %65 : vector<8x128x128xf32>
    %67 = math.exp %66 : vector<8x128x128xf32>
    %cst_4 = arith.constant dense<0.000000e+00> : vector<8x128xf32>
    %68 = vector.multi_reduction <add>, %67, %cst_4 [2] : vector<8x128x128xf32> to vector<8x128xf32>
    %69 = vector.shape_cast %68 : vector<8x128xf32> to vector<8x128x1xf32>
    %70 = tpu.reciprocal %69 {approx = true} : vector<8x128x1xf32> -> vector<8x128x1xf32>
    %71 = vector.broadcast %70 : vector<8x128x1xf32> to vector<8x128x128xf32>
    %72 = arith.mulf %67, %71 : vector<8x128x128xf32>
    %73 = arith.truncf %72 : vector<8x128x128xf32> to vector<8x128x128xbf16>
    %cst_5 = arith.constant dense<0.000000e+00> : vector<8x128x16xf32>
    %74 = tpu.matmul %73, %61, %cst_5 {dimension_numbers = #tpu.dot_dimension_numbers<[2], [1], [1], [2], [0, 0, 0, 1, 1, 2], [0], [0]>} : vector<8x128x128xbf16>, vector<8x128x16xbf16>, vector<8x128x16xf32> -> vector<8x128x16xf32>
    %75 = vector.extract_strided_slice %74 {offsets = [0, 0, 0], sizes = [1, 128, 16], strides = [1, 1, 1]} : vector<8x128x16xf32> to vector<1x128x16xf32>
    %76 = vector.shape_cast %75 : vector<1x128x16xf32> to vector<128x16xf32>
    %77 = vector.extract_strided_slice %74 {offsets = [1, 0, 0], sizes = [1, 128, 16], strides = [1, 1, 1]} : vector<8x128x16xf32> to vector<1x128x16xf32>
    %78 = vector.shape_cast %77 : vector<1x128x16xf32> to vector<128x16xf32>
    %79 = vector.extract_strided_slice %74 {offsets = [2, 0, 0], sizes = [1, 128, 16], strides = [1, 1, 1]} : vector<8x128x16xf32> to vector<1x128x16xf32>
    %80 = vector.shape_cast %79 : vector<1x128x16xf32> to vector<128x16xf32>
    %81 = vector.extract_strided_slice %74 {offsets = [3, 0, 0], sizes = [1, 128, 16], strides = [1, 1, 1]} : vector<8x128x16xf32> to vector<1x128x16xf32>
    %82 = vector.shape_cast %81 : vector<1x128x16xf32> to vector<128x16xf32>
    %83 = vector.extract_strided_slice %74 {offsets = [4, 0, 0], sizes = [1, 128, 16], strides = [1, 1, 1]} : vector<8x128x16xf32> to vector<1x128x16xf32>
    %84 = vector.shape_cast %83 : vector<1x128x16xf32> to vector<128x16xf32>
    %85 = vector.extract_strided_slice %74 {offsets = [5, 0, 0], sizes = [1, 128, 16], strides = [1, 1, 1]} : vector<8x128x16xf32> to vector<1x128x16xf32>
    %86 = vector.shape_cast %85 : vector<1x128x16xf32> to vector<128x16xf32>
    %87 = vector.extract_strided_slice %74 {offsets = [6, 0, 0], sizes = [1, 128, 16], strides = [1, 1, 1]} : vector<8x128x16xf32> to vector<1x128x16xf32>
    %88 = vector.shape_cast %87 : vector<1x128x16xf32> to vector<128x16xf32>
    %89 = vector.extract_strided_slice %74 {offsets = [7, 0, 0], sizes = [1, 128, 16], strides = [1, 1, 1]} : vector<8x128x16xf32> to vector<1x128x16xf32>
    %90 = vector.shape_cast %89 : vector<1x128x16xf32> to vector<128x16xf32>
    %91 = tpu.concatenate %76, %78, %80, %82, %84, %86, %88, %90 in 1 : vector<128x16xf32>, vector<128x16xf32>, vector<128x16xf32>, vector<128x16xf32>, vector<128x16xf32>, vector<128x16xf32>, vector<128x16xf32>, vector<128x16xf32> -> vector<128x128xf32>
    %92 = arith.truncf %91 : vector<128x128xf32> to vector<128x128xbf16>
    %c0_6 = arith.constant 0 : index
    %c0_7 = arith.constant 0 : index
    %93 = vector.load %arg5[%c0_6, %c0_7] : memref<128x128xbf16, #tpu.memory_space<vmem>>, vector<128x128xbf16>
    %cst_8 = arith.constant dense<0.000000e+00> : vector<128x128xf32>
    %94 = tpu.matmul %92, %93, %cst_8 {dimension_numbers = #tpu.dot_dimension_numbers<[1], [0], [0], [1], [0, 0, 1, 1], [], []>} : vector<128x128xbf16>, vector<128x128xbf16>, vector<128x128xf32> -> vector<128x128xf32>
    %c0_9 = arith.constant 0 : index
    %c0_10 = arith.constant 0 : index
    %95 = vector.load %arg6[%c0_9, %c0_10] : memref<1x128xf32, #tpu.memory_space<vmem>>, vector<1x128xf32>
    %96 = vector.broadcast %95 : vector<1x128xf32> to vector<128x128xf32>
    %97 = arith.addf %94, %96 : vector<128x128xf32>
    %c0_11 = arith.constant 0 : index
    %98 = arith.index_cast %4 : i32 to index
    %c0_12 = arith.constant 0 : index
    %99 = vector.load %arg2[%c0_11, %98, %c0_12] : memref<1x128x128xf32, #tpu.memory_space<vmem>>, vector<1x128x128xf32>
    %100 = vector.shape_cast %99 : vector<1x128x128xf32> to vector<128x128xf32>
    %101 = arith.addf %100, %97 : vector<128x128xf32>
    %cst_13 = arith.constant dense<0.000000e+00> : vector<128xf32>
    %102 = vector.multi_reduction <add>, %101, %cst_13 [1] : vector<128x128xf32> to vector<128xf32>
    %103 = vector.shape_cast %102 : vector<128xf32> to vector<128x1xf32>
    %cst_14 = arith.constant 1.280000e+02 : f32
    %104 = vector.broadcast %cst_14 : f32 to vector<128x1xf32>
    %105 = arith.divf %103, %104 : vector<128x1xf32>
    %106 = vector.broadcast %105 : vector<128x1xf32> to vector<128x128xf32>
    %107 = arith.subf %101, %106 : vector<128x128xf32>
    %108 = arith.mulf %107, %107 : vector<128x128xf32>
    %cst_15 = arith.constant dense<0.000000e+00> : vector<128xf32>
    %109 = vector.multi_reduction <add>, %108, %cst_15 [1] : vector<128x128xf32> to vector<128xf32>
    %110 = vector.shape_cast %109 : vector<128xf32> to vector<128x1xf32>
    %cst_16 = arith.constant 1.280000e+02 : f32
    %111 = vector.broadcast %cst_16 : f32 to vector<128x1xf32>
    %112 = arith.divf %110, %111 : vector<128x1xf32>
    %cst_17 = arith.constant 9.99999974E-6 : f32
    %113 = vector.broadcast %cst_17 : f32 to vector<128x1xf32>
    %114 = arith.addf %112, %113 : vector<128x1xf32>
    %115 = math.rsqrt %114 : vector<128x1xf32>
    %116 = vector.broadcast %115 : vector<128x1xf32> to vector<128x128xf32>
    %117 = arith.mulf %107, %116 : vector<128x128xf32>
    %c0_18 = arith.constant 0 : index
    %c0_19 = arith.constant 0 : index
    %118 = vector.load %arg7[%c0_18, %c0_19] : memref<1x128xf32, #tpu.memory_space<vmem>>, vector<1x128xf32>
    %119 = vector.broadcast %118 : vector<1x128xf32> to vector<128x128xf32>
    %120 = arith.mulf %117, %119 : vector<128x128xf32>
    %c0_20 = arith.constant 0 : index
    %c0_21 = arith.constant 0 : index
    %121 = vector.load %arg8[%c0_20, %c0_21] : memref<1x128xf32, #tpu.memory_space<vmem>>, vector<1x128xf32>
    %122 = vector.broadcast %121 : vector<1x128xf32> to vector<128x128xf32>
    %123 = arith.addf %120, %122 : vector<128x128xf32>
    %124 = arith.truncf %123 : vector<128x128xf32> to vector<128x128xbf16>
    %c0_22 = arith.constant 0 : index
    %c0_23 = arith.constant 0 : index
    %125 = vector.load %arg9[%c0_22, %c0_23] : memref<128x128xbf16, #tpu.memory_space<vmem>>, vector<128x128xbf16>
    %cst_24 = arith.constant dense<0.000000e+00> : vector<128x128xf32>
    %126 = tpu.matmul %124, %125, %cst_24 {dimension_numbers = #tpu.dot_dimension_numbers<[1], [0], [0], [1], [0, 0, 1, 1], [], []>} : vector<128x128xbf16>, vector<128x128xbf16>, vector<128x128xf32> -> vector<128x128xf32>
    %c0_25 = arith.constant 0 : index
    %c0_26 = arith.constant 0 : index
    %127 = vector.load %arg10[%c0_25, %c0_26] : memref<1x128xf32, #tpu.memory_space<vmem>>, vector<1x128xf32>
    %128 = vector.broadcast %127 : vector<1x128xf32> to vector<128x128xf32>
    %129 = arith.addf %126, %128 : vector<128x128xf32>
    %cst_27 = arith.constant 0.000000e+00 : f32
    %130 = vector.broadcast %cst_27 : f32 to vector<128x128xf32>
    %131 = arith.maximumf %129, %130 : vector<128x128xf32>
    %132 = arith.truncf %131 : vector<128x128xf32> to vector<128x128xbf16>
    %c0_28 = arith.constant 0 : index
    %c0_29 = arith.constant 0 : index
    %133 = vector.load %arg11[%c0_28, %c0_29] : memref<128x128xbf16, #tpu.memory_space<vmem>>, vector<128x128xbf16>
    %cst_30 = arith.constant dense<0.000000e+00> : vector<128x128xf32>
    %134 = tpu.matmul %132, %133, %cst_30 {dimension_numbers = #tpu.dot_dimension_numbers<[1], [0], [0], [1], [0, 0, 1, 1], [], []>} : vector<128x128xbf16>, vector<128x128xbf16>, vector<128x128xf32> -> vector<128x128xf32>
    %c0_31 = arith.constant 0 : index
    %c0_32 = arith.constant 0 : index
    %135 = vector.load %arg12[%c0_31, %c0_32] : memref<1x128xf32, #tpu.memory_space<vmem>>, vector<1x128xf32>
    %136 = vector.broadcast %135 : vector<1x128xf32> to vector<128x128xf32>
    %137 = arith.addf %134, %136 : vector<128x128xf32>
    %cst_33 = arith.constant 0.000000e+00 : f32
    %138 = vector.broadcast %cst_33 : f32 to vector<128x128xf32>
    %139 = arith.maximumf %137, %138 : vector<128x128xf32>
    %140 = arith.addf %139, %123 : vector<128x128xf32>
    %c0_34 = arith.constant 0 : index
    %c0_35 = arith.constant 0 : index
    %c0_36 = arith.constant 0 : index
    %141 = vector.load %arg13[%c0_34, %c0_35, %c0_36] : memref<1x128x128xf32, #tpu.memory_space<vmem>>, vector<1x128x128xf32>
    %142 = vector.shape_cast %141 : vector<1x128x128xf32> to vector<128x128xf32>
    %143 = vector.shape_cast %140 : vector<128x128xf32> to vector<1x128x128xf32>
    tpu.vector_store %arg13[%c0_34, %c0_35, %c0_36], %143 {strides = array<i32>} : memref<1x128x128xf32, #tpu.memory_space<vmem>>, vector<1x128x128xf32>,
    return
  }
  func.func @transform_0(%arg0: i32, %arg1: i32) -> (i32, i32, i32) {
    %c0_i32 = arith.constant 0 : i32
    %c0_i32_0 = arith.constant 0 : i32
    %c0_i32_1 = arith.constant 0 : i32
    return %arg0, %c0_i32, %c0_i32_0 : i32, i32, i32
  }
  func.func @transform_1(%arg0: i32, %arg1: i32) -> (i32, i32) {
    %c0_i32 = arith.constant 0 : i32
    %c0_i32_0 = arith.constant 0 : i32
    %c0_i32_1 = arith.constant 0 : i32
    return %c0_i32, %c0_i32_0 : i32, i32
  }
  func.func @transform_2(%arg0: i32, %arg1: i32) -> (i32, i32) {
    %c0_i32 = arith.constant 0 : i32
    %c0_i32_0 = arith.constant 0 : i32
    %c0_i32_1 = arith.constant 0 : i32
    return %c0_i32, %c0_i32_0 : i32, i32
  }
  func.func @transform_3(%arg0: i32, %arg1: i32) -> (i32, i32) {
    %c0_i32 = arith.constant 0 : i32
    %c0_i32_0 = arith.constant 0 : i32
    %c0_i32_1 = arith.constant 0 : i32
    return %c0_i32, %c0_i32_0 : i32, i32
  }
  func.func @transform_4(%arg0: i32, %arg1: i32) -> (i32, i32) {
    %c0_i32 = arith.constant 0 : i32
    %c0_i32_0 = arith.constant 0 : i32
    %c0_i32_1 = arith.constant 0 : i32
    return %c0_i32, %c0_i32_0 : i32, i32
  }
  func.func @transform_5(%arg0: i32, %arg1: i32) -> (i32, i32) {
    %c0_i32 = arith.constant 0 : i32
    %c0_i32_0 = arith.constant 0 : i32
    %c0_i32_1 = arith.constant 0 : i32
    return %c0_i32, %c0_i32_0 : i32, i32
  }
  func.func @transform_6(%arg0: i32, %arg1: i32) -> (i32, i32) {
    %c0_i32 = arith.constant 0 : i32
    %c0_i32_0 = arith.constant 0 : i32
    %c0_i32_1 = arith.constant 0 : i32
    return %c0_i32, %c0_i32_0 : i32, i32
  }
  func.func @transform_7(%arg0: i32, %arg1: i32) -> (i32, i32) {
    %c0_i32 = arith.constant 0 : i32
    %c0_i32_0 = arith.constant 0 : i32
    %c0_i32_1 = arith.constant 0 : i32
    return %c0_i32, %c0_i32_0 : i32, i32
  }
  func.func @transform_8(%arg0: i32, %arg1: i32) -> (i32, i32) {
    %c0_i32 = arith.constant 0 : i32
    %c0_i32_0 = arith.constant 0 : i32
    %c0_i32_1 = arith.constant 0 : i32
    return %c0_i32, %c0_i32_0 : i32, i32
  }
  func.func @transform_9(%arg0: i32, %arg1: i32) -> (i32, i32) {
    %c0_i32 = arith.constant 0 : i32
    %c0_i32_0 = arith.constant 0 : i32
    %c0_i32_1 = arith.constant 0 : i32
    return %c0_i32, %c0_i32_0 : i32, i32
  }
  func.func @transform_10(%arg0: i32, %arg1: i32) -> (i32, i32) {
    %c0_i32 = arith.constant 0 : i32
    %c0_i32_0 = arith.constant 0 : i32
    %c0_i32_1 = arith.constant 0 : i32
    return %c0_i32, %c0_i32_0 : i32, i32
  }
  func.func @transform_11(%arg0: i32, %arg1: i32) -> (i32, i32, i32) {
    %c0_i32 = arith.constant 0 : i32
    %c0_i32_0 = arith.constant 0 : i32
    return %arg0, %arg1, %c0_i32 : i32, i32, i32
  }
}

</mosaic_0001>

<llo_original>
// kernel: tpu_custom_call.1
$region0: #{tpu_custom_call.1}
  #allocation0 [shape = 'u32[]', space=smem, size = 0x4, offset = 0x4, fixed_abs, tag = 'smem constant byte address 0x4 - core index']
  #allocation1 [shape = 'u32[144,128]{1,0:T(1,128)}', space=vmem, size = 0x12000, scoped, tag = 'internal scratch']
  #allocation2 [shape = 'bf16[128,384]{1,0:T(16,128)(2,1)}', space=vmem, size = 0x18000, scoped, tag = 'scratch operand']
  %s0 = inlined_call_operand.hbm [shape: f32[2,128,128], index: 0, kind: input, shape index: {}]
  %s1 = inlined_call_operand.hbm [shape: bf16[128,384], index: 1, kind: input, shape index: {}]
  %s2 = inlined_call_operand.vmem [shape: f32[1,384], index: 2, kind: input, shape index: {}]
  %s3 = inlined_call_operand.hbm [shape: bf16[128,128], index: 3, kind: input, shape index: {}]
  %s4 = inlined_call_operand.vmem [shape: f32[1,128], index: 4, kind: input, shape index: {}]
  %s5 = inlined_call_operand.vmem [shape: f32[1,128], index: 5, kind: input, shape index: {}]
  %s6 = inlined_call_operand.vmem [shape: f32[1,128], index: 6, kind: input, shape index: {}]
  %s7 = inlined_call_operand.hbm [shape: bf16[128,128], index: 7, kind: input, shape index: {}]
  %s8 = inlined_call_operand.vmem [shape: f32[1,128], index: 8, kind: input, shape index: {}]
  %s9 = inlined_call_operand.hbm [shape: bf16[128,128], index: 9, kind: input, shape index: {}]
  %s10 = inlined_call_operand.vmem [shape: f32[1,128], index: 10, kind: input, shape index: {}]
  %s11 = inlined_call_operand.hbm [shape: f32[2,128,128], index: 11, kind: output, shape index: {}]
  %s12 = sld [smem:[#allocation0]]
  $region101: #{tpu_custom_call.1} parent=0
    _
  %s14 = ssub.s32 1, %s12
  %s15 = scalar_select 0, %s14, %s12
  $region1: #{tpu_custom_call.1} parent=0
    #allocation3 [shape = 'u8[131072]{0}', space=vmem, size = 0x20000, scoped, tag = 'input window, operand 0']
    #allocation4 [shape = 's32[2]{0}', space=sflag, size = 0x8, scoped, tag = 'scoped memory for tpu_custom_call.1']
    #allocation5 [shape = 's32[2]{0}', space=sflag, size = 0x8, scoped, tag = 'scoped memory for tpu_custom_call.1']
    #allocation6 [shape = 'u8[98304]{0}', space=vmem, size = 0x18000, scoped, tag = 'input window, operand 1, single buffered']
    #allocation7 [shape = 's32[1]{0}', space=sflag, size = 0x4, scoped, tag = 'scoped memory for tpu_custom_call.1']
    #allocation8 [shape = 'u8[32768]{0}', space=vmem, size = 0x8000, scoped, tag = 'input window, operand 3, single buffered']
    #allocation9 [shape = 'u8[32768]{0}', space=vmem, size = 0x8000, scoped, tag = 'input window, operand 7, single buffered']
    #allocation10 [shape = 's32[1]{0}', space=sflag, size = 0x4, scoped, tag = 'scoped memory for tpu_custom_call.1']
    #allocation11 [shape = 'u8[32768]{0}', space=vmem, size = 0x8000, scoped, tag = 'input window, operand 9, single buffered']
    #allocation12 [shape = 'u8[131072]{0}', space=vmem, size = 0x20000, scoped, tag = 'output window, operand 0']
    %16 = vsyncpa [#allocation4], 0
    %s17 = scalar_lea.sflag [#allocation4], 1
    %18 = vsyncpa %s17, 0
    %19 = vsyncpa [#allocation7], 0
    %20 = vsyncpa [#allocation10], 0
    %21 = vsyncpa [#allocation5], 0
    %s22 = scalar_lea.sflag [#allocation5], 1
    %23 = vsyncpa %s22, 0
    loop: start=0, step=1, limit=4
    $region2: #{tpu_custom_call.1} parent=1 // loop_pre_header
      _
    $region3: #{tpu_custom_call.1} parent=1 // loop_header
      %s25 = sphi 0, %s29
      %p26 = scmp.ge.s32.totalorder %s25, 4
      %s32 = sphi 0, %s44
      %s33 = sphi 0, %s40
      %s34 = sphi 0, %s32
      %s35 = sphi 0, %s33
      %s36 = sphi 0, %s34
      %s37 = sphi 0, %s35
      %s47 = sphi 0, %s49
      %s50 = sphi 0, %s47
      %s51 = sphi 0, %s50
      %s67 = sphi 0, %s51
      %s71 = sphi 0, %s71
      %s73 = sphi 0, %s71
      %s74 = sphi 0, %s73
      %s88 = sphi 0, %s74
      %s92 = sphi 0, %s92
      %s94 = sphi 0, %s92
      %s95 = sphi 0, %s94
      %s109 = sphi 0, %s95
      %s113 = sphi 0, %s113
      %s115 = sphi 0, %s113
      %s116 = sphi 0, %s115
      %s130 = sphi 0, %s116
      %s134 = sphi 0, %s134
      %s136 = sphi 0, %s134
      %s137 = sphi 0, %s136
      %s151 = sphi 0, %s137
      %s155 = sphi 0, %s155
      %s157 = sphi 0, %s155
      %s158 = sphi 0, %s157
      %s172 = sphi 0, %s158
      %s176 = sphi 0, %s176
      %s178 = sphi 0, %s176
      %s179 = sphi 0, %s178
      %s193 = sphi 0, %s179
      %s197 = sphi 0, %s197
      %s199 = sphi 0, %s197
      %s200 = sphi 0, %s199
      %s214 = sphi 0, %s200
      %s218 = sphi 0, %s218
      %s220 = sphi 0, %s218
      %s221 = sphi 0, %s220
      %s235 = sphi 0, %s221
      %s239 = sphi 0, %s239
      %s241 = sphi 0, %s239
      %s242 = sphi 0, %s241
      %s256 = sphi 0, %s242
      %s260 = sphi 0, %s260
      %s262 = sphi 0, %s260
      %s263 = sphi 0, %s262
      %s277 = sphi 0, %s263
      %s285 = sphi 0, %s287
      %s288 = sphi 0, %s285
      %s289 = sphi 0, %s288
      %s305 = sphi 0, %s289
    $region4: #{tpu_custom_call.1} parent=1 // loop_header_branch
      %28 = sbr.rel (%p26) target = $region8
    $region5: #{tpu_custom_call.1} parent=1 // loop_body
      %s30 = ssub.s32 %s25, 1
      %s31 = ssub.s32 %s25, 2
      %s38 = sadd.s32 1, %s33
      %p39 = scmp.ge.s32.totalorder %s38, 1
      %s40 = scalar_select %p39, 0, %s38
      %s41 = sadd.s32 1, %s32
      %s42 = scalar_select %p39, %s41, %s32
      %p43 = scmp.ge.s32.totalorder %s42, 2
      %s44 = scalar_select %p43, 0, %s42
      %s45 = ssub.s32 %s32, %s44
      %p46 = scmp.eq.s32.totalorder %s45, 0
      %s48 = sadd.s32 %s47, 1
      %s49 = scalar_select %p46, %s47, %s48
      %p52 = pneg %p46
      %p53 = scmp.eq.s32.totalorder %s25, 1
      %p54 = por %p52, %p53
      %p55 = scmp.ne.s32.totalorder %s47, %s50
      %p56 = scmp.eq.s32.totalorder %s25, 0
      %p57 = por %p55, %p56
      %p58 = scmp.ne.s32.totalorder %s47, %s50
      %p59 = scmp.eq.s32.totalorder %s30, 1
      %p60 = por %p58, %p59
      %p61 = scmp.ne.s32.totalorder %s50, %s51
      %p62 = scmp.eq.s32.totalorder %s30, 0
      %p63 = por %p61, %p62
      %p64 = scmp.ne.s32.totalorder %s50, %s51
      %p65 = scmp.eq.s32.totalorder %s31, 1
      %p66 = por %p64, %p65
      %p68 = scmp.ne.s32.totalorder %s51, %s67
      %p69 = scmp.eq.s32.totalorder %s31, 0
      %p70 = por %p68, %p69
      %s72 = sadd.s32 %s71, 1
      %p75 = scmp.eq.s32.totalorder %s25, 1
      %p76 = scmp.ne.s32.totalorder %s71, %s73
      %p77 = scmp.eq.s32.totalorder %s25, 0
      %p78 = por %p76, %p77
      %p79 = scmp.ne.s32.totalorder %s71, %s73
      %p80 = scmp.eq.s32.totalorder %s30, 1
      %p81 = por %p79, %p80
      %p82 = scmp.ne.s32.totalorder %s73, %s74
      %p83 = scmp.eq.s32.totalorder %s30, 0
      %p84 = por %p82, %p83
      %p85 = scmp.ne.s32.totalorder %s73, %s74
      %p86 = scmp.eq.s32.totalorder %s31, 1
      %p87 = por %p85, %p86
      %p89 = scmp.ne.s32.totalorder %s74, %s88
      %p90 = scmp.eq.s32.totalorder %s31, 0
      %p91 = por %p89, %p90
      %s93 = sadd.s32 %s92, 1
      %p96 = scmp.eq.s32.totalorder %s25, 1
      %p97 = scmp.ne.s32.totalorder %s92, %s94
      %p98 = scmp.eq.s32.totalorder %s25, 0
      %p99 = por %p97, %p98
      %p100 = scmp.ne.s32.totalorder %s92, %s94
      %p101 = scmp.eq.s32.totalorder %s30, 1
      %p102 = por %p100, %p101
      %p103 = scmp.ne.s32.totalorder %s94, %s95
      %p104 = scmp.eq.s32.totalorder %s30, 0
      %p105 = por %p103, %p104
      %p106 = scmp.ne.s32.totalorder %s94, %s95
      %p107 = scmp.eq.s32.totalorder %s31, 1
      %p108 = por %p106, %p107
      %p110 = scmp.ne.s32.totalorder %s95, %s109
      %p111 = scmp.eq.s32.totalorder %s31, 0
      %p112 = por %p110, %p111
      %s114 = sadd.s32 %s113, 1
      %p117 = scmp.eq.s32.totalorder %s25, 1
      %p118 = scmp.ne.s32.totalorder %s113, %s115
      %p119 = scmp.eq.s32.totalorder %s25, 0
      %p120 = por %p118, %p119
      %p121 = scmp.ne.s32.totalorder %s113, %s115
      %p122 = scmp.eq.s32.totalorder %s30, 1
      %p123 = por %p121, %p122
      %p124 = scmp.ne.s32.totalorder %s115, %s116
      %p125 = scmp.eq.s32.totalorder %s30, 0
      %p126 = por %p124, %p125
      %p127 = scmp.ne.s32.totalorder %s115, %s116
      %p128 = scmp.eq.s32.totalorder %s31, 1
      %p129 = por %p127, %p128
      %p131 = scmp.ne.s32.totalorder %s116, %s130
      %p132 = scmp.eq.s32.totalorder %s31, 0
      %p133 = por %p131, %p132
      %s135 = sadd.s32 %s134, 1
      %p138 = scmp.eq.s32.totalorder %s25, 1
      %p139 = scmp.ne.s32.totalorder %s134, %s136
      %p140 = scmp.eq.s32.totalorder %s25, 0
      %p141 = por %p139, %p140
      %p142 = scmp.ne.s32.totalorder %s134, %s136
      %p143 = scmp.eq.s32.totalorder %s30, 1
      %p144 = por %p142, %p143
      %p145 = scmp.ne.s32.totalorder %s136, %s137
      %p146 = scmp.eq.s32.totalorder %s30, 0
      %p147 = por %p145, %p146
      %p148 = scmp.ne.s32.totalorder %s136, %s137
      %p149 = scmp.eq.s32.totalorder %s31, 1
      %p150 = por %p148, %p149
      %p152 = scmp.ne.s32.totalorder %s137, %s151
      %p153 = scmp.eq.s32.totalorder %s31, 0
      %p154 = por %p152, %p153
      %s156 = sadd.s32 %s155, 1
      %p159 = scmp.eq.s32.totalorder %s25, 1
      %p160 = scmp.ne.s32.totalorder %s155, %s157
      %p161 = scmp.eq.s32.totalorder %s25, 0
      %p162 = por %p160, %p161
      %p163 = scmp.ne.s32.totalorder %s155, %s157
      %p164 = scmp.eq.s32.totalorder %s30, 1
      %p165 = por %p163, %p164
      %p166 = scmp.ne.s32.totalorder %s157, %s158
      %p167 = scmp.eq.s32.totalorder %s30, 0
      %p168 = por %p166, %p167
      %p169 = scmp.ne.s32.totalorder %s157, %s158
      %p170 = scmp.eq.s32.totalorder %s31, 1
      %p171 = por %p169, %p170
      %p173 = scmp.ne.s32.totalorder %s158, %s172
      %p174 = scmp.eq.s32.totalorder %s31, 0
      %p175 = por %p173, %p174
      %s177 = sadd.s32 %s176, 1
      %p180 = scmp.eq.s32.totalorder %s25, 1
      %p181 = scmp.ne.s32.totalorder %s176, %s178
      %p182 = scmp.eq.s32.totalorder %s25, 0
      %p183 = por %p181, %p182
      %p184 = scmp.ne.s32.totalorder %s176, %s178
      %p185 = scmp.eq.s32.totalorder %s30, 1
      %p186 = por %p184, %p185
      %p187 = scmp.ne.s32.totalorder %s178, %s179
      %p188 = scmp.eq.s32.totalorder %s30, 0
      %p189 = por %p187, %p188
      %p190 = scmp.ne.s32.totalorder %s178, %s179
      %p191 = scmp.eq.s32.totalorder %s31, 1
      %p192 = por %p190, %p191
      %p194 = scmp.ne.s32.totalorder %s179, %s193
      %p195 = scmp.eq.s32.totalorder %s31, 0
      %p196 = por %p194, %p195
      %s198 = sadd.s32 %s197, 1
      %p201 = scmp.eq.s32.totalorder %s25, 1
      %p202 = scmp.ne.s32.totalorder %s197, %s199
      %p203 = scmp.eq.s32.totalorder %s25, 0
      %p204 = por %p202, %p203
      %p205 = scmp.ne.s32.totalorder %s197, %s199
      %p206 = scmp.eq.s32.totalorder %s30, 1
      %p207 = por %p205, %p206
      %p208 = scmp.ne.s32.totalorder %s199, %s200
      %p209 = scmp.eq.s32.totalorder %s30, 0
      %p210 = por %p208, %p209
      %p211 = scmp.ne.s32.totalorder %s199, %s200
      %p212 = scmp.eq.s32.totalorder %s31, 1
      %p213 = por %p211, %p212
      %p215 = scmp.ne.s32.totalorder %s200, %s214
      %p216 = scmp.eq.s32.totalorder %s31, 0
      %p217 = por %p215, %p216
      %s219 = sadd.s32 %s218, 1
      %p222 = scmp.eq.s32.totalorder %s25, 1
      %p223 = scmp.ne.s32.totalorder %s218, %s220
      %p224 = scmp.eq.s32.totalorder %s25, 0
      %p225 = por %p223, %p224
      %p226 = scmp.ne.s32.totalorder %s218, %s220
      %p227 = scmp.eq.s32.totalorder %s30, 1
      %p228 = por %p226, %p227
      %p229 = scmp.ne.s32.totalorder %s220, %s221
      %p230 = scmp.eq.s32.totalorder %s30, 0
      %p231 = por %p229, %p230
      %p232 = scmp.ne.s32.totalorder %s220, %s221
      %p233 = scmp.eq.s32.totalorder %s31, 1
      %p234 = por %p232, %p233
      %p236 = scmp.ne.s32.totalorder %s221, %s235
      %p237 = scmp.eq.s32.totalorder %s31, 0
      %p238 = por %p236, %p237
      %s240 = sadd.s32 %s239, 1
      %p243 = scmp.eq.s32.totalorder %s25, 1
      %p244 = scmp.ne.s32.totalorder %s239, %s241
      %p245 = scmp.eq.s32.totalorder %s25, 0
      %p246 = por %p244, %p245
      %p247 = scmp.ne.s32.totalorder %s239, %s241
      %p248 = scmp.eq.s32.totalorder %s30, 1
      %p249 = por %p247, %p248
      %p250 = scmp.ne.s32.totalorder %s241, %s242
      %p251 = scmp.eq.s32.totalorder %s30, 0
      %p252 = por %p250, %p251
      %p253 = scmp.ne.s32.totalorder %s241, %s242
      %p254 = scmp.eq.s32.totalorder %s31, 1
      %p255 = por %p253, %p254
      %p257 = scmp.ne.s32.totalorder %s242, %s256
      %p258 = scmp.eq.s32.totalorder %s31, 0
      %p259 = por %p257, %p258
      %s261 = sadd.s32 %s260, 1
      %p264 = scmp.eq.s32.totalorder %s25, 1
      %p265 = scmp.ne.s32.totalorder %s260, %s262
      %p266 = scmp.eq.s32.totalorder %s25, 0
      %p267 = por %p265, %p266
      %p268 = scmp.ne.s32.totalorder %s260, %s262
      %p269 = scmp.eq.s32.totalorder %s30, 1
      %p270 = por %p268, %p269
      %p271 = scmp.ne.s32.totalorder %s262, %s263
      %p272 = scmp.eq.s32.totalorder %s30, 0
      %p273 = por %p271, %p272
      %p274 = scmp.ne.s32.totalorder %s262, %s263
      %p275 = scmp.eq.s32.totalorder %s31, 1
      %p276 = por %p274, %p275
      %p278 = scmp.ne.s32.totalorder %s263, %s277
      %p279 = scmp.eq.s32.totalorder %s31, 0
      %p280 = por %p278, %p279
      %s281 = ssub.s32 %s32, %s44
      %s282 = ssub.s32 %s33, %s40
      %s283 = sor.u32 %s281, %s282
      %p284 = scmp.eq.s32.totalorder %s283, 0
      %s286 = sadd.s32 %s285, 1
      %s287 = scalar_select %p284, %s285, %s286
      %p290 = pneg %p284
      %p291 = scmp.eq.s32.totalorder %s25, 1
      %p292 = por %p290, %p291
      %p293 = scmp.ne.s32.totalorder %s285, %s288
      %p294 = scmp.eq.s32.totalorder %s25, 0
      %p295 = por %p293, %p294
      %p296 = scmp.ne.s32.totalorder %s285, %s288
      %p297 = scmp.eq.s32.totalorder %s30, 1
      %p298 = por %p296, %p297
      %p299 = scmp.ne.s32.totalorder %s288, %s289
      %p300 = scmp.eq.s32.totalorder %s30, 0
      %p301 = por %p299, %p300
      %p302 = scmp.ne.s32.totalorder %s288, %s289
      %p303 = scmp.eq.s32.totalorder %s31, 1
      %p304 = por %p302, %p303
      %p306 = scmp.ne.s32.totalorder %s289, %s305
      %p307 = scmp.eq.s32.totalorder %s31, 0
      %p308 = por %p306, %p307
      %p309 = scmp.le.s32.totalorder 1, %s25
      %p310 = scmp.lt.s32.totalorder %s25, 3
      %p311 = pnand %p309, %p310
      %p312 = pneg %p311
      // Predicated region
      $region9: #{tpu_custom_call.1} parent=5 // pred_check
        _
      $region10: #{tpu_custom_call.1} parent=5 // pred_check_branch
        %314 = sbr.rel (%p311) target = $region12
      $region11: #{tpu_custom_call.1} parent=5 // pred_region
        %s315 = ssub.s32 %s25, 1
        // Predicated region
        $region13: #{tpu_custom_call.1} parent=11 // pred_check
          %p316 = pneg %p84
        $region14: #{tpu_custom_call.1} parent=11 // pred_check_branch
          %318 = sbr.rel (%p316) target = $region16
        $region15: #{tpu_custom_call.1} parent=11 // pred_region
          %s320 = ssub.s32 3072, 3072
          %321 = vsyncadd [#allocation7], %s320
          %s322 = sshll.u32 [#allocation6], 4
          %s323 = int_to_ptr.vmem [resolvable:$true] %s322
          %328 = dma.hbm_to_vmem [thread:$0]  %s1, 3072, %s323, [#allocation7], 192, 192, 12
        $region16: #{tpu_custom_call.1} parent=11 // pred_fallthru
          _
        // Predicated region
        $region17: #{tpu_custom_call.1} parent=11 // pred_check
          %p329 = pneg %p105
        $region18: #{tpu_custom_call.1} parent=11 // pred_check_branch
          %331 = sbr.rel (%p329) target = $region20
        $region19: #{tpu_custom_call.1} parent=11 // pred_region
          _
        $region20: #{tpu_custom_call.1} parent=11 // pred_fallthru
          _
        // Predicated region
        $region21: #{tpu_custom_call.1} parent=11 // pred_check
          %p332 = pneg %p126
        $region22: #{tpu_custom_call.1} parent=11 // pred_check_branch
          %334 = sbr.rel (%p332) target = $region24
        $region23: #{tpu_custom_call.1} parent=11 // pred_region
          %s336 = ssub.s32 1024, 1024
          %337 = vsyncadd [#allocation7], %s336
          %s338 = sshll.u32 [#allocation8], 4
          %s339 = int_to_ptr.vmem [resolvable:$true] %s338
          %344 = dma.hbm_to_vmem [thread:$0]  %s3, 1024, %s339, [#allocation7], 64, 64, 4
        $region24: #{tpu_custom_call.1} parent=11 // pred_fallthru
          _
        // Predicated region
        $region25: #{tpu_custom_call.1} parent=11 // pred_check
          %p345 = pneg %p147
        $region26: #{tpu_custom_call.1} parent=11 // pred_check_branch
          %347 = sbr.rel (%p345) target = $region28
        $region27: #{tpu_custom_call.1} parent=11 // pred_region
          _
        $region28: #{tpu_custom_call.1} parent=11 // pred_fallthru
          _
        // Predicated region
        $region29: #{tpu_custom_call.1} parent=11 // pred_check
          %p348 = pneg %p168
        $region30: #{tpu_custom_call.1} parent=11 // pred_check_branch
          %350 = sbr.rel (%p348) target = $region32
        $region31: #{tpu_custom_call.1} parent=11 // pred_region
          _
        $region32: #{tpu_custom_call.1} parent=11 // pred_fallthru
          _
        // Predicated region
        $region33: #{tpu_custom_call.1} parent=11 // pred_check
          %p351 = pneg %p189
        $region34: #{tpu_custom_call.1} parent=11 // pred_check_branch
          %353 = sbr.rel (%p351) target = $region36
        $region35: #{tpu_custom_call.1} parent=11 // pred_region
          _
        $region36: #{tpu_custom_call.1} parent=11 // pred_fallthru
          _
        // Predicated region
        $region37: #{tpu_custom_call.1} parent=11 // pred_check
          %p354 = pneg %p210
        $region38: #{tpu_custom_call.1} parent=11 // pred_check_branch
          %356 = sbr.rel (%p354) target = $region40
        $region39: #{tpu_custom_call.1} parent=11 // pred_region
          %s358 = ssub.s32 1024, 1024
          %359 = vsyncadd [#allocation10], %s358
          %s360 = sshll.u32 [#allocation9], 4
          %s361 = int_to_ptr.vmem [resolvable:$true] %s360
          %366 = dma.hbm_to_vmem [thread:$0]  %s7, 1024, %s361, [#allocation10], 64, 64, 4
        $region40: #{tpu_custom_call.1} parent=11 // pred_fallthru
          _
        // Predicated region
        $region41: #{tpu_custom_call.1} parent=11 // pred_check
          %p367 = pneg %p231
        $region42: #{tpu_custom_call.1} parent=11 // pred_check_branch
          %369 = sbr.rel (%p367) target = $region44
        $region43: #{tpu_custom_call.1} parent=11 // pred_region
          _
        $region44: #{tpu_custom_call.1} parent=11 // pred_fallthru
          _
        // Predicated region
        $region45: #{tpu_custom_call.1} parent=11 // pred_check
          %p370 = pneg %p252
        $region46: #{tpu_custom_call.1} parent=11 // pred_check_branch
          %372 = sbr.rel (%p370) target = $region48
        $region47: #{tpu_custom_call.1} parent=11 // pred_region
          %s374 = ssub.s32 1024, 1024
          %375 = vsyncadd [#allocation10], %s374
          %s376 = sshll.u32 [#allocation11], 4
          %s377 = int_to_ptr.vmem [resolvable:$true] %s376
          %382 = dma.hbm_to_vmem [thread:$0]  %s9, 1024, %s377, [#allocation10], 64, 64, 4
        $region48: #{tpu_custom_call.1} parent=11 // pred_fallthru
          _
        // Predicated region
        $region49: #{tpu_custom_call.1} parent=11 // pred_check
          %p383 = pneg %p273
        $region50: #{tpu_custom_call.1} parent=11 // pred_check_branch
          %385 = sbr.rel (%p383) target = $region52
        $region51: #{tpu_custom_call.1} parent=11 // pred_region
          _
        $region52: #{tpu_custom_call.1} parent=11 // pred_fallthru
          _
      $region12: #{tpu_custom_call.1} parent=5 // pred_fallthru
        _
      %p386 = scmp.lt.s32.totalorder %s25, 2
      // Predicated region
      $region53: #{tpu_custom_call.1} parent=5 // pred_check
        %p387 = pneg %p386
      $region54: #{tpu_custom_call.1} parent=5 // pred_check_branch
        %389 = sbr.rel (%p387) target = $region56
      $region55: #{tpu_custom_call.1} parent=5 // pred_region
        // Predicated region
        $region57: #{tpu_custom_call.1} parent=55 // pred_check
          %p390 = pneg %p57
        $region58: #{tpu_custom_call.1} parent=55 // pred_check_branch
          %392 = sbr.rel (%p390) target = $region60
        $region59: #{tpu_custom_call.1} parent=55 // pred_region
          %s393 = sand.u32 %s47, 1
          %s394 = scalar_lea.sflag [#allocation4], %s393
          %s395 = sand.u32 %s47, 1
          %s396 = smul.addr %s395, 128
          %s397 = scalar_lea.vmem [#allocation3], %s396
          %s399 = ssub.s32 2048, 2048
          %400 = vsyncadd %s394, %s399
          %s401 = smul.addr %s32, 16
          %s402 = smul.addr %s401, 128
          %s403 = scalar_lea.hbm %s0, %s402
          %s404 = sshll.u32 %s397, 4
          %s405 = int_to_ptr.vmem [resolvable:$true] %s404
          %410 = dma.hbm_to_vmem [thread:$0]  %s403, 2048, %s405, %s394, 128, 128, 8
        $region60: #{tpu_custom_call.1} parent=55 // pred_fallthru
          _
      $region56: #{tpu_custom_call.1} parent=5 // pred_fallthru
        _
      %p411 = scmp.le.s32.totalorder 1, %s25
      %p412 = scmp.lt.s32.totalorder %s25, 3
      %p413 = pnand %p411, %p412
      %p414 = pneg %p413
      // Predicated region
      $region61: #{tpu_custom_call.1} parent=5 // pred_check
        _
      $region62: #{tpu_custom_call.1} parent=5 // pred_check_branch
        %416 = sbr.rel (%p413) target = $region64
      $region63: #{tpu_custom_call.1} parent=5 // pred_region
        %s417 = ssub.s32 %s25, 1
        %s418 = sand.u32 %s50, 1
        %s419 = scalar_lea.sflag [#allocation4], %s418
        %s420 = sand.u32 %s50, 1
        %s421 = smul.addr %s420, 128
        %s422 = scalar_lea.vmem [#allocation3], %s421
        // Predicated region
        $region65: #{tpu_custom_call.1} parent=63 // pred_check
          %p423 = pneg %p63
        $region66: #{tpu_custom_call.1} parent=63 // pred_check_branch
          %425 = sbr.rel (%p423) target = $region68
        $region67: #{tpu_custom_call.1} parent=63 // pred_region
          %426 = dma.done %s419, 2048
        $region68: #{tpu_custom_call.1} parent=63 // pred_fallthru
          _
        // Predicated region
        $region69: #{tpu_custom_call.1} parent=63 // pred_check
          %p427 = pneg %p84
        $region70: #{tpu_custom_call.1} parent=63 // pred_check_branch
          %429 = sbr.rel (%p427) target = $region72
        $region71: #{tpu_custom_call.1} parent=63 // pred_region
          %430 = dma.done [#allocation7], 3072
        $region72: #{tpu_custom_call.1} parent=63 // pred_fallthru
          _
        // Predicated region
        $region73: #{tpu_custom_call.1} parent=63 // pred_check
          %p431 = pneg %p126
        $region74: #{tpu_custom_call.1} parent=63 // pred_check_branch
          %433 = sbr.rel (%p431) target = $region76
        $region75: #{tpu_custom_call.1} parent=63 // pred_region
          %434 = dma.done [#allocation7], 1024
        $region76: #{tpu_custom_call.1} parent=63 // pred_fallthru
          _
        // Predicated region
        $region77: #{tpu_custom_call.1} parent=63 // pred_check
          %p435 = pneg %p210
        $region78: #{tpu_custom_call.1} parent=63 // pred_check_branch
          %437 = sbr.rel (%p435) target = $region80
        $region79: #{tpu_custom_call.1} parent=63 // pred_region
          %438 = dma.done [#allocation10], 1024
        $region80: #{tpu_custom_call.1} parent=63 // pred_fallthru
          _
        // Predicated region
        $region81: #{tpu_custom_call.1} parent=63 // pred_check
          %p439 = pneg %p252
        $region82: #{tpu_custom_call.1} parent=63 // pred_check_branch
          %441 = sbr.rel (%p439) target = $region84
        $region83: #{tpu_custom_call.1} parent=63 // pred_region
          %442 = dma.done [#allocation10], 1024
        $region84: #{tpu_custom_call.1} parent=63 // pred_fallthru
          _
        %s443 = sand.u32 %s50, 1
        %s444 = scalar_lea.sflag [#allocation4], %s443
        %s445 = sand.u32 %s50, 1
        %s446 = smul.addr %s445, 128
        %s447 = scalar_lea.vmem [#allocation3], %s446
        %p448 = pneg %p63
        %p449 = pneg %p60
        %p450 = pneg %p84
        %p451 = pneg %p81
        %p452 = pneg %p105
        %p453 = pneg %p102
        %p454 = pneg %p126
        %p455 = pneg %p123
        %p456 = pneg %p147
        %p457 = pneg %p144
        %p458 = pneg %p168
        %p459 = pneg %p165
        %p460 = pneg %p189
        %p461 = pneg %p186
        %p462 = pneg %p210
        %p463 = pneg %p207
        %p464 = pneg %p231
        %p465 = pneg %p228
        %p466 = pneg %p252
        %p467 = pneg %p249
        %p468 = pneg %p273
        %p469 = pneg %p270
        %p470 = pneg %p301
        %p471 = pneg %p298
        %s472 = sand.u32 %s288, 1
        %s473 = scalar_lea.sflag [#allocation5], %s472
        %s474 = sand.u32 %s288, 1
        %s475 = smul.addr %s474, 128
        %s476 = scalar_lea.vmem [#allocation12], %s475
        %s477 = smul.u32 16, %s35
        %p479 = scmp.eq.s32.totalorder %s35, 0
        // Predicated region
        $region85: #{tpu_custom_call.1} parent=63 // pred_check
          %p480 = pneg %p479
        $region86: #{tpu_custom_call.1} parent=63 // pred_check_branch
          %482 = sbr.rel (%p480) target = $region88
        $region87: #{tpu_custom_call.1} parent=63 // pred_region
          %v483 = vld [vmem:[%s422] sm:$0xff]
          %v484 = vld [vmem:[%s422 + $0x8] sm:$0xff]
          %v485 = vld [vmem:[%s422 + $0x10] sm:$0xff]
          %v486 = vld [vmem:[%s422 + $0x18] sm:$0xff]
          %v487 = vld [vmem:[%s422 + $0x20] sm:$0xff]
          %v488 = vld [vmem:[%s422 + $0x28] sm:$0xff]
          %v489 = vld [vmem:[%s422 + $0x30] sm:$0xff]
          %v490 = vld [vmem:[%s422 + $0x38] sm:$0xff]
          %v491 = vld [vmem:[%s422 + $0x40] sm:$0xff]
          %v492 = vld [vmem:[%s422 + $0x48] sm:$0xff]
          %v493 = vld [vmem:[%s422 + $0x50] sm:$0xff]
          %v494 = vld [vmem:[%s422 + $0x58] sm:$0xff]
          %v495 = vld [vmem:[%s422 + $0x60] sm:$0xff]
          %v496 = vld [vmem:[%s422 + $0x68] sm:$0xff]
          %v497 = vld [vmem:[%s422 + $0x70] sm:$0xff]
          %v498 = vld [vmem:[%s422 + $0x78] sm:$0xff]
          %v499 = vpack.c.bf16 %v484, %v483
          %v500 = vpack.c.bf16 %v486, %v485
          %v501 = vpack.c.bf16 %v488, %v487
          %v502 = vpack.c.bf16 %v490, %v489
          %v503 = vpack.c.bf16 %v492, %v491
          %v504 = vpack.c.bf16 %v494, %v493
          %v505 = vpack.c.bf16 %v496, %v495
          %v506 = vpack.c.bf16 %v498, %v497
          %v507 = vld [vmem:[#allocation6] sm:$0xff]
          %v508 = vld [vmem:[#allocation6 + $0x8] sm:$0xf]
          %v509 = vld [vmem:[#allocation6 + $0xc] sm:$0xff]
          %v510 = vld [vmem:[#allocation6 + $0x14] sm:$0xf]
          %v511 = vld [vmem:[#allocation6 + $0x18] sm:$0xff]
          %v512 = vld [vmem:[#allocation6 + $0x20] sm:$0xf]
          %v513 = vld [vmem:[#allocation6 + $0x24] sm:$0xff]
          %v514 = vld [vmem:[#allocation6 + $0x2c] sm:$0xf]
          %v515 = vld [vmem:[#allocation6 + $0x30] sm:$0xff]
          %v516 = vld [vmem:[#allocation6 + $0x38] sm:$0xf]
          %v517 = vld [vmem:[#allocation6 + $0x3c] sm:$0xff]
          %v518 = vld [vmem:[#allocation6 + $0x44] sm:$0xf]
          %v519 = vld [vmem:[#allocation6 + $0x48] sm:$0xff]
          %v520 = vld [vmem:[#allocation6 + $0x50] sm:$0xf]
          %v521 = vld [vmem:[#allocation6 + $0x54] sm:$0xff]
          %v522 = vld [vmem:[#allocation6 + $0x5c] sm:$0xf]
          %v523 = vld [vmem:[#allocation6 + $0x60] sm:$0xff]
          %v524 = vld [vmem:[#allocation6 + $0x68] sm:$0xf]
          %v525 = vld [vmem:[#allocation6 + $0x6c] sm:$0xff]
          %v526 = vld [vmem:[#allocation6 + $0x74] sm:$0xf]
          %v527 = vld [vmem:[#allocation6 + $0x78] sm:$0xff]
          %v528 = vld [vmem:[#allocation6 + $0x80] sm:$0xf]
          %v529 = vld [vmem:[#allocation6 + $0x84] sm:$0xff]
          %v530 = vld [vmem:[#allocation6 + $0x8c] sm:$0xf]
          %v531 = vld [vmem:[#allocation6 + $0x90] sm:$0xff]
          %v532 = vld [vmem:[#allocation6 + $0x98] sm:$0xf]
          %v533 = vld [vmem:[#allocation6 + $0x9c] sm:$0xff]
          %v534 = vld [vmem:[#allocation6 + $0xa4] sm:$0xf]
          %v535 = vld [vmem:[#allocation6 + $0xa8] sm:$0xff]
          %v536 = vld [vmem:[#allocation6 + $0xb0] sm:$0xf]
          %v537 = vld [vmem:[#allocation6 + $0xb4] sm:$0xff]
          %v538 = vld [vmem:[#allocation6 + $0xbc] sm:$0xf]
          %v539 = vld [vmem:[%s2] sm:$0x7]
          %v541 = vlaneseq
          %v542 = vshrl.u32 %v541, 7
          %v543 = vsub.s32 0, %v542
          %v544 = vrot.slane %v539, %v543
          %v545 = vlaneseq
          %v546 = vshrl.u32 %v545, 7
          %v547 = vsub.s32 1, %v546
          %v548 = vrot.slane %v539, %v547
          %v549 = vlaneseq
          %v550 = vshrl.u32 %v549, 7
          %v551 = vsub.s32 2, %v550
          %v552 = vrot.slane %v539, %v551
          %v588 = vunpack.c.l.b16 %v507
          %v589 = vunpack.c.h.b16 %v507
          %v590 = vunpack.c.l.b16 %v508
          %v591 = vunpack.c.l.b16 %v509
          %v592 = vunpack.c.h.b16 %v509
          %v593 = vunpack.c.l.b16 %v510
          %v594 = vunpack.c.l.b16 %v511
          %v595 = vunpack.c.h.b16 %v511
          %v596 = vunpack.c.l.b16 %v512
          %v597 = vunpack.c.l.b16 %v513
          %v598 = vunpack.c.h.b16 %v513
          %v599 = vunpack.c.l.b16 %v514
          %v600 = vunpack.c.l.b16 %v515
          %v601 = vunpack.c.h.b16 %v515
          %v602 = vunpack.c.l.b16 %v516
          %v603 = vunpack.c.l.b16 %v517
          %v604 = vunpack.c.h.b16 %v517
          %v605 = vunpack.c.l.b16 %v518
          %v606 = vunpack.c.l.b16 %v519
          %v607 = vunpack.c.h.b16 %v519
          %v608 = vunpack.c.l.b16 %v520
          %v609 = vunpack.c.l.b16 %v521
          %v610 = vunpack.c.h.b16 %v521
          %v611 = vunpack.c.l.b16 %v522
          %v612 = vunpack.c.l.b16 %v523
          %v613 = vunpack.c.h.b16 %v523
          %v614 = vunpack.c.l.b16 %v524
          %v615 = vunpack.c.l.b16 %v525
          %v616 = vunpack.c.h.b16 %v525
          %v617 = vunpack.c.l.b16 %v526
          %v618 = vunpack.c.l.b16 %v527
          %v619 = vunpack.c.h.b16 %v527
          %v620 = vunpack.c.l.b16 %v528
          %v621 = vunpack.c.l.b16 %v529
          %v622 = vunpack.c.h.b16 %v529
          %v623 = vunpack.c.l.b16 %v530
          %v624 = vunpack.c.l.b16 %v531
          %v625 = vunpack.c.h.b16 %v531
          %v626 = vunpack.c.l.b16 %v532
          %v627 = vunpack.c.l.b16 %v533
          %v628 = vunpack.c.h.b16 %v533
          %v629 = vunpack.c.l.b16 %v534
          %v630 = vunpack.c.l.b16 %v535
          %v631 = vunpack.c.h.b16 %v535
          %v632 = vunpack.c.l.b16 %v536
          %v633 = vunpack.c.l.b16 %v537
          %v634 = vunpack.c.h.b16 %v537
          %v635 = vunpack.c.l.b16 %v538
          %v636 = vpack.c.b16 %v591, %v588
          %v637 = vpack.c.b16 %v592, %v589
          %v638 = vpack.c.b16 %v593, %v590
          %v639 = vpack.c.b16 %v597, %v594
          %v640 = vpack.c.b16 %v598, %v595
          %v641 = vpack.c.b16 %v599, %v596
          %v642 = vpack.c.b16 %v603, %v600
          %v643 = vpack.c.b16 %v604, %v601
          %v644 = vpack.c.b16 %v605, %v602
          %v645 = vpack.c.b16 %v609, %v606
          %v646 = vpack.c.b16 %v610, %v607
          %v647 = vpack.c.b16 %v611, %v608
          %v648 = vpack.c.b16 %v615, %v612
          %v649 = vpack.c.b16 %v616, %v613
          %v650 = vpack.c.b16 %v617, %v614
          %v651 = vpack.c.b16 %v621, %v618
          %v652 = vpack.c.b16 %v622, %v619
          %v653 = vpack.c.b16 %v623, %v620
          %v654 = vpack.c.b16 %v627, %v624
          %v655 = vpack.c.b16 %v628, %v625
          %v656 = vpack.c.b16 %v629, %v626
          %v657 = vpack.c.b16 %v633, %v630
          %v658 = vpack.c.b16 %v634, %v631
          %v659 = vpack.c.b16 %v635, %v632
          %684 = vmatprep.subr.bf16.mxu0 %v637
          %685 = vmatpush1.bf16.msra.mxu0 %v636
          %686 = vmatprep.subr.bf16.mxu0 %v640
          %687 = vmatpush1.bf16.msra.mxu0 %v639
          %688 = vmatprep.subr.bf16.mxu0 %v643
          %689 = vmatpush1.bf16.msra.mxu0 %v642
          %690 = vmatprep.subr.bf16.mxu0 %v646
          %691 = vmatpush1.bf16.msra.mxu0 %v645
          %692 = vmatprep.subr.bf16.mxu0 %v649
          %693 = vmatpush1.bf16.msra.mxu0 %v648
          %694 = vmatprep.subr.bf16.mxu0 %v652
          %695 = vmatpush1.bf16.msra.mxu0 %v651
          %696 = vmatprep.subr.bf16.mxu0 %v655
          %697 = vmatpush1.bf16.msra.mxu0 %v654
          %698 = vmatprep.subr.bf16.mxu0 %v658
          %699 = vmatpush1.bf16.msra.mxu0 %v657
          %700 = vmatprep.subr.bf16.mxu0 0
          %701 = vmatpush1.bf16.msra.mxu0 0
          %702 = vmatprep.subr.bf16.mxu0 0
          %703 = vmatpush1.bf16.msra.mxu0 0
          %704 = vmatprep.subr.bf16.mxu0 0
          %705 = vmatpush1.bf16.msra.mxu0 0
          %706 = vmatprep.subr.bf16.mxu0 0
          %707 = vmatpush1.bf16.msra.mxu0 0
          %708 = vmatprep.subr.bf16.mxu0 0
          %709 = vmatpush1.bf16.msra.mxu0 0
          %710 = vmatprep.subr.bf16.mxu0 0
          %711 = vmatpush1.bf16.msra.mxu0 0
          %712 = vmatprep.subr.bf16.mxu0 0
          %713 = vmatpush1.bf16.msra.mxu0 0
          %714 = vmatprep.subr.bf16.mxu0 0
          %715 = vmatpush1.bf16.msra.mxu0 0
          %716 = vmatprep.mubr.bf16.mxu0 0
          %717 = vmatmul.mubr.bf16.gmra.mrb[0].mxu0 %v499
          %v718 = vpop.f32.mrb[0].mxu0
          %v719 = vadd.f32 %v544, %v718
          %v720 = vpop.f32.mrb[0].mxu0
          %v721 = vadd.f32 %v548, %v720
          %v722 = vpop.f32.mrb[0].mxu0
          %v723 = vadd.f32 %v544, %v722
          %v724 = vpop.f32.mrb[0].mxu0
          %v725 = vadd.f32 %v548, %v724
          %726 = vmatprep.mubr.bf16.mxu0 0
          %727 = vmatmul.mubr.bf16.gmra.mrb[0].mxu0 %v500
          %v728 = vpop.f32.mrb[0].mxu0
          %v729 = vadd.f32 %v544, %v728
          %v730 = vpop.f32.mrb[0].mxu0
          %v731 = vadd.f32 %v548, %v730
          %v732 = vpop.f32.mrb[0].mxu0
          %v733 = vadd.f32 %v544, %v732
          %v734 = vpop.f32.mrb[0].mxu0
          %v735 = vadd.f32 %v548, %v734
          %736 = vmatprep.mubr.bf16.mxu0 0
          %737 = vmatmul.mubr.bf16.gmra.mrb[0].mxu0 %v501
          %v738 = vpop.f32.mrb[0].mxu0
          %v739 = vadd.f32 %v544, %v738
          %v740 = vpop.f32.mrb[0].mxu0
          %v741 = vadd.f32 %v548, %v740
          %v742 = vpop.f32.mrb[0].mxu0
          %v743 = vadd.f32 %v544, %v742
          %v744 = vpop.f32.mrb[0].mxu0
          %v745 = vadd.f32 %v548, %v744
          %746 = vmatprep.mubr.bf16.mxu0 0
          %747 = vmatmul.mubr.bf16.gmra.mrb[0].mxu0 %v502
          %v748 = vpop.f32.mrb[0].mxu0
          %v749 = vadd.f32 %v544, %v748
          %v750 = vpop.f32.mrb[0].mxu0
          %v751 = vadd.f32 %v548, %v750
          %v752 = vpop.f32.mrb[0].mxu0
          %v753 = vadd.f32 %v544, %v752
          %v754 = vpop.f32.mrb[0].mxu0
          %v755 = vadd.f32 %v548, %v754
          %756 = vmatprep.mubr.bf16.mxu0 0
          %757 = vmatmul.mubr.bf16.gmra.mrb[0].mxu0 %v503
          %v758 = vpop.f32.mrb[0].mxu0
          %v759 = vadd.f32 %v544, %v758
          %v760 = vpop.f32.mrb[0].mxu0
          %v761 = vadd.f32 %v548, %v760
          %v762 = vpop.f32.mrb[0].mxu0
          %v763 = vadd.f32 %v544, %v762
          %v764 = vpop.f32.mrb[0].mxu0
          %v765 = vadd.f32 %v548, %v764
          %766 = vmatprep.mubr.bf16.mxu0 0
          %767 = vmatmul.mubr.bf16.gmra.mrb[0].mxu0 %v504
          %v768 = vpop.f32.mrb[0].mxu0
          %v769 = vadd.f32 %v544, %v768
          %v770 = vpop.f32.mrb[0].mxu0
          %v771 = vadd.f32 %v548, %v770
          %v772 = vpop.f32.mrb[0].mxu0
          %v773 = vadd.f32 %v544, %v772
          %v774 = vpop.f32.mrb[0].mxu0
          %v775 = vadd.f32 %v548, %v774
          %776 = vmatprep.mubr.bf16.mxu0 0
          %777 = vmatmul.mubr.bf16.gmra.mrb[0].mxu0 %v505
          %v778 = vpop.f32.mrb[0].mxu0
          %v779 = vadd.f32 %v544, %v778
          %v780 = vpop.f32.mrb[0].mxu0
          %v781 = vadd.f32 %v548, %v780
          %v782 = vpop.f32.mrb[0].mxu0
          %v783 = vadd.f32 %v544, %v782
          %v784 = vpop.f32.mrb[0].mxu0
          %v785 = vadd.f32 %v548, %v784
          %786 = vmatprep.mubr.bf16.mxu0 0
          %787 = vmatmul.mubr.bf16.gmra.mrb[0].mxu0 %v506
          %v788 = vpop.f32.mrb[0].mxu0
          %v789 = vadd.f32 %v544, %v788
          %v790 = vpop.f32.mrb[0].mxu0
          %v791 = vadd.f32 %v548, %v790
          %v792 = vpop.f32.mrb[0].mxu0
          %v793 = vadd.f32 %v544, %v792
          %v794 = vpop.f32.mrb[0].mxu0
          %v795 = vadd.f32 %v548, %v794
          %796 = vdwg.mxu0
          %797 = vmatprep.subr.bf16.mxu0 0
          %798 = vmatpush1.bf16.msra.mxu0 %v638
          %799 = vmatprep.subr.bf16.mxu0 0
          %800 = vmatpush1.bf16.msra.mxu0 %v641
          %801 = vmatprep.subr.bf16.mxu0 0
          %802 = vmatpush1.bf16.msra.mxu0 %v644
          %803 = vmatprep.subr.bf16.mxu0 0
          %804 = vmatpush1.bf16.msra.mxu0 %v647
          %805 = vmatprep.subr.bf16.mxu0 0
          %806 = vmatpush1.bf16.msra.mxu0 %v650
          %807 = vmatprep.subr.bf16.mxu0 0
          %808 = vmatpush1.bf16.msra.mxu0 %v653
          %809 = vmatprep.subr.bf16.mxu0 0
          %810 = vmatpush1.bf16.msra.mxu0 %v656
          %811 = vmatprep.subr.bf16.mxu0 0
          %812 = vmatpush1.bf16.msra.mxu0 %v659
          %813 = vmatprep.subr.bf16.mxu0 0
          %814 = vmatpush1.bf16.msra.mxu0 0
          %815 = vmatprep.subr.bf16.mxu0 0
          %816 = vmatpush1.bf16.msra.mxu0 0
          %817 = vmatprep.subr.bf16.mxu0 0
          %818 = vmatpush1.bf16.msra.mxu0 0
          %819 = vmatprep.subr.bf16.mxu0 0
          %820 = vmatpush1.bf16.msra.mxu0 0
          %821 = vmatprep.subr.bf16.mxu0 0
          %822 = vmatpush1.bf16.msra.mxu0 0
          %823 = vmatprep.subr.bf16.mxu0 0
          %824 = vmatpush1.bf16.msra.mxu0 0
          %825 = vmatprep.subr.bf16.mxu0 0
          %826 = vmatpush1.bf16.msra.mxu0 0
          %827 = vmatprep.subr.bf16.mxu0 0
          %828 = vmatpush1.bf16.msra.mxu0 0
          %829 = vmatprep.mubr.bf16.mxu0 0
          %830 = vmatmul.mubr.bf16.gmra.mrb[0].mxu0 %v499
          %v831 = vpop.f32.mrb[0].mxu0
          %v832 = vadd.f32 %v552, %v831
          %v833 = vpop.f32.mrb[0].mxu0
          %v834 = vpop.f32.mrb[0].mxu0
          %v835 = vadd.f32 %v552, %v834
          %v836 = vpop.f32.mrb[0].mxu0
          %837 = vmatprep.mubr.bf16.mxu0 0
          %838 = vmatmul.mubr.bf16.gmra.mrb[0].mxu0 %v500
          %v839 = vpop.f32.mrb[0].mxu0
          %v840 = vadd.f32 %v552, %v839
          %v841 = vpop.f32.mrb[0].mxu0
          %v842 = vpop.f32.mrb[0].mxu0
          %v843 = vadd.f32 %v552, %v842
          %v844 = vpop.f32.mrb[0].mxu0
          %845 = vmatprep.mubr.bf16.mxu0 0
          %846 = vmatmul.mubr.bf16.gmra.mrb[0].mxu0 %v501
          %v847 = vpop.f32.mrb[0].mxu0
          %v848 = vadd.f32 %v552, %v847
          %v849 = vpop.f32.mrb[0].mxu0
          %v850 = vpop.f32.mrb[0].mxu0
          %v851 = vadd.f32 %v552, %v850
          %v852 = vpop.f32.mrb[0].mxu0
          %853 = vmatprep.mubr.bf16.mxu0 0
          %854 = vmatmul.mubr.bf16.gmra.mrb[0].mxu0 %v502
          %v855 = vpop.f32.mrb[0].mxu0
          %v856 = vadd.f32 %v552, %v855
          %v857 = vpop.f32.mrb[0].mxu0
          %v858 = vpop.f32.mrb[0].mxu0
          %v859 = vadd.f32 %v552, %v858
          %v860 = vpop.f32.mrb[0].mxu0
          %861 = vmatprep.mubr.bf16.mxu0 0
          %862 = vmatmul.mubr.bf16.gmra.mrb[0].mxu0 %v503
          %v863 = vpop.f32.mrb[0].mxu0
          %v864 = vadd.f32 %v552, %v863
          %v865 = vpop.f32.mrb[0].mxu0
          %v866 = vpop.f32.mrb[0].mxu0
          %v867 = vadd.f32 %v552, %v866
          %v868 = vpop.f32.mrb[0].mxu0
          %869 = vmatprep.mubr.bf16.mxu0 0
          %870 = vmatmul.mubr.bf16.gmra.mrb[0].mxu0 %v504
          %v871 = vpop.f32.mrb[0].mxu0
          %v872 = vadd.f32 %v552, %v871
          %v873 = vpop.f32.mrb[0].mxu0
          %v874 = vpop.f32.mrb[0].mxu0
          %v875 = vadd.f32 %v552, %v874
          %v876 = vpop.f32.mrb[0].mxu0
          %877 = vmatprep.mubr.bf16.mxu0 0
          %878 = vmatmul.mubr.bf16.gmra.mrb[0].mxu0 %v505
          %v879 = vpop.f32.mrb[0].mxu0
          %v880 = vadd.f32 %v552, %v879
          %v881 = vpop.f32.mrb[0].mxu0
          %v882 = vpop.f32.mrb[0].mxu0
          %v883 = vadd.f32 %v552, %v882
          %v884 = vpop.f32.mrb[0].mxu0
          %885 = vmatprep.mubr.bf16.mxu0 0
          %886 = vmatmul.mubr.bf16.gmra.mrb[0].mxu0 %v506
          %v887 = vpop.f32.mrb[0].mxu0
          %v888 = vadd.f32 %v552, %v887
          %v889 = vpop.f32.mrb[0].mxu0
          %v890 = vpop.f32.mrb[0].mxu0
          %v891 = vadd.f32 %v552, %v890
          %v892 = vpop.f32.mrb[0].mxu0
          %893 = vdwg.mxu0
          %v894 = vpack.c.bf16 %v723, %v719
          %v895 = vpack.c.bf16 %v725, %v721
          %v896 = vpack.c.bf16 %v835, %v832
          %v897 = vpack.c.bf16 %v733, %v729
          %v898 = vpack.c.bf16 %v735, %v731
          %v899 = vpack.c.bf16 %v843, %v840
          %v900 = vpack.c.bf16 %v743, %v739
          %v901 = vpack.c.bf16 %v745, %v741
          %v902 = vpack.c.bf16 %v851, %v848
          %v903 = vpack.c.bf16 %v753, %v749
          %v904 = vpack.c.bf16 %v755, %v751
          %v905 = vpack.c.bf16 %v859, %v856
          %v906 = vpack.c.bf16 %v763, %v759
          %v907 = vpack.c.bf16 %v765, %v761
          %v908 = vpack.c.bf16 %v867, %v864
          %v909 = vpack.c.bf16 %v773, %v769
          %v910 = vpack.c.bf16 %v775, %v771
          %v911 = vpack.c.bf16 %v875, %v872
          %v912 = vpack.c.bf16 %v783, %v779
          %v913 = vpack.c.bf16 %v785, %v781
          %v914 = vpack.c.bf16 %v883, %v880
          %v915 = vpack.c.bf16 %v793, %v789
          %v916 = vpack.c.bf16 %v795, %v791
          %v917 = vpack.c.bf16 %v891, %v888
          %918 = vst [vmem:[#allocation2] sm:$0xff] %v894
          %919 = vst [vmem:[#allocation2 + $0x8] sm:$0xff] %v895
          %920 = vst [vmem:[#allocation2 + $0x10] sm:$0xff] %v896
          %921 = vst [vmem:[#allocation2 + $0x18] sm:$0xff] %v897
          %922 = vst [vmem:[#allocation2 + $0x20] sm:$0xff] %v898
          %923 = vst [vmem:[#allocation2 + $0x28] sm:$0xff] %v899
          %924 = vst [vmem:[#allocation2 + $0x30] sm:$0xff] %v900
          %925 = vst [vmem:[#allocation2 + $0x38] sm:$0xff] %v901
          %926 = vst [vmem:[#allocation2 + $0x40] sm:$0xff] %v902
          %927 = vst [vmem:[#allocation2 + $0x48] sm:$0xff] %v903
          %928 = vst [vmem:[#allocation2 + $0x50] sm:$0xff] %v904
          %929 = vst [vmem:[#allocation2 + $0x58] sm:$0xff] %v905
          %930 = vst [vmem:[#allocation2 + $0x60] sm:$0xff] %v906
          %931 = vst [vmem:[#allocation2 + $0x68] sm:$0xff] %v907
          %932 = vst [vmem:[#allocation2 + $0x70] sm:$0xff] %v908
          %933 = vst [vmem:[#allocation2 + $0x78] sm:$0xff] %v909
          %934 = vst [vmem:[#allocation2 + $0x80] sm:$0xff] %v910
          %935 = vst [vmem:[#allocation2 + $0x88] sm:$0xff] %v911
          %936 = vst [vmem:[#allocation2 + $0x90] sm:$0xff] %v912
          %937 = vst [vmem:[#allocation2 + $0x98] sm:$0xff] %v913
          %938 = vst [vmem:[#allocation2 + $0xa0] sm:$0xff] %v914
          %939 = vst [vmem:[#allocation2 + $0xa8] sm:$0xff] %v915
          %940 = vst [vmem:[#allocation2 + $0xb0] sm:$0xff] %v916
          %941 = vst [vmem:[#allocation2 + $0xb8] sm:$0xff] %v917
        $region88: #{tpu_custom_call.1} parent=63 // pred_fallthru
          _
        %s942 = smul.u32 %s35, 128
        %s943 = sshra.s32 %s942, 4
        %s944 = sand.u32 %s942, 15
        %s945 = smul.u32 %s943, 3
        %s946 = smul.addr %s945, 8
        %s947 = scalar_lea.vmem [#allocation2], %s946
        %v948 = vld [vmem:[%s947] sm:$0xff]
        %v949 = vld [vmem:[%s947 + $0x18] sm:$0xff]
        %v950 = vld [vmem:[%s947 + $0x30] sm:$0xff]
        %v951 = vld [vmem:[%s947 + $0x48] sm:$0xff]
        %v952 = vld [vmem:[%s947 + $0x60] sm:$0xff]
        %v953 = vld [vmem:[%s947 + $0x78] sm:$0xff]
        %v954 = vld [vmem:[%s947 + $0x90] sm:$0xff]
        %v955 = vld [vmem:[%s947 + $0xa8] sm:$0xff]
        %v956 = vld [vmem:[#allocation2 + $0x8] sm:$0xff]
        %v957 = vld [vmem:[#allocation2 + $0x10] sm:$0xff]
        %v958 = vld [vmem:[#allocation2 + $0x20] sm:$0xff]
        %v959 = vld [vmem:[#allocation2 + $0x28] sm:$0xff]
        %v960 = vld [vmem:[#allocation2 + $0x38] sm:$0xff]
        %v961 = vld [vmem:[#allocation2 + $0x40] sm:$0xff]
        %v962 = vld [vmem:[#allocation2 + $0x50] sm:$0xff]
        %v963 = vld [vmem:[#allocation2 + $0x58] sm:$0xff]
        %v964 = vld [vmem:[#allocation2 + $0x68] sm:$0xff]
        %v965 = vld [vmem:[#allocation2 + $0x70] sm:$0xff]
        %v966 = vld [vmem:[#allocation2 + $0x80] sm:$0xff]
        %v967 = vld [vmem:[#allocation2 + $0x88] sm:$0xff]
        %v968 = vld [vmem:[#allocation2 + $0x98] sm:$0xff]
        %v969 = vld [vmem:[#allocation2 + $0xa0] sm:$0xff]
        %v970 = vld [vmem:[#allocation2 + $0xb0] sm:$0xff]
        %v971 = vld [vmem:[#allocation2 + $0xb8] sm:$0xff]
        %980 = vrot.lane.b32.xlu0 %v948, 112
        %v981 = vpop.permute.xlu0 %980
        %982 = vrot.lane.b32.xlu0 %v949, 112
        %v983 = vpop.permute.xlu0 %982
        %984 = vrot.lane.b32.xlu0 %v950, 112
        %v985 = vpop.permute.xlu0 %984
        %986 = vrot.lane.b32.xlu0 %v951, 112
        %v987 = vpop.permute.xlu0 %986
        %988 = vrot.lane.b32.xlu0 %v952, 112
        %v989 = vpop.permute.xlu0 %988
        %990 = vrot.lane.b32.xlu0 %v953, 112
        %v991 = vpop.permute.xlu0 %990
        %992 = vrot.lane.b32.xlu0 %v954, 112
        %v993 = vpop.permute.xlu0 %992
        %994 = vrot.lane.b32.xlu0 %v955, 112
        %v995 = vpop.permute.xlu0 %994
        %996 = vrot.lane.b32.xlu0 %v948, 96
        %v997 = vpop.permute.xlu0 %996
        %998 = vrot.lane.b32.xlu0 %v949, 96
        %v999 = vpop.permute.xlu0 %998
        %1000 = vrot.lane.b32.xlu0 %v950, 96
        %v1001 = vpop.permute.xlu0 %1000
        %1002 = vrot.lane.b32.xlu0 %v951, 96
        %v1003 = vpop.permute.xlu0 %1002
        %1004 = vrot.lane.b32.xlu0 %v952, 96
        %v1005 = vpop.permute.xlu0 %1004
        %1006 = vrot.lane.b32.xlu0 %v953, 96
        %v1007 = vpop.permute.xlu0 %1006
        %1008 = vrot.lane.b32.xlu0 %v954, 96
        %v1009 = vpop.permute.xlu0 %1008
        %1010 = vrot.lane.b32.xlu0 %v955, 96
        %v1011 = vpop.permute.xlu0 %1010
        %1012 = vrot.lane.b32.xlu0 %v948, 80
        %v1013 = vpop.permute.xlu0 %1012
        %1014 = vrot.lane.b32.xlu0 %v949, 80
        %v1015 = vpop.permute.xlu0 %1014
        %1016 = vrot.lane.b32.xlu0 %v950, 80
        %v1017 = vpop.permute.xlu0 %1016
        %1018 = vrot.lane.b32.xlu0 %v951, 80
        %v1019 = vpop.permute.xlu0 %1018
        %1020 = vrot.lane.b32.xlu0 %v952, 80
        %v1021 = vpop.permute.xlu0 %1020
        %1022 = vrot.lane.b32.xlu0 %v953, 80
        %v1023 = vpop.permute.xlu0 %1022
        %1024 = vrot.lane.b32.xlu0 %v954, 80
        %v1025 = vpop.permute.xlu0 %1024
        %1026 = vrot.lane.b32.xlu0 %v955, 80
        %v1027 = vpop.permute.xlu0 %1026
        %1028 = vrot.lane.b32.xlu0 %v948, 64
        %v1029 = vpop.permute.xlu0 %1028
        %1030 = vrot.lane.b32.xlu0 %v949, 64
        %v1031 = vpop.permute.xlu0 %1030
        %1032 = vrot.lane.b32.xlu0 %v950, 64
        %v1033 = vpop.permute.xlu0 %1032
        %1034 = vrot.lane.b32.xlu0 %v951, 64
        %v1035 = vpop.permute.xlu0 %1034
        %1036 = vrot.lane.b32.xlu0 %v952, 64
        %v1037 = vpop.permute.xlu0 %1036
        %1038 = vrot.lane.b32.xlu0 %v953, 64
        %v1039 = vpop.permute.xlu0 %1038
        %1040 = vrot.lane.b32.xlu0 %v954, 64
        %v1041 = vpop.permute.xlu0 %1040
        %1042 = vrot.lane.b32.xlu0 %v955, 64
        %v1043 = vpop.permute.xlu0 %1042
        %1044 = vrot.lane.b32.xlu0 %v948, 48
        %v1045 = vpop.permute.xlu0 %1044
        %1046 = vrot.lane.b32.xlu0 %v949, 48
        %v1047 = vpop.permute.xlu0 %1046
        %1048 = vrot.lane.b32.xlu0 %v950, 48
        %v1049 = vpop.permute.xlu0 %1048
        %1050 = vrot.lane.b32.xlu0 %v951, 48
        %v1051 = vpop.permute.xlu0 %1050
        %1052 = vrot.lane.b32.xlu0 %v952, 48
        %v1053 = vpop.permute.xlu0 %1052
        %1054 = vrot.lane.b32.xlu0 %v953, 48
        %v1055 = vpop.permute.xlu0 %1054
        %1056 = vrot.lane.b32.xlu0 %v954, 48
        %v1057 = vpop.permute.xlu0 %1056
        %1058 = vrot.lane.b32.xlu0 %v955, 48
        %v1059 = vpop.permute.xlu0 %1058
        %1060 = vrot.lane.b32.xlu0 %v948, 32
        %v1061 = vpop.permute.xlu0 %1060
        %1062 = vrot.lane.b32.xlu0 %v949, 32
        %v1063 = vpop.permute.xlu0 %1062
        %1064 = vrot.lane.b32.xlu0 %v950, 32
        %v1065 = vpop.permute.xlu0 %1064
        %1066 = vrot.lane.b32.xlu0 %v951, 32
        %v1067 = vpop.permute.xlu0 %1066
        %1068 = vrot.lane.b32.xlu0 %v952, 32
        %v1069 = vpop.permute.xlu0 %1068
        %1070 = vrot.lane.b32.xlu0 %v953, 32
        %v1071 = vpop.permute.xlu0 %1070
        %1072 = vrot.lane.b32.xlu0 %v954, 32
        %v1073 = vpop.permute.xlu0 %1072
        %1074 = vrot.lane.b32.xlu0 %v955, 32
        %v1075 = vpop.permute.xlu0 %1074
        %1076 = vrot.lane.b32.xlu0 %v948, 16
        %v1077 = vpop.permute.xlu0 %1076
        %1078 = vrot.lane.b32.xlu0 %v949, 16
        %v1079 = vpop.permute.xlu0 %1078
        %1080 = vrot.lane.b32.xlu0 %v950, 16
        %v1081 = vpop.permute.xlu0 %1080
        %1082 = vrot.lane.b32.xlu0 %v951, 16
        %v1083 = vpop.permute.xlu0 %1082
        %1084 = vrot.lane.b32.xlu0 %v952, 16
        %v1085 = vpop.permute.xlu0 %1084
        %1086 = vrot.lane.b32.xlu0 %v953, 16
        %v1087 = vpop.permute.xlu0 %1086
        %1088 = vrot.lane.b32.xlu0 %v954, 16
        %v1089 = vpop.permute.xlu0 %1088
        %1090 = vrot.lane.b32.xlu0 %v955, 16
        %v1091 = vpop.permute.xlu0 %1090
        %1100 = vrot.lane.b32.xlu0 %v956, 112
        %v1101 = vpop.permute.xlu0 %1100
        %1102 = vrot.lane.b32.xlu0 %v958, 112
        %v1103 = vpop.permute.xlu0 %1102
        %1104 = vrot.lane.b32.xlu0 %v960, 112
        %v1105 = vpop.permute.xlu0 %1104
        %1106 = vrot.lane.b32.xlu0 %v962, 112
        %v1107 = vpop.permute.xlu0 %1106
        %1108 = vrot.lane.b32.xlu0 %v964, 112
        %v1109 = vpop.permute.xlu0 %1108
        %1110 = vrot.lane.b32.xlu0 %v966, 112
        %v1111 = vpop.permute.xlu0 %1110
        %1112 = vrot.lane.b32.xlu0 %v968, 112
        %v1113 = vpop.permute.xlu0 %1112
        %1114 = vrot.lane.b32.xlu0 %v970, 112
        %v1115 = vpop.permute.xlu0 %1114
        %1116 = vrot.lane.b32.xlu0 %v956, 96
        %v1117 = vpop.permute.xlu0 %1116
        %1118 = vrot.lane.b32.xlu0 %v958, 96
        %v1119 = vpop.permute.xlu0 %1118
        %1120 = vrot.lane.b32.xlu0 %v960, 96
        %v1121 = vpop.permute.xlu0 %1120
        %1122 = vrot.lane.b32.xlu0 %v962, 96
        %v1123 = vpop.permute.xlu0 %1122
        %1124 = vrot.lane.b32.xlu0 %v964, 96
        %v1125 = vpop.permute.xlu0 %1124
        %1126 = vrot.lane.b32.xlu0 %v966, 96
        %v1127 = vpop.permute.xlu0 %1126
        %1128 = vrot.lane.b32.xlu0 %v968, 96
        %v1129 = vpop.permute.xlu0 %1128
        %1130 = vrot.lane.b32.xlu0 %v970, 96
        %v1131 = vpop.permute.xlu0 %1130
        %1132 = vrot.lane.b32.xlu0 %v956, 80
        %v1133 = vpop.permute.xlu0 %1132
        %1134 = vrot.lane.b32.xlu0 %v958, 80
        %v1135 = vpop.permute.xlu0 %1134
        %1136 = vrot.lane.b32.xlu0 %v960, 80
        %v1137 = vpop.permute.xlu0 %1136
        %1138 = vrot.lane.b32.xlu0 %v962, 80
        %v1139 = vpop.permute.xlu0 %1138
        %1140 = vrot.lane.b32.xlu0 %v964, 80
        %v1141 = vpop.permute.xlu0 %1140
        %1142 = vrot.lane.b32.xlu0 %v966, 80
        %v1143 = vpop.permute.xlu0 %1142
        %1144 = vrot.lane.b32.xlu0 %v968, 80
        %v1145 = vpop.permute.xlu0 %1144
        %1146 = vrot.lane.b32.xlu0 %v970, 80
        %v1147 = vpop.permute.xlu0 %1146
        %1148 = vrot.lane.b32.xlu0 %v956, 64
        %v1149 = vpop.permute.xlu0 %1148
        %1150 = vrot.lane.b32.xlu0 %v958, 64
        %v1151 = vpop.permute.xlu0 %1150
        %1152 = vrot.lane.b32.xlu0 %v960, 64
        %v1153 = vpop.permute.xlu0 %1152
        %1154 = vrot.lane.b32.xlu0 %v962, 64
        %v1155 = vpop.permute.xlu0 %1154
        %1156 = vrot.lane.b32.xlu0 %v964, 64
        %v1157 = vpop.permute.xlu0 %1156
        %1158 = vrot.lane.b32.xlu0 %v966, 64
        %v1159 = vpop.permute.xlu0 %1158
        %1160 = vrot.lane.b32.xlu0 %v968, 64
        %v1161 = vpop.permute.xlu0 %1160
        %1162 = vrot.lane.b32.xlu0 %v970, 64
        %v1163 = vpop.permute.xlu0 %1162
        %1164 = vrot.lane.b32.xlu0 %v956, 48
        %v1165 = vpop.permute.xlu0 %1164
        %1166 = vrot.lane.b32.xlu0 %v958, 48
        %v1167 = vpop.permute.xlu0 %1166
        %1168 = vrot.lane.b32.xlu0 %v960, 48
        %v1169 = vpop.permute.xlu0 %1168
        %1170 = vrot.lane.b32.xlu0 %v962, 48
        %v1171 = vpop.permute.xlu0 %1170
        %1172 = vrot.lane.b32.xlu0 %v964, 48
        %v1173 = vpop.permute.xlu0 %1172
        %1174 = vrot.lane.b32.xlu0 %v966, 48
        %v1175 = vpop.permute.xlu0 %1174
        %1176 = vrot.lane.b32.xlu0 %v968, 48
        %v1177 = vpop.permute.xlu0 %1176
        %1178 = vrot.lane.b32.xlu0 %v970, 48
        %v1179 = vpop.permute.xlu0 %1178
        %1180 = vrot.lane.b32.xlu0 %v956, 32
        %v1181 = vpop.permute.xlu0 %1180
        %1182 = vrot.lane.b32.xlu0 %v958, 32
        %v1183 = vpop.permute.xlu0 %1182
        %1184 = vrot.lane.b32.xlu0 %v960, 32
        %v1185 = vpop.permute.xlu0 %1184
        %1186 = vrot.lane.b32.xlu0 %v962, 32
        %v1187 = vpop.permute.xlu0 %1186
        %1188 = vrot.lane.b32.xlu0 %v964, 32
        %v1189 = vpop.permute.xlu0 %1188
        %1190 = vrot.lane.b32.xlu0 %v966, 32
        %v1191 = vpop.permute.xlu0 %1190
        %1192 = vrot.lane.b32.xlu0 %v968, 32
        %v1193 = vpop.permute.xlu0 %1192
        %1194 = vrot.lane.b32.xlu0 %v970, 32
        %v1195 = vpop.permute.xlu0 %1194
        %1196 = vrot.lane.b32.xlu0 %v956, 16
        %v1197 = vpop.permute.xlu0 %1196
        %1198 = vrot.lane.b32.xlu0 %v958, 16
        %v1199 = vpop.permute.xlu0 %1198
        %1200 = vrot.lane.b32.xlu0 %v960, 16
        %v1201 = vpop.permute.xlu0 %1200
        %1202 = vrot.lane.b32.xlu0 %v962, 16
        %v1203 = vpop.permute.xlu0 %1202
        %1204 = vrot.lane.b32.xlu0 %v964, 16
        %v1205 = vpop.permute.xlu0 %1204
        %1206 = vrot.lane.b32.xlu0 %v966, 16
        %v1207 = vpop.permute.xlu0 %1206
        %1208 = vrot.lane.b32.xlu0 %v968, 16
        %v1209 = vpop.permute.xlu0 %1208
        %1210 = vrot.lane.b32.xlu0 %v970, 16
        %v1211 = vpop.permute.xlu0 %1210
        %1220 = vrot.lane.b32.xlu0 %v957, 112
        %v1221 = vpop.permute.xlu0 %1220
        %1222 = vrot.lane.b32.xlu0 %v959, 112
        %v1223 = vpop.permute.xlu0 %1222
        %1224 = vrot.lane.b32.xlu0 %v961, 112
        %v1225 = vpop.permute.xlu0 %1224
        %1226 = vrot.lane.b32.xlu0 %v963, 112
        %v1227 = vpop.permute.xlu0 %1226
        %1228 = vrot.lane.b32.xlu0 %v965, 112
        %v1229 = vpop.permute.xlu0 %1228
        %1230 = vrot.lane.b32.xlu0 %v967, 112
        %v1231 = vpop.permute.xlu0 %1230
        %1232 = vrot.lane.b32.xlu0 %v969, 112
        %v1233 = vpop.permute.xlu0 %1232
        %1234 = vrot.lane.b32.xlu0 %v971, 112
        %v1235 = vpop.permute.xlu0 %1234
        %1244 = vrot.lane.b32.xlu0 %v957, 96
        %v1245 = vpop.permute.xlu0 %1244
        %1246 = vrot.lane.b32.xlu0 %v959, 96
        %v1247 = vpop.permute.xlu0 %1246
        %1248 = vrot.lane.b32.xlu0 %v961, 96
        %v1249 = vpop.permute.xlu0 %1248
        %1250 = vrot.lane.b32.xlu0 %v963, 96
        %v1251 = vpop.permute.xlu0 %1250
        %1252 = vrot.lane.b32.xlu0 %v965, 96
        %v1253 = vpop.permute.xlu0 %1252
        %1254 = vrot.lane.b32.xlu0 %v967, 96
        %v1255 = vpop.permute.xlu0 %1254
        %1256 = vrot.lane.b32.xlu0 %v969, 96
        %v1257 = vpop.permute.xlu0 %1256
        %1258 = vrot.lane.b32.xlu0 %v971, 96
        %v1259 = vpop.permute.xlu0 %1258
        %1268 = vrot.lane.b32.xlu0 %v957, 80
        %v1269 = vpop.permute.xlu0 %1268
        %1270 = vrot.lane.b32.xlu0 %v959, 80
        %v1271 = vpop.permute.xlu0 %1270
        %1272 = vrot.lane.b32.xlu0 %v961, 80
        %v1273 = vpop.permute.xlu0 %1272
        %1274 = vrot.lane.b32.xlu0 %v963, 80
        %v1275 = vpop.permute.xlu0 %1274
        %1276 = vrot.lane.b32.xlu0 %v965, 80
        %v1277 = vpop.permute.xlu0 %1276
        %1278 = vrot.lane.b32.xlu0 %v967, 80
        %v1279 = vpop.permute.xlu0 %1278
        %1280 = vrot.lane.b32.xlu0 %v969, 80
        %v1281 = vpop.permute.xlu0 %1280
        %1282 = vrot.lane.b32.xlu0 %v971, 80
        %v1283 = vpop.permute.xlu0 %1282
        %1292 = vrot.lane.b32.xlu0 %v957, 64
        %v1293 = vpop.permute.xlu0 %1292
        %1294 = vrot.lane.b32.xlu0 %v959, 64
        %v1295 = vpop.permute.xlu0 %1294
        %1296 = vrot.lane.b32.xlu0 %v961, 64
        %v1297 = vpop.permute.xlu0 %1296
        %1298 = vrot.lane.b32.xlu0 %v963, 64
        %v1299 = vpop.permute.xlu0 %1298
        %1300 = vrot.lane.b32.xlu0 %v965, 64
        %v1301 = vpop.permute.xlu0 %1300
        %1302 = vrot.lane.b32.xlu0 %v967, 64
        %v1303 = vpop.permute.xlu0 %1302
        %1304 = vrot.lane.b32.xlu0 %v969, 64
        %v1305 = vpop.permute.xlu0 %1304
        %1306 = vrot.lane.b32.xlu0 %v971, 64
        %v1307 = vpop.permute.xlu0 %1306
        %1316 = vrot.lane.b32.xlu0 %v957, 48
        %v1317 = vpop.permute.xlu0 %1316
        %1318 = vrot.lane.b32.xlu0 %v959, 48
        %v1319 = vpop.permute.xlu0 %1318
        %1320 = vrot.lane.b32.xlu0 %v961, 48
        %v1321 = vpop.permute.xlu0 %1320
        %1322 = vrot.lane.b32.xlu0 %v963, 48
        %v1323 = vpop.permute.xlu0 %1322
        %1324 = vrot.lane.b32.xlu0 %v965, 48
        %v1325 = vpop.permute.xlu0 %1324
        %1326 = vrot.lane.b32.xlu0 %v967, 48
        %v1327 = vpop.permute.xlu0 %1326
        %1328 = vrot.lane.b32.xlu0 %v969, 48
        %v1329 = vpop.permute.xlu0 %1328
        %1330 = vrot.lane.b32.xlu0 %v971, 48
        %v1331 = vpop.permute.xlu0 %1330
        %1340 = vrot.lane.b32.xlu0 %v957, 32
        %v1341 = vpop.permute.xlu0 %1340
        %1342 = vrot.lane.b32.xlu0 %v959, 32
        %v1343 = vpop.permute.xlu0 %1342
        %1344 = vrot.lane.b32.xlu0 %v961, 32
        %v1345 = vpop.permute.xlu0 %1344
        %1346 = vrot.lane.b32.xlu0 %v963, 32
        %v1347 = vpop.permute.xlu0 %1346
        %1348 = vrot.lane.b32.xlu0 %v965, 32
        %v1349 = vpop.permute.xlu0 %1348
        %1350 = vrot.lane.b32.xlu0 %v967, 32
        %v1351 = vpop.permute.xlu0 %1350
        %1352 = vrot.lane.b32.xlu0 %v969, 32
        %v1353 = vpop.permute.xlu0 %1352
        %1354 = vrot.lane.b32.xlu0 %v971, 32
        %v1355 = vpop.permute.xlu0 %1354
        %1364 = vrot.lane.b32.xlu0 %v957, 16
        %v1365 = vpop.permute.xlu0 %1364
        %1366 = vrot.lane.b32.xlu0 %v959, 16
        %v1367 = vpop.permute.xlu0 %1366
        %1368 = vrot.lane.b32.xlu0 %v961, 16
        %v1369 = vpop.permute.xlu0 %1368
        %1370 = vrot.lane.b32.xlu0 %v963, 16
        %v1371 = vpop.permute.xlu0 %1370
        %1372 = vrot.lane.b32.xlu0 %v965, 16
        %v1373 = vpop.permute.xlu0 %1372
        %1374 = vrot.lane.b32.xlu0 %v967, 16
        %v1375 = vpop.permute.xlu0 %1374
        %1376 = vrot.lane.b32.xlu0 %v969, 16
        %v1377 = vpop.permute.xlu0 %1376
        %1378 = vrot.lane.b32.xlu0 %v971, 16
        %v1379 = vpop.permute.xlu0 %1378
        %vm1388 = vcmask 130048
        %v1390 = vsel %vm1388, %v948, 0
        %v1393 = vsel %vm1388, %v949, 0
        %v1396 = vsel %vm1388, %v950, 0
        %v1399 = vsel %vm1388, %v951, 0
        %v1402 = vsel %vm1388, %v952, 0
        %v1405 = vsel %vm1388, %v953, 0
        %v1408 = vsel %vm1388, %v954, 0
        %v1411 = vsel %vm1388, %v955, 0
        %v1414 = vsel %vm1388, %v956, 0
        %v1417 = vsel %vm1388, %v958, 0
        %v1420 = vsel %vm1388, %v960, 0
        %v1423 = vsel %vm1388, %v962, 0
        %v1426 = vsel %vm1388, %v964, 0
        %v1429 = vsel %vm1388, %v966, 0
        %v1432 = vsel %vm1388, %v968, 0
        %v1435 = vsel %vm1388, %v970, 0
        %1437 = vmatprep.subr.bf16.mxu0 0
        %1438 = vmatpush1.bf16.xpose.msra.mxu0 %v1414
        %1439 = vmatprep.subr.bf16.mxu0 0
        %1440 = vmatpush1.bf16.xpose.msra.mxu0 %v1417
        %1441 = vmatprep.subr.bf16.mxu0 0
        %1442 = vmatpush1.bf16.xpose.msra.mxu0 %v1420
        %1443 = vmatprep.subr.bf16.mxu0 0
        %1444 = vmatpush1.bf16.xpose.msra.mxu0 %v1423
        %1445 = vmatprep.subr.bf16.mxu0 0
        %1446 = vmatpush1.bf16.xpose.msra.mxu0 %v1426
        %1447 = vmatprep.subr.bf16.mxu0 0
        %1448 = vmatpush1.bf16.xpose.msra.mxu0 %v1429
        %1449 = vmatprep.subr.bf16.mxu0 0
        %1450 = vmatpush1.bf16.xpose.msra.mxu0 %v1432
        %1451 = vmatprep.subr.bf16.mxu0 0
        %1452 = vmatpush1.bf16.xpose.msra.mxu0 %v1435
        %1453 = vmatprep.subr.bf16.mxu0 0
        %1454 = vmatpush1.bf16.xpose.msra.mxu0 0
        %1455 = vmatprep.subr.bf16.mxu0 0
        %1456 = vmatpush1.bf16.xpose.msra.mxu0 0
        %1457 = vmatprep.subr.bf16.mxu0 0
        %1458 = vmatpush1.bf16.xpose.msra.mxu0 0
        %1459 = vmatprep.subr.bf16.mxu0 0
        %1460 = vmatpush1.bf16.xpose.msra.mxu0 0
        %1461 = vmatprep.subr.bf16.mxu0 0
        %1462 = vmatpush1.bf16.xpose.msra.mxu0 0
        %1463 = vmatprep.subr.bf16.mxu0 0
        %1464 = vmatpush1.bf16.xpose.msra.mxu0 0
        %1465 = vmatprep.subr.bf16.mxu0 0
        %1466 = vmatpush1.bf16.xpose.msra.mxu0 0
        %1467 = vmatprep.subr.bf16.mxu0 0
        %1468 = vmatpush1.bf16.xpose.msra.mxu0 0
        %1469 = vmatprep.mubr.bf16.mxu0 0
        %1470 = vmatmul.mubr.bf16.gmra.mrb[0].mxu0 %v1390
        %v1471 = vpop.f32.mrb[0].mxu0
        %v1472 = vadd.f32 0.0, %v1471
        %v1473 = vpop.f32.mrb[0].mxu0
        %v1474 = vpop.f32.mrb[0].mxu0
        %v1475 = vadd.f32 0.0, %v1474
        %v1476 = vpop.f32.mrb[0].mxu0
        %1477 = vmatprep.mubr.bf16.mxu0 0
        %1478 = vmatmul.mubr.bf16.gmra.mrb[0].mxu0 %v1393
        %v1479 = vpop.f32.mrb[0].mxu0
        %v1480 = vadd.f32 0.0, %v1479
        %v1481 = vpop.f32.mrb[0].mxu0
        %v1482 = vpop.f32.mrb[0].mxu0
        %v1483 = vadd.f32 0.0, %v1482
        %v1484 = vpop.f32.mrb[0].mxu0
        %1485 = vmatprep.mubr.bf16.mxu0 0
        %1486 = vmatmul.mubr.bf16.gmra.mrb[0].mxu0 %v1396
        %v1487 = vpop.f32.mrb[0].mxu0
        %v1488 = vadd.f32 0.0, %v1487
        %v1489 = vpop.f32.mrb[0].mxu0
        %v1490 = vpop.f32.mrb[0].mxu0
        %v1491 = vadd.f32 0.0, %v1490
        %v1492 = vpop.f32.mrb[0].mxu0
        %1493 = vmatprep.mubr.bf16.mxu0 0
        %1494 = vmatmul.mubr.bf16.gmra.mrb[0].mxu0 %v1399
        %v1495 = vpop.f32.mrb[0].mxu0
        %v1496 = vadd.f32 0.0, %v1495
        %v1497 = vpop.f32.mrb[0].mxu0
        %v1498 = vpop.f32.mrb[0].mxu0
        %v1499 = vadd.f32 0.0, %v1498
        %v1500 = vpop.f32.mrb[0].mxu0
        %1501 = vmatprep.mubr.bf16.mxu0 0
        %1502 = vmatmul.mubr.bf16.gmra.mrb[0].mxu0 %v1402
        %v1503 = vpop.f32.mrb[0].mxu0
        %v1504 = vadd.f32 0.0, %v1503
        %v1505 = vpop.f32.mrb[0].mxu0
        %v1506 = vpop.f32.mrb[0].mxu0
        %v1507 = vadd.f32 0.0, %v1506
        %v1508 = vpop.f32.mrb[0].mxu0
        %1509 = vmatprep.mubr.bf16.mxu0 0
        %1510 = vmatmul.mubr.bf16.gmra.mrb[0].mxu0 %v1405
        %v1511 = vpop.f32.mrb[0].mxu0
        %v1512 = vadd.f32 0.0, %v1511
        %v1513 = vpop.f32.mrb[0].mxu0
        %v1514 = vpop.f32.mrb[0].mxu0
        %v1515 = vadd.f32 0.0, %v1514
        %v1516 = vpop.f32.mrb[0].mxu0
        %1517 = vmatprep.mubr.bf16.mxu0 0
        %1518 = vmatmul.mubr.bf16.gmra.mrb[0].mxu0 %v1408
        %v1519 = vpop.f32.mrb[0].mxu0
        %v1520 = vadd.f32 0.0, %v1519
        %v1521 = vpop.f32.mrb[0].mxu0
        %v1522 = vpop.f32.mrb[0].mxu0
        %v1523 = vadd.f32 0.0, %v1522
        %v1524 = vpop.f32.mrb[0].mxu0
        %1525 = vmatprep.mubr.bf16.mxu0 0
        %1526 = vmatmul.mubr.bf16.gmra.mrb[0].mxu0 %v1411
        %v1527 = vpop.f32.mrb[0].mxu0
        %v1528 = vadd.f32 0.0, %v1527
        %v1529 = vpop.f32.mrb[0].mxu0
        %v1530 = vpop.f32.mrb[0].mxu0
        %v1531 = vadd.f32 0.0, %v1530
        %v1532 = vpop.f32.mrb[0].mxu0
        %1533 = vdwg.mxu0
        %v1535 = vsel %vm1388, %v981, 0
        %v1538 = vsel %vm1388, %v983, 0
        %v1541 = vsel %vm1388, %v985, 0
        %v1544 = vsel %vm1388, %v987, 0
        %v1547 = vsel %vm1388, %v989, 0
        %v1550 = vsel %vm1388, %v991, 0
        %v1553 = vsel %vm1388, %v993, 0
        %v1556 = vsel %vm1388, %v995, 0
        %v1559 = vsel %vm1388, %v1101, 0
        %v1562 = vsel %vm1388, %v1103, 0
        %v1565 = vsel %vm1388, %v1105, 0
        %v1568 = vsel %vm1388, %v1107, 0
        %v1571 = vsel %vm1388, %v1109, 0
        %v1574 = vsel %vm1388, %v1111, 0
        %v1577 = vsel %vm1388, %v1113, 0
        %v1580 = vsel %vm1388, %v1115, 0
        %1582 = vmatprep.subr.bf16.mxu0 0
        %1583 = vmatpush1.bf16.xpose.msra.mxu0 %v1559
        %1584 = vmatprep.subr.bf16.mxu0 0
        %1585 = vmatpush1.bf16.xpose.msra.mxu0 %v1562
        %1586 = vmatprep.subr.bf16.mxu0 0
        %1587 = vmatpush1.bf16.xpose.msra.mxu0 %v1565
        %1588 = vmatprep.subr.bf16.mxu0 0
        %1589 = vmatpush1.bf16.xpose.msra.mxu0 %v1568
        %1590 = vmatprep.subr.bf16.mxu0 0
        %1591 = vmatpush1.bf16.xpose.msra.mxu0 %v1571
        %1592 = vmatprep.subr.bf16.mxu0 0
        %1593 = vmatpush1.bf16.xpose.msra.mxu0 %v1574
        %1594 = vmatprep.subr.bf16.mxu0 0
        %1595 = vmatpush1.bf16.xpose.msra.mxu0 %v1577
        %1596 = vmatprep.subr.bf16.mxu0 0
        %1597 = vmatpush1.bf16.xpose.msra.mxu0 %v1580
        %1598 = vmatprep.subr.bf16.mxu0 0
        %1599 = vmatpush1.bf16.xpose.msra.mxu0 0
        %1600 = vmatprep.subr.bf16.mxu0 0
        %1601 = vmatpush1.bf16.xpose.msra.mxu0 0
        %1602 = vmatprep.subr.bf16.mxu0 0
        %1603 = vmatpush1.bf16.xpose.msra.mxu0 0
        %1604 = vmatprep.subr.bf16.mxu0 0
        %1605 = vmatpush1.bf16.xpose.msra.mxu0 0
        %1606 = vmatprep.subr.bf16.mxu0 0
        %1607 = vmatpush1.bf16.xpose.msra.mxu0 0
        %1608 = vmatprep.subr.bf16.mxu0 0
        %1609 = vmatpush1.bf16.xpose.msra.mxu0 0
        %1610 = vmatprep.subr.bf16.mxu0 0
        %1611 = vmatpush1.bf16.xpose.msra.mxu0 0
        %1612 = vmatprep.subr.bf16.mxu0 0
        %1613 = vmatpush1.bf16.xpose.msra.mxu0 0
        %1614 = vmatprep.mubr.bf16.mxu0 0
        %1615 = vmatmul.mubr.bf16.gmra.mrb[0].mxu0 %v1535
        %v1616 = vpop.f32.mrb[0].mxu0
        %v1617 = vadd.f32 0.0, %v1616
        %v1618 = vpop.f32.mrb[0].mxu0
        %v1619 = vpop.f32.mrb[0].mxu0
        %v1620 = vadd.f32 0.0, %v1619
        %v1621 = vpop.f32.mrb[0].mxu0
        %1622 = vmatprep.mubr.bf16.mxu0 0
        %1623 = vmatmul.mubr.bf16.gmra.mrb[0].mxu0 %v1538
        %v1624 = vpop.f32.mrb[0].mxu0
        %v1625 = vadd.f32 0.0, %v1624
        %v1626 = vpop.f32.mrb[0].mxu0
        %v1627 = vpop.f32.mrb[0].mxu0
        %v1628 = vadd.f32 0.0, %v1627
        %v1629 = vpop.f32.mrb[0].mxu0
        %1630 = vmatprep.mubr.bf16.mxu0 0
        %1631 = vmatmul.mubr.bf16.gmra.mrb[0].mxu0 %v1541
        %v1632 = vpop.f32.mrb[0].mxu0
        %v1633 = vadd.f32 0.0, %v1632
        %v1634 = vpop.f32.mrb[0].mxu0
        %v1635 = vpop.f32.mrb[0].mxu0
        %v1636 = vadd.f32 0.0, %v1635
        %v1637 = vpop.f32.mrb[0].mxu0
        %1638 = vmatprep.mubr.bf16.mxu0 0
        %1639 = vmatmul.mubr.bf16.gmra.mrb[0].mxu0 %v1544
        %v1640 = vpop.f32.mrb[0].mxu0
        %v1641 = vadd.f32 0.0, %v1640
        %v1642 = vpop.f32.mrb[0].mxu0
        %v1643 = vpop.f32.mrb[0].mxu0
        %v1644 = vadd.f32 0.0, %v1643
        %v1645 = vpop.f32.mrb[0].mxu0
        %1646 = vmatprep.mubr.bf16.mxu0 0
        %1647 = vmatmul.mubr.bf16.gmra.mrb[0].mxu0 %v1547
        %v1648 = vpop.f32.mrb[0].mxu0
        %v1649 = vadd.f32 0.0, %v1648
        %v1650 = vpop.f32.mrb[0].mxu0
        %v1651 = vpop.f32.mrb[0].mxu0
        %v1652 = vadd.f32 0.0, %v1651
        %v1653 = vpop.f32.mrb[0].mxu0
        %1654 = vmatprep.mubr.bf16.mxu0 0
        %1655 = vmatmul.mubr.bf16.gmra.mrb[0].mxu0 %v1550
        %v1656 = vpop.f32.mrb[0].mxu0
        %v1657 = vadd.f32 0.0, %v1656
        %v1658 = vpop.f32.mrb[0].mxu0
        %v1659 = vpop.f32.mrb[0].mxu0
        %v1660 = vadd.f32 0.0, %v1659
        %v1661 = vpop.f32.mrb[0].mxu0
        %1662 = vmatprep.mubr.bf16.mxu0 0
        %1663 = vmatmul.mubr.bf16.gmra.mrb[0].mxu0 %v1553
        %v1664 = vpop.f32.mrb[0].mxu0
        %v1665 = vadd.f32 0.0, %v1664
        %v1666 = vpop.f32.mrb[0].mxu0
        %v1667 = vpop.f32.mrb[0].mxu0
        %v1668 = vadd.f32 0.0, %v1667
        %v1669 = vpop.f32.mrb[0].mxu0
        %1670 = vmatprep.mubr.bf16.mxu0 0
        %1671 = vmatmul.mubr.bf16.gmra.mrb[0].mxu0 %v1556
        %v1672 = vpop.f32.mrb[0].mxu0
        %v1673 = vadd.f32 0.0, %v1672
        %v1674 = vpop.f32.mrb[0].mxu0
        %v1675 = vpop.f32.mrb[0].mxu0
        %v1676 = vadd.f32 0.0, %v1675
        %v1677 = vpop.f32.mrb[0].mxu0
        %1678 = vdwg.mxu0
        %v1680 = vsel %vm1388, %v997, 0
        %v1683 = vsel %vm1388, %v999, 0
        %v1686 = vsel %vm1388, %v1001, 0
        %v1689 = vsel %vm1388, %v1003, 0
        %v1692 = vsel %vm1388, %v1005, 0
        %v1695 = vsel %vm1388, %v1007, 0
        %v1698 = vsel %vm1388, %v1009, 0
        %v1701 = vsel %vm1388, %v1011, 0
        %v1704 = vsel %vm1388, %v1117, 0
        %v1707 = vsel %vm1388, %v1119, 0
        %v1710 = vsel %vm1388, %v1121, 0
        %v1713 = vsel %vm1388, %v1123, 0
        %v1716 = vsel %vm1388, %v1125, 0
        %v1719 = vsel %vm1388, %v1127, 0
        %v1722 = vsel %vm1388, %v1129, 0
        %v1725 = vsel %vm1388, %v1131, 0
        %1727 = vmatprep.subr.bf16.mxu0 0
        %1728 = vmatpush1.bf16.xpose.msra.mxu0 %v1704
        %1729 = vmatprep.subr.bf16.mxu0 0
        %1730 = vmatpush1.bf16.xpose.msra.mxu0 %v1707
        %1731 = vmatprep.subr.bf16.mxu0 0
        %1732 = vmatpush1.bf16.xpose.msra.mxu0 %v1710
        %1733 = vmatprep.subr.bf16.mxu0 0
        %1734 = vmatpush1.bf16.xpose.msra.mxu0 %v1713
        %1735 = vmatprep.subr.bf16.mxu0 0
        %1736 = vmatpush1.bf16.xpose.msra.mxu0 %v1716
        %1737 = vmatprep.subr.bf16.mxu0 0
        %1738 = vmatpush1.bf16.xpose.msra.mxu0 %v1719
        %1739 = vmatprep.subr.bf16.mxu0 0
        %1740 = vmatpush1.bf16.xpose.msra.mxu0 %v1722
        %1741 = vmatprep.subr.bf16.mxu0 0
        %1742 = vmatpush1.bf16.xpose.msra.mxu0 %v1725
        %1743 = vmatprep.subr.bf16.mxu0 0
        %1744 = vmatpush1.bf16.xpose.msra.mxu0 0
        %1745 = vmatprep.subr.bf16.mxu0 0
        %1746 = vmatpush1.bf16.xpose.msra.mxu0 0
        %1747 = vmatprep.subr.bf16.mxu0 0
        %1748 = vmatpush1.bf16.xpose.msra.mxu0 0
        %1749 = vmatprep.subr.bf16.mxu0 0
        %1750 = vmatpush1.bf16.xpose.msra.mxu0 0
        %1751 = vmatprep.subr.bf16.mxu0 0
        %1752 = vmatpush1.bf16.xpose.msra.mxu0 0
        %1753 = vmatprep.subr.bf16.mxu0 0
        %1754 = vmatpush1.bf16.xpose.msra.mxu0 0
        %1755 = vmatprep.subr.bf16.mxu0 0
        %1756 = vmatpush1.bf16.xpose.msra.mxu0 0
        %1757 = vmatprep.subr.bf16.mxu0 0
        %1758 = vmatpush1.bf16.xpose.msra.mxu0 0
        %1759 = vmatprep.mubr.bf16.mxu0 0
        %1760 = vmatmul.mubr.bf16.gmra.mrb[0].mxu0 %v1680
        %v1761 = vpop.f32.mrb[0].mxu0
        %v1762 = vadd.f32 0.0, %v1761
        %v1763 = vpop.f32.mrb[0].mxu0
        %v1764 = vpop.f32.mrb[0].mxu0
        %v1765 = vadd.f32 0.0, %v1764
        %v1766 = vpop.f32.mrb[0].mxu0
        %1767 = vmatprep.mubr.bf16.mxu0 0
        %1768 = vmatmul.mubr.bf16.gmra.mrb[0].mxu0 %v1683
        %v1769 = vpop.f32.mrb[0].mxu0
        %v1770 = vadd.f32 0.0, %v1769
        %v1771 = vpop.f32.mrb[0].mxu0
        %v1772 = vpop.f32.mrb[0].mxu0
        %v1773 = vadd.f32 0.0, %v1772
        %v1774 = vpop.f32.mrb[0].mxu0
        %1775 = vmatprep.mubr.bf16.mxu0 0
        %1776 = vmatmul.mubr.bf16.gmra.mrb[0].mxu0 %v1686
        %v1777 = vpop.f32.mrb[0].mxu0
        %v1778 = vadd.f32 0.0, %v1777
        %v1779 = vpop.f32.mrb[0].mxu0
        %v1780 = vpop.f32.mrb[0].mxu0
        %v1781 = vadd.f32 0.0, %v1780
        %v1782 = vpop.f32.mrb[0].mxu0
        %1783 = vmatprep.mubr.bf16.mxu0 0
        %1784 = vmatmul.mubr.bf16.gmra.mrb[0].mxu0 %v1689
        %v1785 = vpop.f32.mrb[0].mxu0
        %v1786 = vadd.f32 0.0, %v1785
        %v1787 = vpop.f32.mrb[0].mxu0
        %v1788 = vpop.f32.mrb[0].mxu0
        %v1789 = vadd.f32 0.0, %v1788
        %v1790 = vpop.f32.mrb[0].mxu0
        %1791 = vmatprep.mubr.bf16.mxu0 0
        %1792 = vmatmul.mubr.bf16.gmra.mrb[0].mxu0 %v1692
        %v1793 = vpop.f32.mrb[0].mxu0
        %v1794 = vadd.f32 0.0, %v1793
        %v1795 = vpop.f32.mrb[0].mxu0
        %v1796 = vpop.f32.mrb[0].mxu0
        %v1797 = vadd.f32 0.0, %v1796
        %v1798 = vpop.f32.mrb[0].mxu0
        %1799 = vmatprep.mubr.bf16.mxu0 0
        %1800 = vmatmul.mubr.bf16.gmra.mrb[0].mxu0 %v1695
        %v1801 = vpop.f32.mrb[0].mxu0
        %v1802 = vadd.f32 0.0, %v1801
        %v1803 = vpop.f32.mrb[0].mxu0
        %v1804 = vpop.f32.mrb[0].mxu0
        %v1805 = vadd.f32 0.0, %v1804
        %v1806 = vpop.f32.mrb[0].mxu0
        %1807 = vmatprep.mubr.bf16.mxu0 0
        %1808 = vmatmul.mubr.bf16.gmra.mrb[0].mxu0 %v1698
        %v1809 = vpop.f32.mrb[0].mxu0
        %v1810 = vadd.f32 0.0, %v1809
        %v1811 = vpop.f32.mrb[0].mxu0
        %v1812 = vpop.f32.mrb[0].mxu0
        %v1813 = vadd.f32 0.0, %v1812
        %v1814 = vpop.f32.mrb[0].mxu0
        %1815 = vmatprep.mubr.bf16.mxu0 0
        %1816 = vmatmul.mubr.bf16.gmra.mrb[0].mxu0 %v1701
        %v1817 = vpop.f32.mrb[0].mxu0
        %v1818 = vadd.f32 0.0, %v1817
        %v1819 = vpop.f32.mrb[0].mxu0
        %v1820 = vpop.f32.mrb[0].mxu0
        %v1821 = vadd.f32 0.0, %v1820
        %v1822 = vpop.f32.mrb[0].mxu0
        %1823 = vdwg.mxu0
        %v1825 = vsel %vm1388, %v1013, 0
        %v1828 = vsel %vm1388, %v1015, 0
        %v1831 = vsel %vm1388, %v1017, 0
        %v1834 = vsel %vm1388, %v1019, 0
        %v1837 = vsel %vm1388, %v1021, 0
        %v1840 = vsel %vm1388, %v1023, 0
        %v1843 = vsel %vm1388, %v1025, 0
        %v1846 = vsel %vm1388, %v1027, 0
        %v1849 = vsel %vm1388, %v1133, 0
        %v1852 = vsel %vm1388, %v1135, 0
        %v1855 = vsel %vm1388, %v1137, 0
        %v1858 = vsel %vm1388, %v1139, 0
        %v1861 = vsel %vm1388, %v1141, 0
        %v1864 = vsel %vm1388, %v1143, 0
        %v1867 = vsel %vm1388, %v1145, 0
        %v1870 = vsel %vm1388, %v1147, 0
        %1872 = vmatprep.subr.bf16.mxu0 0
        %1873 = vmatpush1.bf16.xpose.msra.mxu0 %v1849
        %1874 = vmatprep.subr.bf16.mxu0 0
        %1875 = vmatpush1.bf16.xpose.msra.mxu0 %v1852
        %1876 = vmatprep.subr.bf16.mxu0 0
        %1877 = vmatpush1.bf16.xpose.msra.mxu0 %v1855
        %1878 = vmatprep.subr.bf16.mxu0 0
        %1879 = vmatpush1.bf16.xpose.msra.mxu0 %v1858
        %1880 = vmatprep.subr.bf16.mxu0 0
        %1881 = vmatpush1.bf16.xpose.msra.mxu0 %v1861
        %1882 = vmatprep.subr.bf16.mxu0 0
        %1883 = vmatpush1.bf16.xpose.msra.mxu0 %v1864
        %1884 = vmatprep.subr.bf16.mxu0 0
        %1885 = vmatpush1.bf16.xpose.msra.mxu0 %v1867
        %1886 = vmatprep.subr.bf16.mxu0 0
        %1887 = vmatpush1.bf16.xpose.msra.mxu0 %v1870
        %1888 = vmatprep.subr.bf16.mxu0 0
        %1889 = vmatpush1.bf16.xpose.msra.mxu0 0
        %1890 = vmatprep.subr.bf16.mxu0 0
        %1891 = vmatpush1.bf16.xpose.msra.mxu0 0
        %1892 = vmatprep.subr.bf16.mxu0 0
        %1893 = vmatpush1.bf16.xpose.msra.mxu0 0
        %1894 = vmatprep.subr.bf16.mxu0 0
        %1895 = vmatpush1.bf16.xpose.msra.mxu0 0
        %1896 = vmatprep.subr.bf16.mxu0 0
        %1897 = vmatpush1.bf16.xpose.msra.mxu0 0
        %1898 = vmatprep.subr.bf16.mxu0 0
        %1899 = vmatpush1.bf16.xpose.msra.mxu0 0
        %1900 = vmatprep.subr.bf16.mxu0 0
        %1901 = vmatpush1.bf16.xpose.msra.mxu0 0
        %1902 = vmatprep.subr.bf16.mxu0 0
        %1903 = vmatpush1.bf16.xpose.msra.mxu0 0
        %1904 = vmatprep.mubr.bf16.mxu0 0
        %1905 = vmatmul.mubr.bf16.gmra.mrb[0].mxu0 %v1825
        %v1906 = vpop.f32.mrb[0].mxu0
        %v1907 = vadd.f32 0.0, %v1906
        %v1908 = vpop.f32.mrb[0].mxu0
        %v1909 = vpop.f32.mrb[0].mxu0
        %v1910 = vadd.f32 0.0, %v1909
        %v1911 = vpop.f32.mrb[0].mxu0
        %1912 = vmatprep.mubr.bf16.mxu0 0
        %1913 = vmatmul.mubr.bf16.gmra.mrb[0].mxu0 %v1828
        %v1914 = vpop.f32.mrb[0].mxu0
        %v1915 = vadd.f32 0.0, %v1914
        %v1916 = vpop.f32.mrb[0].mxu0
        %v1917 = vpop.f32.mrb[0].mxu0
        %v1918 = vadd.f32 0.0, %v1917
        %v1919 = vpop.f32.mrb[0].mxu0
        %1920 = vmatprep.mubr.bf16.mxu0 0
        %1921 = vmatmul.mubr.bf16.gmra.mrb[0].mxu0 %v1831
        %v1922 = vpop.f32.mrb[0].mxu0
        %v1923 = vadd.f32 0.0, %v1922
        %v1924 = vpop.f32.mrb[0].mxu0
        %v1925 = vpop.f32.mrb[0].mxu0
        %v1926 = vadd.f32 0.0, %v1925
        %v1927 = vpop.f32.mrb[0].mxu0
        %1928 = vmatprep.mubr.bf16.mxu0 0
        %1929 = vmatmul.mubr.bf16.gmra.mrb[0].mxu0 %v1834
        %v1930 = vpop.f32.mrb[0].mxu0
        %v1931 = vadd.f32 0.0, %v1930
        %v1932 = vpop.f32.mrb[0].mxu0
        %v1933 = vpop.f32.mrb[0].mxu0
        %v1934 = vadd.f32 0.0, %v1933
        %v1935 = vpop.f32.mrb[0].mxu0
        %1936 = vmatprep.mubr.bf16.mxu0 0
        %1937 = vmatmul.mubr.bf16.gmra.mrb[0].mxu0 %v1837
        %v1938 = vpop.f32.mrb[0].mxu0
        %v1939 = vadd.f32 0.0, %v1938
        %v1940 = vpop.f32.mrb[0].mxu0
        %v1941 = vpop.f32.mrb[0].mxu0
        %v1942 = vadd.f32 0.0, %v1941
        %v1943 = vpop.f32.mrb[0].mxu0
        %1944 = vmatprep.mubr.bf16.mxu0 0
        %1945 = vmatmul.mubr.bf16.gmra.mrb[0].mxu0 %v1840
        %v1946 = vpop.f32.mrb[0].mxu0
        %v1947 = vadd.f32 0.0, %v1946
        %v1948 = vpop.f32.mrb[0].mxu0
        %v1949 = vpop.f32.mrb[0].mxu0
        %v1950 = vadd.f32 0.0, %v1949
        %v1951 = vpop.f32.mrb[0].mxu0
        %1952 = vmatprep.mubr.bf16.mxu0 0
        %1953 = vmatmul.mubr.bf16.gmra.mrb[0].mxu0 %v1843
        %v1954 = vpop.f32.mrb[0].mxu0
        %v1955 = vadd.f32 0.0, %v1954
        %v1956 = vpop.f32.mrb[0].mxu0
        %v1957 = vpop.f32.mrb[0].mxu0
        %v1958 = vadd.f32 0.0, %v1957
        %v1959 = vpop.f32.mrb[0].mxu0
        %1960 = vmatprep.mubr.bf16.mxu0 0
        %1961 = vmatmul.mubr.bf16.gmra.mrb[0].mxu0 %v1846
        %v1962 = vpop.f32.mrb[0].mxu0
        %v1963 = vadd.f32 0.0, %v1962
        %v1964 = vpop.f32.mrb[0].mxu0
        %v1965 = vpop.f32.mrb[0].mxu0
        %v1966 = vadd.f32 0.0, %v1965
        %v1967 = vpop.f32.mrb[0].mxu0
        %1968 = vdwg.mxu0
        %v1970 = vsel %vm1388, %v1029, 0
        %v1973 = vsel %vm1388, %v1031, 0
        %v1976 = vsel %vm1388, %v1033, 0
        %v1979 = vsel %vm1388, %v1035, 0
        %v1982 = vsel %vm1388, %v1037, 0
        %v1985 = vsel %vm1388, %v1039, 0
        %v1988 = vsel %vm1388, %v1041, 0
        %v1991 = vsel %vm1388, %v1043, 0
        %v1994 = vsel %vm1388, %v1149, 0
        %v1997 = vsel %vm1388, %v1151, 0
        %v2000 = vsel %vm1388, %v1153, 0
        %v2003 = vsel %vm1388, %v1155, 0
        %v2006 = vsel %vm1388, %v1157, 0
        %v2009 = vsel %vm1388, %v1159, 0
        %v2012 = vsel %vm1388, %v1161, 0
        %v2015 = vsel %vm1388, %v1163, 0
        %2017 = vmatprep.subr.bf16.mxu0 0
        %2018 = vmatpush1.bf16.xpose.msra.mxu0 %v1994
        %2019 = vmatprep.subr.bf16.mxu0 0
        %2020 = vmatpush1.bf16.xpose.msra.mxu0 %v1997
        %2021 = vmatprep.subr.bf16.mxu0 0
        %2022 = vmatpush1.bf16.xpose.msra.mxu0 %v2000
        %2023 = vmatprep.subr.bf16.mxu0 0
        %2024 = vmatpush1.bf16.xpose.msra.mxu0 %v2003
        %2025 = vmatprep.subr.bf16.mxu0 0
        %2026 = vmatpush1.bf16.xpose.msra.mxu0 %v2006
        %2027 = vmatprep.subr.bf16.mxu0 0
        %2028 = vmatpush1.bf16.xpose.msra.mxu0 %v2009
        %2029 = vmatprep.subr.bf16.mxu0 0
        %2030 = vmatpush1.bf16.xpose.msra.mxu0 %v2012
        %2031 = vmatprep.subr.bf16.mxu0 0
        %2032 = vmatpush1.bf16.xpose.msra.mxu0 %v2015
        %2033 = vmatprep.subr.bf16.mxu0 0
        %2034 = vmatpush1.bf16.xpose.msra.mxu0 0
        %2035 = vmatprep.subr.bf16.mxu0 0
        %2036 = vmatpush1.bf16.xpose.msra.mxu0 0
        %2037 = vmatprep.subr.bf16.mxu0 0
        %2038 = vmatpush1.bf16.xpose.msra.mxu0 0
        %2039 = vmatprep.subr.bf16.mxu0 0
        %2040 = vmatpush1.bf16.xpose.msra.mxu0 0
        %2041 = vmatprep.subr.bf16.mxu0 0
        %2042 = vmatpush1.bf16.xpose.msra.mxu0 0
        %2043 = vmatprep.subr.bf16.mxu0 0
        %2044 = vmatpush1.bf16.xpose.msra.mxu0 0
        %2045 = vmatprep.subr.bf16.mxu0 0
        %2046 = vmatpush1.bf16.xpose.msra.mxu0 0
        %2047 = vmatprep.subr.bf16.mxu0 0
        %2048 = vmatpush1.bf16.xpose.msra.mxu0 0
        %2049 = vmatprep.mubr.bf16.mxu0 0
        %2050 = vmatmul.mubr.bf16.gmra.mrb[0].mxu0 %v1970
        %v2051 = vpop.f32.mrb[0].mxu0
        %v2052 = vadd.f32 0.0, %v2051
        %v2053 = vpop.f32.mrb[0].mxu0
        %v2054 = vpop.f32.mrb[0].mxu0
        %v2055 = vadd.f32 0.0, %v2054
        %v2056 = vpop.f32.mrb[0].mxu0
        %2057 = vmatprep.mubr.bf16.mxu0 0
        %2058 = vmatmul.mubr.bf16.gmra.mrb[0].mxu0 %v1973
        %v2059 = vpop.f32.mrb[0].mxu0
        %v2060 = vadd.f32 0.0, %v2059
        %v2061 = vpop.f32.mrb[0].mxu0
        %v2062 = vpop.f32.mrb[0].mxu0
        %v2063 = vadd.f32 0.0, %v2062
        %v2064 = vpop.f32.mrb[0].mxu0
        %2065 = vmatprep.mubr.bf16.mxu0 0
        %2066 = vmatmul.mubr.bf16.gmra.mrb[0].mxu0 %v1976
        %v2067 = vpop.f32.mrb[0].mxu0
        %v2068 = vadd.f32 0.0, %v2067
        %v2069 = vpop.f32.mrb[0].mxu0
        %v2070 = vpop.f32.mrb[0].mxu0
        %v2071 = vadd.f32 0.0, %v2070
        %v2072 = vpop.f32.mrb[0].mxu0
        %2073 = vmatprep.mubr.bf16.mxu0 0
        %2074 = vmatmul.mubr.bf16.gmra.mrb[0].mxu0 %v1979
        %v2075 = vpop.f32.mrb[0].mxu0
        %v2076 = vadd.f32 0.0, %v2075
        %v2077 = vpop.f32.mrb[0].mxu0
        %v2078 = vpop.f32.mrb[0].mxu0
        %v2079 = vadd.f32 0.0, %v2078
        %v2080 = vpop.f32.mrb[0].mxu0
        %2081 = vmatprep.mubr.bf16.mxu0 0
        %2082 = vmatmul.mubr.bf16.gmra.mrb[0].mxu0 %v1982
        %v2083 = vpop.f32.mrb[0].mxu0
        %v2084 = vadd.f32 0.0, %v2083
        %v2085 = vpop.f32.mrb[0].mxu0
        %v2086 = vpop.f32.mrb[0].mxu0
        %v2087 = vadd.f32 0.0, %v2086
        %v2088 = vpop.f32.mrb[0].mxu0
        %2089 = vmatprep.mubr.bf16.mxu0 0
        %2090 = vmatmul.mubr.bf16.gmra.mrb[0].mxu0 %v1985
        %v2091 = vpop.f32.mrb[0].mxu0
        %v2092 = vadd.f32 0.0, %v2091
        %v2093 = vpop.f32.mrb[0].mxu0
        %v2094 = vpop.f32.mrb[0].mxu0
        %v2095 = vadd.f32 0.0, %v2094
        %v2096 = vpop.f32.mrb[0].mxu0
        %2097 = vmatprep.mubr.bf16.mxu0 0
        %2098 = vmatmul.mubr.bf16.gmra.mrb[0].mxu0 %v1988
        %v2099 = vpop.f32.mrb[0].mxu0
        %v2100 = vadd.f32 0.0, %v2099
        %v2101 = vpop.f32.mrb[0].mxu0
        %v2102 = vpop.f32.mrb[0].mxu0
        %v2103 = vadd.f32 0.0, %v2102
        %v2104 = vpop.f32.mrb[0].mxu0
        %2105 = vmatprep.mubr.bf16.mxu0 0
        %2106 = vmatmul.mubr.bf16.gmra.mrb[0].mxu0 %v1991
        %v2107 = vpop.f32.mrb[0].mxu0
        %v2108 = vadd.f32 0.0, %v2107
        %v2109 = vpop.f32.mrb[0].mxu0
        %v2110 = vpop.f32.mrb[0].mxu0
        %v2111 = vadd.f32 0.0, %v2110
        %v2112 = vpop.f32.mrb[0].mxu0
        %2113 = vdwg.mxu0
        %v2115 = vsel %vm1388, %v1045, 0
        %v2118 = vsel %vm1388, %v1047, 0
        %v2121 = vsel %vm1388, %v1049, 0
        %v2124 = vsel %vm1388, %v1051, 0
        %v2127 = vsel %vm1388, %v1053, 0
        %v2130 = vsel %vm1388, %v1055, 0
        %v2133 = vsel %vm1388, %v1057, 0
        %v2136 = vsel %vm1388, %v1059, 0
        %v2139 = vsel %vm1388, %v1165, 0
        %v2142 = vsel %vm1388, %v1167, 0
        %v2145 = vsel %vm1388, %v1169, 0
        %v2148 = vsel %vm1388, %v1171, 0
        %v2151 = vsel %vm1388, %v1173, 0
        %v2154 = vsel %vm1388, %v1175, 0
        %v2157 = vsel %vm1388, %v1177, 0
        %v2160 = vsel %vm1388, %v1179, 0
        %2162 = vmatprep.subr.bf16.mxu0 0
        %2163 = vmatpush1.bf16.xpose.msra.mxu0 %v2139
        %2164 = vmatprep.subr.bf16.mxu0 0
        %2165 = vmatpush1.bf16.xpose.msra.mxu0 %v2142
        %2166 = vmatprep.subr.bf16.mxu0 0
        %2167 = vmatpush1.bf16.xpose.msra.mxu0 %v2145
        %2168 = vmatprep.subr.bf16.mxu0 0
        %2169 = vmatpush1.bf16.xpose.msra.mxu0 %v2148
        %2170 = vmatprep.subr.bf16.mxu0 0
        %2171 = vmatpush1.bf16.xpose.msra.mxu0 %v2151
        %2172 = vmatprep.subr.bf16.mxu0 0
        %2173 = vmatpush1.bf16.xpose.msra.mxu0 %v2154
        %2174 = vmatprep.subr.bf16.mxu0 0
        %2175 = vmatpush1.bf16.xpose.msra.mxu0 %v2157
        %2176 = vmatprep.subr.bf16.mxu0 0
        %2177 = vmatpush1.bf16.xpose.msra.mxu0 %v2160
        %2178 = vmatprep.subr.bf16.mxu0 0
        %2179 = vmatpush1.bf16.xpose.msra.mxu0 0
        %2180 = vmatprep.subr.bf16.mxu0 0
        %2181 = vmatpush1.bf16.xpose.msra.mxu0 0
        %2182 = vmatprep.subr.bf16.mxu0 0
        %2183 = vmatpush1.bf16.xpose.msra.mxu0 0
        %2184 = vmatprep.subr.bf16.mxu0 0
        %2185 = vmatpush1.bf16.xpose.msra.mxu0 0
        %2186 = vmatprep.subr.bf16.mxu0 0
        %2187 = vmatpush1.bf16.xpose.msra.mxu0 0
        %2188 = vmatprep.subr.bf16.mxu0 0
        %2189 = vmatpush1.bf16.xpose.msra.mxu0 0
        %2190 = vmatprep.subr.bf16.mxu0 0
        %2191 = vmatpush1.bf16.xpose.msra.mxu0 0
        %2192 = vmatprep.subr.bf16.mxu0 0
        %2193 = vmatpush1.bf16.xpose.msra.mxu0 0
        %2194 = vmatprep.mubr.bf16.mxu0 0
        %2195 = vmatmul.mubr.bf16.gmra.mrb[0].mxu0 %v2115
        %v2196 = vpop.f32.mrb[0].mxu0
        %v2197 = vadd.f32 0.0, %v2196
        %v2198 = vpop.f32.mrb[0].mxu0
        %v2199 = vpop.f32.mrb[0].mxu0
        %v2200 = vadd.f32 0.0, %v2199
        %v2201 = vpop.f32.mrb[0].mxu0
        %2202 = vmatprep.mubr.bf16.mxu0 0
        %2203 = vmatmul.mubr.bf16.gmra.mrb[0].mxu0 %v2118
        %v2204 = vpop.f32.mrb[0].mxu0
        %v2205 = vadd.f32 0.0, %v2204
        %v2206 = vpop.f32.mrb[0].mxu0
        %v2207 = vpop.f32.mrb[0].mxu0
        %v2208 = vadd.f32 0.0, %v2207
        %v2209 = vpop.f32.mrb[0].mxu0
        %2210 = vmatprep.mubr.bf16.mxu0 0
        %2211 = vmatmul.mubr.bf16.gmra.mrb[0].mxu0 %v2121
        %v2212 = vpop.f32.mrb[0].mxu0
        %v2213 = vadd.f32 0.0, %v2212
        %v2214 = vpop.f32.mrb[0].mxu0
        %v2215 = vpop.f32.mrb[0].mxu0
        %v2216 = vadd.f32 0.0, %v2215
        %v2217 = vpop.f32.mrb[0].mxu0
        %2218 = vmatprep.mubr.bf16.mxu0 0
        %2219 = vmatmul.mubr.bf16.gmra.mrb[0].mxu0 %v2124
        %v2220 = vpop.f32.mrb[0].mxu0
        %v2221 = vadd.f32 0.0, %v2220
        %v2222 = vpop.f32.mrb[0].mxu0
        %v2223 = vpop.f32.mrb[0].mxu0
        %v2224 = vadd.f32 0.0, %v2223
        %v2225 = vpop.f32.mrb[0].mxu0
        %2226 = vmatprep.mubr.bf16.mxu0 0
        %2227 = vmatmul.mubr.bf16.gmra.mrb[0].mxu0 %v2127
        %v2228 = vpop.f32.mrb[0].mxu0
        %v2229 = vadd.f32 0.0, %v2228
        %v2230 = vpop.f32.mrb[0].mxu0
        %v2231 = vpop.f32.mrb[0].mxu0
        %v2232 = vadd.f32 0.0, %v2231
        %v2233 = vpop.f32.mrb[0].mxu0
        %2234 = vmatprep.mubr.bf16.mxu0 0
        %2235 = vmatmul.mubr.bf16.gmra.mrb[0].mxu0 %v2130
        %v2236 = vpop.f32.mrb[0].mxu0
        %v2237 = vadd.f32 0.0, %v2236
        %v2238 = vpop.f32.mrb[0].mxu0
        %v2239 = vpop.f32.mrb[0].mxu0
        %v2240 = vadd.f32 0.0, %v2239
        %v2241 = vpop.f32.mrb[0].mxu0
        %2242 = vmatprep.mubr.bf16.mxu0 0
        %2243 = vmatmul.mubr.bf16.gmra.mrb[0].mxu0 %v2133
        %v2244 = vpop.f32.mrb[0].mxu0
        %v2245 = vadd.f32 0.0, %v2244
        %v2246 = vpop.f32.mrb[0].mxu0
        %v2247 = vpop.f32.mrb[0].mxu0
        %v2248 = vadd.f32 0.0, %v2247
        %v2249 = vpop.f32.mrb[0].mxu0
        %2250 = vmatprep.mubr.bf16.mxu0 0
        %2251 = vmatmul.mubr.bf16.gmra.mrb[0].mxu0 %v2136
        %v2252 = vpop.f32.mrb[0].mxu0
        %v2253 = vadd.f32 0.0, %v2252
        %v2254 = vpop.f32.mrb[0].mxu0
        %v2255 = vpop.f32.mrb[0].mxu0
        %v2256 = vadd.f32 0.0, %v2255
        %v2257 = vpop.f32.mrb[0].mxu0
        %2258 = vdwg.mxu0
        %v2260 = vsel %vm1388, %v1061, 0
        %v2263 = vsel %vm1388, %v1063, 0
        %v2266 = vsel %vm1388, %v1065, 0
        %v2269 = vsel %vm1388, %v1067, 0
        %v2272 = vsel %vm1388, %v1069, 0
        %v2275 = vsel %vm1388, %v1071, 0
        %v2278 = vsel %vm1388, %v1073, 0
        %v2281 = vsel %vm1388, %v1075, 0
        %v2284 = vsel %vm1388, %v1181, 0
        %v2287 = vsel %vm1388, %v1183, 0
        %v2290 = vsel %vm1388, %v1185, 0
        %v2293 = vsel %vm1388, %v1187, 0
        %v2296 = vsel %vm1388, %v1189, 0
        %v2299 = vsel %vm1388, %v1191, 0
        %v2302 = vsel %vm1388, %v1193, 0
        %v2305 = vsel %vm1388, %v1195, 0
        %2307 = vmatprep.subr.bf16.mxu0 0
        %2308 = vmatpush1.bf16.xpose.msra.mxu0 %v2284
        %2309 = vmatprep.subr.bf16.mxu0 0
        %2310 = vmatpush1.bf16.xpose.msra.mxu0 %v2287
        %2311 = vmatprep.subr.bf16.mxu0 0
        %2312 = vmatpush1.bf16.xpose.msra.mxu0 %v2290
        %2313 = vmatprep.subr.bf16.mxu0 0
        %2314 = vmatpush1.bf16.xpose.msra.mxu0 %v2293
        %2315 = vmatprep.subr.bf16.mxu0 0
        %2316 = vmatpush1.bf16.xpose.msra.mxu0 %v2296
        %2317 = vmatprep.subr.bf16.mxu0 0
        %2318 = vmatpush1.bf16.xpose.msra.mxu0 %v2299
        %2319 = vmatprep.subr.bf16.mxu0 0
        %2320 = vmatpush1.bf16.xpose.msra.mxu0 %v2302
        %2321 = vmatprep.subr.bf16.mxu0 0
        %2322 = vmatpush1.bf16.xpose.msra.mxu0 %v2305
        %2323 = vmatprep.subr.bf16.mxu0 0
        %2324 = vmatpush1.bf16.xpose.msra.mxu0 0
        %2325 = vmatprep.subr.bf16.mxu0 0
        %2326 = vmatpush1.bf16.xpose.msra.mxu0 0
        %2327 = vmatprep.subr.bf16.mxu0 0
        %2328 = vmatpush1.bf16.xpose.msra.mxu0 0
        %2329 = vmatprep.subr.bf16.mxu0 0
        %2330 = vmatpush1.bf16.xpose.msra.mxu0 0
        %2331 = vmatprep.subr.bf16.mxu0 0
        %2332 = vmatpush1.bf16.xpose.msra.mxu0 0
        %2333 = vmatprep.subr.bf16.mxu0 0
        %2334 = vmatpush1.bf16.xpose.msra.mxu0 0
        %2335 = vmatprep.subr.bf16.mxu0 0
        %2336 = vmatpush1.bf16.xpose.msra.mxu0 0
        %2337 = vmatprep.subr.bf16.mxu0 0
        %2338 = vmatpush1.bf16.xpose.msra.mxu0 0
        %2339 = vmatprep.mubr.bf16.mxu0 0
        %2340 = vmatmul.mubr.bf16.gmra.mrb[0].mxu0 %v2260
        %v2341 = vpop.f32.mrb[0].mxu0
        %v2342 = vadd.f32 0.0, %v2341
        %v2343 = vpop.f32.mrb[0].mxu0
        %v2344 = vpop.f32.mrb[0].mxu0
        %v2345 = vadd.f32 0.0, %v2344
        %v2346 = vpop.f32.mrb[0].mxu0
        %2347 = vmatprep.mubr.bf16.mxu0 0
        %2348 = vmatmul.mubr.bf16.gmra.mrb[0].mxu0 %v2263
        %v2349 = vpop.f32.mrb[0].mxu0
        %v2350 = vadd.f32 0.0, %v2349
        %v2351 = vpop.f32.mrb[0].mxu0
        %v2352 = vpop.f32.mrb[0].mxu0
        %v2353 = vadd.f32 0.0, %v2352
        %v2354 = vpop.f32.mrb[0].mxu0
        %2355 = vmatprep.mubr.bf16.mxu0 0
        %2356 = vmatmul.mubr.bf16.gmra.mrb[0].mxu0 %v2266
        %v2357 = vpop.f32.mrb[0].mxu0
        %v2358 = vadd.f32 0.0, %v2357
        %v2359 = vpop.f32.mrb[0].mxu0
        %v2360 = vpop.f32.mrb[0].mxu0
        %v2361 = vadd.f32 0.0, %v2360
        %v2362 = vpop.f32.mrb[0].mxu0
        %2363 = vmatprep.mubr.bf16.mxu0 0
        %2364 = vmatmul.mubr.bf16.gmra.mrb[0].mxu0 %v2269
        %v2365 = vpop.f32.mrb[0].mxu0
        %v2366 = vadd.f32 0.0, %v2365
        %v2367 = vpop.f32.mrb[0].mxu0
        %v2368 = vpop.f32.mrb[0].mxu0
        %v2369 = vadd.f32 0.0, %v2368
        %v2370 = vpop.f32.mrb[0].mxu0
        %2371 = vmatprep.mubr.bf16.mxu0 0
        %2372 = vmatmul.mubr.bf16.gmra.mrb[0].mxu0 %v2272
        %v2373 = vpop.f32.mrb[0].mxu0
        %v2374 = vadd.f32 0.0, %v2373
        %v2375 = vpop.f32.mrb[0].mxu0
        %v2376 = vpop.f32.mrb[0].mxu0
        %v2377 = vadd.f32 0.0, %v2376
        %v2378 = vpop.f32.mrb[0].mxu0
        %2379 = vmatprep.mubr.bf16.mxu0 0
        %2380 = vmatmul.mubr.bf16.gmra.mrb[0].mxu0 %v2275
        %v2381 = vpop.f32.mrb[0].mxu0
        %v2382 = vadd.f32 0.0, %v2381
        %v2383 = vpop.f32.mrb[0].mxu0
        %v2384 = vpop.f32.mrb[0].mxu0
        %v2385 = vadd.f32 0.0, %v2384
        %v2386 = vpop.f32.mrb[0].mxu0
        %2387 = vmatprep.mubr.bf16.mxu0 0
        %2388 = vmatmul.mubr.bf16.gmra.mrb[0].mxu0 %v2278
        %v2389 = vpop.f32.mrb[0].mxu0
        %v2390 = vadd.f32 0.0, %v2389
        %v2391 = vpop.f32.mrb[0].mxu0
        %v2392 = vpop.f32.mrb[0].mxu0
        %v2393 = vadd.f32 0.0, %v2392
        %v2394 = vpop.f32.mrb[0].mxu0
        %2395 = vmatprep.mubr.bf16.mxu0 0
        %2396 = vmatmul.mubr.bf16.gmra.mrb[0].mxu0 %v2281
        %v2397 = vpop.f32.mrb[0].mxu0
        %v2398 = vadd.f32 0.0, %v2397
        %v2399 = vpop.f32.mrb[0].mxu0
        %v2400 = vpop.f32.mrb[0].mxu0
        %v2401 = vadd.f32 0.0, %v2400
        %v2402 = vpop.f32.mrb[0].mxu0
        %2403 = vdwg.mxu0
        %v2405 = vsel %vm1388, %v1077, 0
        %v2408 = vsel %vm1388, %v1079, 0
        %v2411 = vsel %vm1388, %v1081, 0
        %v2414 = vsel %vm1388, %v1083, 0
        %v2417 = vsel %vm1388, %v1085, 0
        %v2420 = vsel %vm1388, %v1087, 0
        %v2423 = vsel %vm1388, %v1089, 0
        %v2426 = vsel %vm1388, %v1091, 0
        %v2429 = vsel %vm1388, %v1197, 0
        %v2432 = vsel %vm1388, %v1199, 0
        %v2435 = vsel %vm1388, %v1201, 0
        %v2438 = vsel %vm1388, %v1203, 0
        %v2441 = vsel %vm1388, %v1205, 0
        %v2444 = vsel %vm1388, %v1207, 0
        %v2447 = vsel %vm1388, %v1209, 0
        %v2450 = vsel %vm1388, %v1211, 0
        %2452 = vmatprep.subr.bf16.mxu0 0
        %2453 = vmatpush1.bf16.xpose.msra.mxu0 %v2429
        %2454 = vmatprep.subr.bf16.mxu0 0
        %2455 = vmatpush1.bf16.xpose.msra.mxu0 %v2432
        %2456 = vmatprep.subr.bf16.mxu0 0
        %2457 = vmatpush1.bf16.xpose.msra.mxu0 %v2435
        %2458 = vmatprep.subr.bf16.mxu0 0
        %2459 = vmatpush1.bf16.xpose.msra.mxu0 %v2438
        %2460 = vmatprep.subr.bf16.mxu0 0
        %2461 = vmatpush1.bf16.xpose.msra.mxu0 %v2441
        %2462 = vmatprep.subr.bf16.mxu0 0
        %2463 = vmatpush1.bf16.xpose.msra.mxu0 %v2444
        %2464 = vmatprep.subr.bf16.mxu0 0
        %2465 = vmatpush1.bf16.xpose.msra.mxu0 %v2447
        %2466 = vmatprep.subr.bf16.mxu0 0
        %2467 = vmatpush1.bf16.xpose.msra.mxu0 %v2450
        %2468 = vmatprep.subr.bf16.mxu0 0
        %2469 = vmatpush1.bf16.xpose.msra.mxu0 0
        %2470 = vmatprep.subr.bf16.mxu0 0
        %2471 = vmatpush1.bf16.xpose.msra.mxu0 0
        %2472 = vmatprep.subr.bf16.mxu0 0
        %2473 = vmatpush1.bf16.xpose.msra.mxu0 0
        %2474 = vmatprep.subr.bf16.mxu0 0
        %2475 = vmatpush1.bf16.xpose.msra.mxu0 0
        %2476 = vmatprep.subr.bf16.mxu0 0
        %2477 = vmatpush1.bf16.xpose.msra.mxu0 0
        %2478 = vmatprep.subr.bf16.mxu0 0
        %2479 = vmatpush1.bf16.xpose.msra.mxu0 0
        %2480 = vmatprep.subr.bf16.mxu0 0
        %2481 = vmatpush1.bf16.xpose.msra.mxu0 0
        %2482 = vmatprep.subr.bf16.mxu0 0
        %2483 = vmatpush1.bf16.xpose.msra.mxu0 0
        %2484 = vmatprep.mubr.bf16.mxu0 0
        %2485 = vmatmul.mubr.bf16.gmra.mrb[0].mxu0 %v2405
        %v2486 = vpop.f32.mrb[0].mxu0
        %v2487 = vadd.f32 0.0, %v2486
        %v2488 = vpop.f32.mrb[0].mxu0
        %v2489 = vpop.f32.mrb[0].mxu0
        %v2490 = vadd.f32 0.0, %v2489
        %v2491 = vpop.f32.mrb[0].mxu0
        %2492 = vmatprep.mubr.bf16.mxu0 0
        %2493 = vmatmul.mubr.bf16.gmra.mrb[0].mxu0 %v2408
        %v2494 = vpop.f32.mrb[0].mxu0
        %v2495 = vadd.f32 0.0, %v2494
        %v2496 = vpop.f32.mrb[0].mxu0
        %v2497 = vpop.f32.mrb[0].mxu0
        %v2498 = vadd.f32 0.0, %v2497
        %v2499 = vpop.f32.mrb[0].mxu0
        %2500 = vmatprep.mubr.bf16.mxu0 0
        %2501 = vmatmul.mubr.bf16.gmra.mrb[0].mxu0 %v2411
        %v2502 = vpop.f32.mrb[0].mxu0
        %v2503 = vadd.f32 0.0, %v2502
        %v2504 = vpop.f32.mrb[0].mxu0
        %v2505 = vpop.f32.mrb[0].mxu0
        %v2506 = vadd.f32 0.0, %v2505
        %v2507 = vpop.f32.mrb[0].mxu0
        %2508 = vmatprep.mubr.bf16.mxu0 0
        %2509 = vmatmul.mubr.bf16.gmra.mrb[0].mxu0 %v2414
        %v2510 = vpop.f32.mrb[0].mxu0
        %v2511 = vadd.f32 0.0, %v2510
        %v2512 = vpop.f32.mrb[0].mxu0
        %v2513 = vpop.f32.mrb[0].mxu0
        %v2514 = vadd.f32 0.0, %v2513
        %v2515 = vpop.f32.mrb[0].mxu0
        %2516 = vmatprep.mubr.bf16.mxu0 0
        %2517 = vmatmul.mubr.bf16.gmra.mrb[0].mxu0 %v2417
        %v2518 = vpop.f32.mrb[0].mxu0
        %v2519 = vadd.f32 0.0, %v2518
        %v2520 = vpop.f32.mrb[0].mxu0
        %v2521 = vpop.f32.mrb[0].mxu0
        %v2522 = vadd.f32 0.0, %v2521
        %v2523 = vpop.f32.mrb[0].mxu0
        %2524 = vmatprep.mubr.bf16.mxu0 0
        %2525 = vmatmul.mubr.bf16.gmra.mrb[0].mxu0 %v2420
        %v2526 = vpop.f32.mrb[0].mxu0
        %v2527 = vadd.f32 0.0, %v2526
        %v2528 = vpop.f32.mrb[0].mxu0
        %v2529 = vpop.f32.mrb[0].mxu0
        %v2530 = vadd.f32 0.0, %v2529
        %v2531 = vpop.f32.mrb[0].mxu0
        %2532 = vmatprep.mubr.bf16.mxu0 0
        %2533 = vmatmul.mubr.bf16.gmra.mrb[0].mxu0 %v2423
        %v2534 = vpop.f32.mrb[0].mxu0
        %v2535 = vadd.f32 0.0, %v2534
        %v2536 = vpop.f32.mrb[0].mxu0
        %v2537 = vpop.f32.mrb[0].mxu0
        %v2538 = vadd.f32 0.0, %v2537
        %v2539 = vpop.f32.mrb[0].mxu0
        %2540 = vmatprep.mubr.bf16.mxu0 0
        %2541 = vmatmul.mubr.bf16.gmra.mrb[0].mxu0 %v2426
        %v2542 = vpop.f32.mrb[0].mxu0
        %v2543 = vadd.f32 0.0, %v2542
        %v2544 = vpop.f32.mrb[0].mxu0
        %v2545 = vpop.f32.mrb[0].mxu0
        %v2546 = vadd.f32 0.0, %v2545
        %v2547 = vpop.f32.mrb[0].mxu0
        %2548 = vdwg.mxu0
        %2549 = vmax.xlane.f32.xlu0 %v1472
        %v2550 = vpop.xlane.xlu0 %2549
        %2551 = vmax.xlane.f32.xlu0 %v1475
        %v2552 = vpop.xlane.xlu0 %2551
        %2553 = vmax.xlane.f32.xlu0 %v1480
        %v2554 = vpop.xlane.xlu0 %2553
        %2555 = vmax.xlane.f32.xlu0 %v1483
        %v2556 = vpop.xlane.xlu0 %2555
        %2557 = vmax.xlane.f32.xlu0 %v1488
        %v2558 = vpop.xlane.xlu0 %2557
        %2559 = vmax.xlane.f32.xlu0 %v1491
        %v2560 = vpop.xlane.xlu0 %2559
        %2561 = vmax.xlane.f32.xlu0 %v1496
        %v2562 = vpop.xlane.xlu0 %2561
        %2563 = vmax.xlane.f32.xlu0 %v1499
        %v2564 = vpop.xlane.xlu0 %2563
        %2565 = vmax.xlane.f32.xlu0 %v1504
        %v2566 = vpop.xlane.xlu0 %2565
        %2567 = vmax.xlane.f32.xlu0 %v1507
        %v2568 = vpop.xlane.xlu0 %2567
        %2569 = vmax.xlane.f32.xlu0 %v1512
        %v2570 = vpop.xlane.xlu0 %2569
        %2571 = vmax.xlane.f32.xlu0 %v1515
        %v2572 = vpop.xlane.xlu0 %2571
        %2573 = vmax.xlane.f32.xlu0 %v1520
        %v2574 = vpop.xlane.xlu0 %2573
        %2575 = vmax.xlane.f32.xlu0 %v1523
        %v2576 = vpop.xlane.xlu0 %2575
        %2577 = vmax.xlane.f32.xlu0 %v1528
        %v2578 = vpop.xlane.xlu0 %2577
        %2579 = vmax.xlane.f32.xlu0 %v1531
        %v2580 = vpop.xlane.xlu0 %2579
        %2581 = vmax.xlane.f32.xlu0 %v1617
        %v2582 = vpop.xlane.xlu0 %2581
        %2583 = vmax.xlane.f32.xlu0 %v1620
        %v2584 = vpop.xlane.xlu0 %2583
        %2585 = vmax.xlane.f32.xlu0 %v1625
        %v2586 = vpop.xlane.xlu0 %2585
        %2587 = vmax.xlane.f32.xlu0 %v1628
        %v2588 = vpop.xlane.xlu0 %2587
        %2589 = vmax.xlane.f32.xlu0 %v1633
        %v2590 = vpop.xlane.xlu0 %2589
        %2591 = vmax.xlane.f32.xlu0 %v1636
        %v2592 = vpop.xlane.xlu0 %2591
        %2593 = vmax.xlane.f32.xlu0 %v1641
        %v2594 = vpop.xlane.xlu0 %2593
        %2595 = vmax.xlane.f32.xlu0 %v1644
        %v2596 = vpop.xlane.xlu0 %2595
        %2597 = vmax.xlane.f32.xlu0 %v1649
        %v2598 = vpop.xlane.xlu0 %2597
        %2599 = vmax.xlane.f32.xlu0 %v1652
        %v2600 = vpop.xlane.xlu0 %2599
        %2601 = vmax.xlane.f32.xlu0 %v1657
        %v2602 = vpop.xlane.xlu0 %2601
        %2603 = vmax.xlane.f32.xlu0 %v1660
        %v2604 = vpop.xlane.xlu0 %2603
        %2605 = vmax.xlane.f32.xlu0 %v1665
        %v2606 = vpop.xlane.xlu0 %2605
        %2607 = vmax.xlane.f32.xlu0 %v1668
        %v2608 = vpop.xlane.xlu0 %2607
        %2609 = vmax.xlane.f32.xlu0 %v1673
        %v2610 = vpop.xlane.xlu0 %2609
        %2611 = vmax.xlane.f32.xlu0 %v1676
        %v2612 = vpop.xlane.xlu0 %2611
        %2613 = vmax.xlane.f32.xlu0 %v1762
        %v2614 = vpop.xlane.xlu0 %2613
        %2615 = vmax.xlane.f32.xlu0 %v1765
        %v2616 = vpop.xlane.xlu0 %2615
        %2617 = vmax.xlane.f32.xlu0 %v1770
        %v2618 = vpop.xlane.xlu0 %2617
        %2619 = vmax.xlane.f32.xlu0 %v1773
        %v2620 = vpop.xlane.xlu0 %2619
        %2621 = vmax.xlane.f32.xlu0 %v1778
        %v2622 = vpop.xlane.xlu0 %2621
        %2623 = vmax.xlane.f32.xlu0 %v1781
        %v2624 = vpop.xlane.xlu0 %2623
        %2625 = vmax.xlane.f32.xlu0 %v1786
        %v2626 = vpop.xlane.xlu0 %2625
        %2627 = vmax.xlane.f32.xlu0 %v1789
        %v2628 = vpop.xlane.xlu0 %2627
        %2629 = vmax.xlane.f32.xlu0 %v1794
        %v2630 = vpop.xlane.xlu0 %2629
        %2631 = vmax.xlane.f32.xlu0 %v1797
        %v2632 = vpop.xlane.xlu0 %2631
        %2633 = vmax.xlane.f32.xlu0 %v1802
        %v2634 = vpop.xlane.xlu0 %2633
        %2635 = vmax.xlane.f32.xlu0 %v1805
        %v2636 = vpop.xlane.xlu0 %2635
        %2637 = vmax.xlane.f32.xlu0 %v1810
        %v2638 = vpop.xlane.xlu0 %2637
        %2639 = vmax.xlane.f32.xlu0 %v1813
        %v2640 = vpop.xlane.xlu0 %2639
        %2641 = vmax.xlane.f32.xlu0 %v1818
        %v2642 = vpop.xlane.xlu0 %2641
        %2643 = vmax.xlane.f32.xlu0 %v1821
        %v2644 = vpop.xlane.xlu0 %2643
        %2645 = vmax.xlane.f32.xlu0 %v1907
        %v2646 = vpop.xlane.xlu0 %2645
        %2647 = vmax.xlane.f32.xlu0 %v1910
        %v2648 = vpop.xlane.xlu0 %2647
        %2649 = vmax.xlane.f32.xlu0 %v1915
        %v2650 = vpop.xlane.xlu0 %2649
        %2651 = vmax.xlane.f32.xlu0 %v1918
        %v2652 = vpop.xlane.xlu0 %2651
        %2653 = vmax.xlane.f32.xlu0 %v1923
        %v2654 = vpop.xlane.xlu0 %2653
        %2655 = vmax.xlane.f32.xlu0 %v1926
        %v2656 = vpop.xlane.xlu0 %2655
        %2657 = vmax.xlane.f32.xlu0 %v1931
        %v2658 = vpop.xlane.xlu0 %2657
        %2659 = vmax.xlane.f32.xlu0 %v1934
        %v2660 = vpop.xlane.xlu0 %2659
        %2661 = vmax.xlane.f32.xlu0 %v1939
        %v2662 = vpop.xlane.xlu0 %2661
        %2663 = vmax.xlane.f32.xlu0 %v1942
        %v2664 = vpop.xlane.xlu0 %2663
        %2665 = vmax.xlane.f32.xlu0 %v1947
        %v2666 = vpop.xlane.xlu0 %2665
        %2667 = vmax.xlane.f32.xlu0 %v1950
        %v2668 = vpop.xlane.xlu0 %2667
        %2669 = vmax.xlane.f32.xlu0 %v1955
        %v2670 = vpop.xlane.xlu0 %2669
        %2671 = vmax.xlane.f32.xlu0 %v1958
        %v2672 = vpop.xlane.xlu0 %2671
        %2673 = vmax.xlane.f32.xlu0 %v1963
        %v2674 = vpop.xlane.xlu0 %2673
        %2675 = vmax.xlane.f32.xlu0 %v1966
        %v2676 = vpop.xlane.xlu0 %2675
        %2677 = vmax.xlane.f32.xlu0 %v2052
        %v2678 = vpop.xlane.xlu0 %2677
        %2679 = vmax.xlane.f32.xlu0 %v2055
        %v2680 = vpop.xlane.xlu0 %2679
        %2681 = vmax.xlane.f32.xlu0 %v2060
        %v2682 = vpop.xlane.xlu0 %2681
        %2683 = vmax.xlane.f32.xlu0 %v2063
        %v2684 = vpop.xlane.xlu0 %2683
        %2685 = vmax.xlane.f32.xlu0 %v2068
        %v2686 = vpop.xlane.xlu0 %2685
        %2687 = vmax.xlane.f32.xlu0 %v2071
        %v2688 = vpop.xlane.xlu0 %2687
        %2689 = vmax.xlane.f32.xlu0 %v2076
        %v2690 = vpop.xlane.xlu0 %2689
        %2691 = vmax.xlane.f32.xlu0 %v2079
        %v2692 = vpop.xlane.xlu0 %2691
        %2693 = vmax.xlane.f32.xlu0 %v2084
        %v2694 = vpop.xlane.xlu0 %2693
        %2695 = vmax.xlane.f32.xlu0 %v2087
        %v2696 = vpop.xlane.xlu0 %2695
        %2697 = vmax.xlane.f32.xlu0 %v2092
        %v2698 = vpop.xlane.xlu0 %2697
        %2699 = vmax.xlane.f32.xlu0 %v2095
        %v2700 = vpop.xlane.xlu0 %2699
        %2701 = vmax.xlane.f32.xlu0 %v2100
        %v2702 = vpop.xlane.xlu0 %2701
        %2703 = vmax.xlane.f32.xlu0 %v2103
        %v2704 = vpop.xlane.xlu0 %2703
        %2705 = vmax.xlane.f32.xlu0 %v2108
        %v2706 = vpop.xlane.xlu0 %2705
        %2707 = vmax.xlane.f32.xlu0 %v2111
        %v2708 = vpop.xlane.xlu0 %2707
        %2709 = vmax.xlane.f32.xlu0 %v2197
        %v2710 = vpop.xlane.xlu0 %2709
        %2711 = vmax.xlane.f32.xlu0 %v2200
        %v2712 = vpop.xlane.xlu0 %2711
        %2713 = vmax.xlane.f32.xlu0 %v2205
        %v2714 = vpop.xlane.xlu0 %2713
        %2715 = vmax.xlane.f32.xlu0 %v2208
        %v2716 = vpop.xlane.xlu0 %2715
        %2717 = vmax.xlane.f32.xlu0 %v2213
        %v2718 = vpop.xlane.xlu0 %2717
        %2719 = vmax.xlane.f32.xlu0 %v2216
        %v2720 = vpop.xlane.xlu0 %2719
        %2721 = vmax.xlane.f32.xlu0 %v2221
        %v2722 = vpop.xlane.xlu0 %2721
        %2723 = vmax.xlane.f32.xlu0 %v2224
        %v2724 = vpop.xlane.xlu0 %2723
        %2725 = vmax.xlane.f32.xlu0 %v2229
        %v2726 = vpop.xlane.xlu0 %2725
        %2727 = vmax.xlane.f32.xlu0 %v2232
        %v2728 = vpop.xlane.xlu0 %2727
        %2729 = vmax.xlane.f32.xlu0 %v2237
        %v2730 = vpop.xlane.xlu0 %2729
        %2731 = vmax.xlane.f32.xlu0 %v2240
        %v2732 = vpop.xlane.xlu0 %2731
        %2733 = vmax.xlane.f32.xlu0 %v2245
        %v2734 = vpop.xlane.xlu0 %2733
        %2735 = vmax.xlane.f32.xlu0 %v2248
        %v2736 = vpop.xlane.xlu0 %2735
        %2737 = vmax.xlane.f32.xlu0 %v2253
        %v2738 = vpop.xlane.xlu0 %2737
        %2739 = vmax.xlane.f32.xlu0 %v2256
        %v2740 = vpop.xlane.xlu0 %2739
        %2741 = vmax.xlane.f32.xlu0 %v2342
        %v2742 = vpop.xlane.xlu0 %2741
        %2743 = vmax.xlane.f32.xlu0 %v2345
        %v2744 = vpop.xlane.xlu0 %2743
        %2745 = vmax.xlane.f32.xlu0 %v2350
        %v2746 = vpop.xlane.xlu0 %2745
        %2747 = vmax.xlane.f32.xlu0 %v2353
        %v2748 = vpop.xlane.xlu0 %2747
        %2749 = vmax.xlane.f32.xlu0 %v2358
        %v2750 = vpop.xlane.xlu0 %2749
        %2751 = vmax.xlane.f32.xlu0 %v2361
        %v2752 = vpop.xlane.xlu0 %2751
        %2753 = vmax.xlane.f32.xlu0 %v2366
        %v2754 = vpop.xlane.xlu0 %2753
        %2755 = vmax.xlane.f32.xlu0 %v2369
        %v2756 = vpop.xlane.xlu0 %2755
        %2757 = vmax.xlane.f32.xlu0 %v2374
        %v2758 = vpop.xlane.xlu0 %2757
        %2759 = vmax.xlane.f32.xlu0 %v2377
        %v2760 = vpop.xlane.xlu0 %2759
        %2761 = vmax.xlane.f32.xlu0 %v2382
        %v2762 = vpop.xlane.xlu0 %2761
        %2763 = vmax.xlane.f32.xlu0 %v2385
        %v2764 = vpop.xlane.xlu0 %2763
        %2765 = vmax.xlane.f32.xlu0 %v2390
        %v2766 = vpop.xlane.xlu0 %2765
        %2767 = vmax.xlane.f32.xlu0 %v2393
        %v2768 = vpop.xlane.xlu0 %2767
        %2769 = vmax.xlane.f32.xlu0 %v2398
        %v2770 = vpop.xlane.xlu0 %2769
        %2771 = vmax.xlane.f32.xlu0 %v2401
        %v2772 = vpop.xlane.xlu0 %2771
        %2773 = vmax.xlane.f32.xlu0 %v2487
        %v2774 = vpop.xlane.xlu0 %2773
        %2775 = vmax.xlane.f32.xlu0 %v2490
        %v2776 = vpop.xlane.xlu0 %2775
        %2777 = vmax.xlane.f32.xlu0 %v2495
        %v2778 = vpop.xlane.xlu0 %2777
        %2779 = vmax.xlane.f32.xlu0 %v2498
        %v2780 = vpop.xlane.xlu0 %2779
        %2781 = vmax.xlane.f32.xlu0 %v2503
        %v2782 = vpop.xlane.xlu0 %2781
        %2783 = vmax.xlane.f32.xlu0 %v2506
        %v2784 = vpop.xlane.xlu0 %2783
        %2785 = vmax.xlane.f32.xlu0 %v2511
        %v2786 = vpop.xlane.xlu0 %2785
        %2787 = vmax.xlane.f32.xlu0 %v2514
        %v2788 = vpop.xlane.xlu0 %2787
        %2789 = vmax.xlane.f32.xlu0 %v2519
        %v2790 = vpop.xlane.xlu0 %2789
        %2791 = vmax.xlane.f32.xlu0 %v2522
        %v2792 = vpop.xlane.xlu0 %2791
        %2793 = vmax.xlane.f32.xlu0 %v2527
        %v2794 = vpop.xlane.xlu0 %2793
        %2795 = vmax.xlane.f32.xlu0 %v2530
        %v2796 = vpop.xlane.xlu0 %2795
        %2797 = vmax.xlane.f32.xlu0 %v2535
        %v2798 = vpop.xlane.xlu0 %2797
        %2799 = vmax.xlane.f32.xlu0 %v2538
        %v2800 = vpop.xlane.xlu0 %2799
        %2801 = vmax.xlane.f32.xlu0 %v2543
        %v2802 = vpop.xlane.xlu0 %2801
        %2803 = vmax.xlane.f32.xlu0 %v2546
        %v2804 = vpop.xlane.xlu0 %2803
        %v2805 = vsub.f32 %v1472, %v2550
        %v2806 = vsub.f32 %v1475, %v2552
        %v2807 = vsub.f32 %v1480, %v2554
        %v2808 = vsub.f32 %v1483, %v2556
        %v2809 = vsub.f32 %v1488, %v2558
        %v2810 = vsub.f32 %v1491, %v2560
        %v2811 = vsub.f32 %v1496, %v2562
        %v2812 = vsub.f32 %v1499, %v2564
        %v2813 = vsub.f32 %v1504, %v2566
        %v2814 = vsub.f32 %v1507, %v2568
        %v2815 = vsub.f32 %v1512, %v2570
        %v2816 = vsub.f32 %v1515, %v2572
        %v2817 = vsub.f32 %v1520, %v2574
        %v2818 = vsub.f32 %v1523, %v2576
        %v2819 = vsub.f32 %v1528, %v2578
        %v2820 = vsub.f32 %v1531, %v2580
        %v2821 = vsub.f32 %v1617, %v2582
        %v2822 = vsub.f32 %v1620, %v2584
        %v2823 = vsub.f32 %v1625, %v2586
        %v2824 = vsub.f32 %v1628, %v2588
        %v2825 = vsub.f32 %v1633, %v2590
        %v2826 = vsub.f32 %v1636, %v2592
        %v2827 = vsub.f32 %v1641, %v2594
        %v2828 = vsub.f32 %v1644, %v2596
        %v2829 = vsub.f32 %v1649, %v2598
        %v2830 = vsub.f32 %v1652, %v2600
        %v2831 = vsub.f32 %v1657, %v2602
        %v2832 = vsub.f32 %v1660, %v2604
        %v2833 = vsub.f32 %v1665, %v2606
        %v2834 = vsub.f32 %v1668, %v2608
        %v2835 = vsub.f32 %v1673, %v2610
        %v2836 = vsub.f32 %v1676, %v2612
        %v2837 = vsub.f32 %v1762, %v2614
        %v2838 = vsub.f32 %v1765, %v2616
        %v2839 = vsub.f32 %v1770, %v2618
        %v2840 = vsub.f32 %v1773, %v2620
        %v2841 = vsub.f32 %v1778, %v2622
        %v2842 = vsub.f32 %v1781, %v2624
        %v2843 = vsub.f32 %v1786, %v2626
        %v2844 = vsub.f32 %v1789, %v2628
        %v2845 = vsub.f32 %v1794, %v2630
        %v2846 = vsub.f32 %v1797, %v2632
        %v2847 = vsub.f32 %v1802, %v2634
        %v2848 = vsub.f32 %v1805, %v2636
        %v2849 = vsub.f32 %v1810, %v2638
        %v2850 = vsub.f32 %v1813, %v2640
        %v2851 = vsub.f32 %v1818, %v2642
        %v2852 = vsub.f32 %v1821, %v2644
        %v2853 = vsub.f32 %v1907, %v2646
        %v2854 = vsub.f32 %v1910, %v2648
        %v2855 = vsub.f32 %v1915, %v2650
        %v2856 = vsub.f32 %v1918, %v2652
        %v2857 = vsub.f32 %v1923, %v2654
        %v2858 = vsub.f32 %v1926, %v2656
        %v2859 = vsub.f32 %v1931, %v2658
        %v2860 = vsub.f32 %v1934, %v2660
        %v2861 = vsub.f32 %v1939, %v2662
        %v2862 = vsub.f32 %v1942, %v2664
        %v2863 = vsub.f32 %v1947, %v2666
        %v2864 = vsub.f32 %v1950, %v2668
        %v2865 = vsub.f32 %v1955, %v2670
        %v2866 = vsub.f32 %v1958, %v2672
        %v2867 = vsub.f32 %v1963, %v2674
        %v2868 = vsub.f32 %v1966, %v2676
        %v2869 = vsub.f32 %v2052, %v2678
        %v2870 = vsub.f32 %v2055, %v2680
        %v2871 = vsub.f32 %v2060, %v2682
        %v2872 = vsub.f32 %v2063, %v2684
        %v2873 = vsub.f32 %v2068, %v2686
        %v2874 = vsub.f32 %v2071, %v2688
        %v2875 = vsub.f32 %v2076, %v2690
        %v2876 = vsub.f32 %v2079, %v2692
        %v2877 = vsub.f32 %v2084, %v2694
        %v2878 = vsub.f32 %v2087, %v2696
        %v2879 = vsub.f32 %v2092, %v2698
        %v2880 = vsub.f32 %v2095, %v2700
        %v2881 = vsub.f32 %v2100, %v2702
        %v2882 = vsub.f32 %v2103, %v2704
        %v2883 = vsub.f32 %v2108, %v2706
        %v2884 = vsub.f32 %v2111, %v2708
        %v2885 = vsub.f32 %v2197, %v2710
        %v2886 = vsub.f32 %v2200, %v2712
        %v2887 = vsub.f32 %v2205, %v2714
        %v2888 = vsub.f32 %v2208, %v2716
        %v2889 = vsub.f32 %v2213, %v2718
        %v2890 = vsub.f32 %v2216, %v2720
        %v2891 = vsub.f32 %v2221, %v2722
        %v2892 = vsub.f32 %v2224, %v2724
        %v2893 = vsub.f32 %v2229, %v2726
        %v2894 = vsub.f32 %v2232, %v2728
        %v2895 = vsub.f32 %v2237, %v2730
        %v2896 = vsub.f32 %v2240, %v2732
        %v2897 = vsub.f32 %v2245, %v2734
        %v2898 = vsub.f32 %v2248, %v2736
        %v2899 = vsub.f32 %v2253, %v2738
        %v2900 = vsub.f32 %v2256, %v2740
        %v2901 = vsub.f32 %v2342, %v2742
        %v2902 = vsub.f32 %v2345, %v2744
        %v2903 = vsub.f32 %v2350, %v2746
        %v2904 = vsub.f32 %v2353, %v2748
        %v2905 = vsub.f32 %v2358, %v2750
        %v2906 = vsub.f32 %v2361, %v2752
        %v2907 = vsub.f32 %v2366, %v2754
        %v2908 = vsub.f32 %v2369, %v2756
        %v2909 = vsub.f32 %v2374, %v2758
        %v2910 = vsub.f32 %v2377, %v2760
        %v2911 = vsub.f32 %v2382, %v2762
        %v2912 = vsub.f32 %v2385, %v2764
        %v2913 = vsub.f32 %v2390, %v2766
        %v2914 = vsub.f32 %v2393, %v2768
        %v2915 = vsub.f32 %v2398, %v2770
        %v2916 = vsub.f32 %v2401, %v2772
        %v2917 = vsub.f32 %v2487, %v2774
        %v2918 = vsub.f32 %v2490, %v2776
        %v2919 = vsub.f32 %v2495, %v2778
        %v2920 = vsub.f32 %v2498, %v2780
        %v2921 = vsub.f32 %v2503, %v2782
        %v2922 = vsub.f32 %v2506, %v2784
        %v2923 = vsub.f32 %v2511, %v2786
        %v2924 = vsub.f32 %v2514, %v2788
        %v2925 = vsub.f32 %v2519, %v2790
        %v2926 = vsub.f32 %v2522, %v2792
        %v2927 = vsub.f32 %v2527, %v2794
        %v2928 = vsub.f32 %v2530, %v2796
        %v2929 = vsub.f32 %v2535, %v2798
        %v2930 = vsub.f32 %v2538, %v2800
        %v2931 = vsub.f32 %v2543, %v2802
        %v2932 = vsub.f32 %v2546, %v2804
        %v2933 = vmul.f32 %v2805, 1.442695
        %v2934 = vpow.pop %v2933
        %v2935 = vmul.f32 %v2806, 1.442695
        %v2936 = vpow.pop %v2935
        %v2937 = vmul.f32 %v2807, 1.442695
        %v2938 = vpow.pop %v2937
        %v2939 = vmul.f32 %v2808, 1.442695
        %v2940 = vpow.pop %v2939
        %v2941 = vmul.f32 %v2809, 1.442695
        %v2942 = vpow.pop %v2941
        %v2943 = vmul.f32 %v2810, 1.442695
        %v2944 = vpow.pop %v2943
        %v2945 = vmul.f32 %v2811, 1.442695
        %v2946 = vpow.pop %v2945
        %v2947 = vmul.f32 %v2812, 1.442695
        %v2948 = vpow.pop %v2947
        %v2949 = vmul.f32 %v2813, 1.442695
        %v2950 = vpow.pop %v2949
        %v2951 = vmul.f32 %v2814, 1.442695
        %v2952 = vpow.pop %v2951
        %v2953 = vmul.f32 %v2815, 1.442695
        %v2954 = vpow.pop %v2953
        %v2955 = vmul.f32 %v2816, 1.442695
        %v2956 = vpow.pop %v2955
        %v2957 = vmul.f32 %v2817, 1.442695
        %v2958 = vpow.pop %v2957
        %v2959 = vmul.f32 %v2818, 1.442695
        %v2960 = vpow.pop %v2959
        %v2961 = vmul.f32 %v2819, 1.442695
        %v2962 = vpow.pop %v2961
        %v2963 = vmul.f32 %v2820, 1.442695
        %v2964 = vpow.pop %v2963
        %v2965 = vmul.f32 %v2821, 1.442695
        %v2966 = vpow.pop %v2965
        %v2967 = vmul.f32 %v2822, 1.442695
        %v2968 = vpow.pop %v2967
        %v2969 = vmul.f32 %v2823, 1.442695
        %v2970 = vpow.pop %v2969
        %v2971 = vmul.f32 %v2824, 1.442695
        %v2972 = vpow.pop %v2971
        %v2973 = vmul.f32 %v2825, 1.442695
        %v2974 = vpow.pop %v2973
        %v2975 = vmul.f32 %v2826, 1.442695
        %v2976 = vpow.pop %v2975
        %v2977 = vmul.f32 %v2827, 1.442695
        %v2978 = vpow.pop %v2977
        %v2979 = vmul.f32 %v2828, 1.442695
        %v2980 = vpow.pop %v2979
        %v2981 = vmul.f32 %v2829, 1.442695
        %v2982 = vpow.pop %v2981
        %v2983 = vmul.f32 %v2830, 1.442695
        %v2984 = vpow.pop %v2983
        %v2985 = vmul.f32 %v2831, 1.442695
        %v2986 = vpow.pop %v2985
        %v2987 = vmul.f32 %v2832, 1.442695
        %v2988 = vpow.pop %v2987
        %v2989 = vmul.f32 %v2833, 1.442695
        %v2990 = vpow.pop %v2989
        %v2991 = vmul.f32 %v2834, 1.442695
        %v2992 = vpow.pop %v2991
        %v2993 = vmul.f32 %v2835, 1.442695
        %v2994 = vpow.pop %v2993
        %v2995 = vmul.f32 %v2836, 1.442695
        %v2996 = vpow.pop %v2995
        %v2997 = vmul.f32 %v2837, 1.442695
        %v2998 = vpow.pop %v2997
        %v2999 = vmul.f32 %v2838, 1.442695
        %v3000 = vpow.pop %v2999
        %v3001 = vmul.f32 %v2839, 1.442695
        %v3002 = vpow.pop %v3001
        %v3003 = vmul.f32 %v2840, 1.442695
        %v3004 = vpow.pop %v3003
        %v3005 = vmul.f32 %v2841, 1.442695
        %v3006 = vpow.pop %v3005
        %v3007 = vmul.f32 %v2842, 1.442695
        %v3008 = vpow.pop %v3007
        %v3009 = vmul.f32 %v2843, 1.442695
        %v3010 = vpow.pop %v3009
        %v3011 = vmul.f32 %v2844, 1.442695
        %v3012 = vpow.pop %v3011
        %v3013 = vmul.f32 %v2845, 1.442695
        %v3014 = vpow.pop %v3013
        %v3015 = vmul.f32 %v2846, 1.442695
        %v3016 = vpow.pop %v3015
        %v3017 = vmul.f32 %v2847, 1.442695
        %v3018 = vpow.pop %v3017
        %v3019 = vmul.f32 %v2848, 1.442695
        %v3020 = vpow.pop %v3019
        %v3021 = vmul.f32 %v2849, 1.442695
        %v3022 = vpow.pop %v3021
        %v3023 = vmul.f32 %v2850, 1.442695
        %v3024 = vpow.pop %v3023
        %v3025 = vmul.f32 %v2851, 1.442695
        %v3026 = vpow.pop %v3025
        %v3027 = vmul.f32 %v2852, 1.442695
        %v3028 = vpow.pop %v3027
        %v3029 = vmul.f32 %v2853, 1.442695
        %v3030 = vpow.pop %v3029
        %v3031 = vmul.f32 %v2854, 1.442695
        %v3032 = vpow.pop %v3031
        %v3033 = vmul.f32 %v2855, 1.442695
        %v3034 = vpow.pop %v3033
        %v3035 = vmul.f32 %v2856, 1.442695
        %v3036 = vpow.pop %v3035
        %v3037 = vmul.f32 %v2857, 1.442695
        %v3038 = vpow.pop %v3037
        %v3039 = vmul.f32 %v2858, 1.442695
        %v3040 = vpow.pop %v3039
        %v3041 = vmul.f32 %v2859, 1.442695
        %v3042 = vpow.pop %v3041
        %v3043 = vmul.f32 %v2860, 1.442695
        %v3044 = vpow.pop %v3043
        %v3045 = vmul.f32 %v2861, 1.442695
        %v3046 = vpow.pop %v3045
        %v3047 = vmul.f32 %v2862, 1.442695
        %v3048 = vpow.pop %v3047
        %v3049 = vmul.f32 %v2863, 1.442695
        %v3050 = vpow.pop %v3049
        %v3051 = vmul.f32 %v2864, 1.442695
        %v3052 = vpow.pop %v3051
        %v3053 = vmul.f32 %v2865, 1.442695
        %v3054 = vpow.pop %v3053
        %v3055 = vmul.f32 %v2866, 1.442695
        %v3056 = vpow.pop %v3055
        %v3057 = vmul.f32 %v2867, 1.442695
        %v3058 = vpow.pop %v3057
        %v3059 = vmul.f32 %v2868, 1.442695
        %v3060 = vpow.pop %v3059
        %v3061 = vmul.f32 %v2869, 1.442695
        %v3062 = vpow.pop %v3061
        %v3063 = vmul.f32 %v2870, 1.442695
        %v3064 = vpow.pop %v3063
        %v3065 = vmul.f32 %v2871, 1.442695
        %v3066 = vpow.pop %v3065
        %v3067 = vmul.f32 %v2872, 1.442695
        %v3068 = vpow.pop %v3067
        %v3069 = vmul.f32 %v2873, 1.442695
        %v3070 = vpow.pop %v3069
        %v3071 = vmul.f32 %v2874, 1.442695
        %v3072 = vpow.pop %v3071
        %v3073 = vmul.f32 %v2875, 1.442695
        %v3074 = vpow.pop %v3073
        %v3075 = vmul.f32 %v2876, 1.442695
        %v3076 = vpow.pop %v3075
        %v3077 = vmul.f32 %v2877, 1.442695
        %v3078 = vpow.pop %v3077
        %v3079 = vmul.f32 %v2878, 1.442695
        %v3080 = vpow.pop %v3079
        %v3081 = vmul.f32 %v2879, 1.442695
        %v3082 = vpow.pop %v3081
        %v3083 = vmul.f32 %v2880, 1.442695
        %v3084 = vpow.pop %v3083
        %v3085 = vmul.f32 %v2881, 1.442695
        %v3086 = vpow.pop %v3085
        %v3087 = vmul.f32 %v2882, 1.442695
        %v3088 = vpow.pop %v3087
        %v3089 = vmul.f32 %v2883, 1.442695
        %v3090 = vpow.pop %v3089
        %v3091 = vmul.f32 %v2884, 1.442695
        %v3092 = vpow.pop %v3091
        %v3093 = vmul.f32 %v2885, 1.442695
        %v3094 = vpow.pop %v3093
        %v3095 = vmul.f32 %v2886, 1.442695
        %v3096 = vpow.pop %v3095
        %v3097 = vmul.f32 %v2887, 1.442695
        %v3098 = vpow.pop %v3097
        %v3099 = vmul.f32 %v2888, 1.442695
        %v3100 = vpow.pop %v3099
        %v3101 = vmul.f32 %v2889, 1.442695
        %v3102 = vpow.pop %v3101
        %v3103 = vmul.f32 %v2890, 1.442695
        %v3104 = vpow.pop %v3103
        %v3105 = vmul.f32 %v2891, 1.442695
        %v3106 = vpow.pop %v3105
        %v3107 = vmul.f32 %v2892, 1.442695
        %v3108 = vpow.pop %v3107
        %v3109 = vmul.f32 %v2893, 1.442695
        %v3110 = vpow.pop %v3109
        %v3111 = vmul.f32 %v2894, 1.442695
        %v3112 = vpow.pop %v3111
        %v3113 = vmul.f32 %v2895, 1.442695
        %v3114 = vpow.pop %v3113
        %v3115 = vmul.f32 %v2896, 1.442695
        %v3116 = vpow.pop %v3115
        %v3117 = vmul.f32 %v2897, 1.442695
        %v3118 = vpow.pop %v3117
        %v3119 = vmul.f32 %v2898, 1.442695
        %v3120 = vpow.pop %v3119
        %v3121 = vmul.f32 %v2899, 1.442695
        %v3122 = vpow.pop %v3121
        %v3123 = vmul.f32 %v2900, 1.442695
        %v3124 = vpow.pop %v3123
        %v3125 = vmul.f32 %v2901, 1.442695
        %v3126 = vpow.pop %v3125
        %v3127 = vmul.f32 %v2902, 1.442695
        %v3128 = vpow.pop %v3127
        %v3129 = vmul.f32 %v2903, 1.442695
        %v3130 = vpow.pop %v3129
        %v3131 = vmul.f32 %v2904, 1.442695
        %v3132 = vpow.pop %v3131
        %v3133 = vmul.f32 %v2905, 1.442695
        %v3134 = vpow.pop %v3133
        %v3135 = vmul.f32 %v2906, 1.442695
        %v3136 = vpow.pop %v3135
        %v3137 = vmul.f32 %v2907, 1.442695
        %v3138 = vpow.pop %v3137
        %v3139 = vmul.f32 %v2908, 1.442695
        %v3140 = vpow.pop %v3139
        %v3141 = vmul.f32 %v2909, 1.442695
        %v3142 = vpow.pop %v3141
        %v3143 = vmul.f32 %v2910, 1.442695
        %v3144 = vpow.pop %v3143
        %v3145 = vmul.f32 %v2911, 1.442695
        %v3146 = vpow.pop %v3145
        %v3147 = vmul.f32 %v2912, 1.442695
        %v3148 = vpow.pop %v3147
        %v3149 = vmul.f32 %v2913, 1.442695
        %v3150 = vpow.pop %v3149
        %v3151 = vmul.f32 %v2914, 1.442695
        %v3152 = vpow.pop %v3151
        %v3153 = vmul.f32 %v2915, 1.442695
        %v3154 = vpow.pop %v3153
        %v3155 = vmul.f32 %v2916, 1.442695
        %v3156 = vpow.pop %v3155
        %v3157 = vmul.f32 %v2917, 1.442695
        %v3158 = vpow.pop %v3157
        %v3159 = vmul.f32 %v2918, 1.442695
        %v3160 = vpow.pop %v3159
        %v3161 = vmul.f32 %v2919, 1.442695
        %v3162 = vpow.pop %v3161
        %v3163 = vmul.f32 %v2920, 1.442695
        %v3164 = vpow.pop %v3163
        %v3165 = vmul.f32 %v2921, 1.442695
        %v3166 = vpow.pop %v3165
        %v3167 = vmul.f32 %v2922, 1.442695
        %v3168 = vpow.pop %v3167
        %v3169 = vmul.f32 %v2923, 1.442695
        %v3170 = vpow.pop %v3169
        %v3171 = vmul.f32 %v2924, 1.442695
        %v3172 = vpow.pop %v3171
        %v3173 = vmul.f32 %v2925, 1.442695
        %v3174 = vpow.pop %v3173
        %v3175 = vmul.f32 %v2926, 1.442695
        %v3176 = vpow.pop %v3175
        %v3177 = vmul.f32 %v2927, 1.442695
        %v3178 = vpow.pop %v3177
        %v3179 = vmul.f32 %v2928, 1.442695
        %v3180 = vpow.pop %v3179
        %v3181 = vmul.f32 %v2929, 1.442695
        %v3182 = vpow.pop %v3181
        %v3183 = vmul.f32 %v2930, 1.442695
        %v3184 = vpow.pop %v3183
        %v3185 = vmul.f32 %v2931, 1.442695
        %v3186 = vpow.pop %v3185
        %v3187 = vmul.f32 %v2932, 1.442695
        %v3188 = vpow.pop %v3187
        %3189 = vadd.xlane.f32.xlu0 %v2934
        %v3190 = vpop.xlane.xlu0 %3189
        %3191 = vadd.xlane.f32.xlu0 %v2936
        %v3192 = vpop.xlane.xlu0 %3191
        %3193 = vadd.xlane.f32.xlu0 %v2938
        %v3194 = vpop.xlane.xlu0 %3193
        %3195 = vadd.xlane.f32.xlu0 %v2940
        %v3196 = vpop.xlane.xlu0 %3195
        %3197 = vadd.xlane.f32.xlu0 %v2942
        %v3198 = vpop.xlane.xlu0 %3197
        %3199 = vadd.xlane.f32.xlu0 %v2944
        %v3200 = vpop.xlane.xlu0 %3199
        %3201 = vadd.xlane.f32.xlu0 %v2946
        %v3202 = vpop.xlane.xlu0 %3201
        %3203 = vadd.xlane.f32.xlu0 %v2948
        %v3204 = vpop.xlane.xlu0 %3203
        %3205 = vadd.xlane.f32.xlu0 %v2950
        %v3206 = vpop.xlane.xlu0 %3205
        %3207 = vadd.xlane.f32.xlu0 %v2952
        %v3208 = vpop.xlane.xlu0 %3207
        %3209 = vadd.xlane.f32.xlu0 %v2954
        %v3210 = vpop.xlane.xlu0 %3209
        %3211 = vadd.xlane.f32.xlu0 %v2956
        %v3212 = vpop.xlane.xlu0 %3211
        %3213 = vadd.xlane.f32.xlu0 %v2958
        %v3214 = vpop.xlane.xlu0 %3213
        %3215 = vadd.xlane.f32.xlu0 %v2960
        %v3216 = vpop.xlane.xlu0 %3215
        %3217 = vadd.xlane.f32.xlu0 %v2962
        %v3218 = vpop.xlane.xlu0 %3217
        %3219 = vadd.xlane.f32.xlu0 %v2964
        %v3220 = vpop.xlane.xlu0 %3219
        %3221 = vadd.xlane.f32.xlu0 %v2966
        %v3222 = vpop.xlane.xlu0 %3221
        %3223 = vadd.xlane.f32.xlu0 %v2968
        %v3224 = vpop.xlane.xlu0 %3223
        %3225 = vadd.xlane.f32.xlu0 %v2970
        %v3226 = vpop.xlane.xlu0 %3225
        %3227 = vadd.xlane.f32.xlu0 %v2972
        %v3228 = vpop.xlane.xlu0 %3227
        %3229 = vadd.xlane.f32.xlu0 %v2974
        %v3230 = vpop.xlane.xlu0 %3229
        %3231 = vadd.xlane.f32.xlu0 %v2976
        %v3232 = vpop.xlane.xlu0 %3231
        %3233 = vadd.xlane.f32.xlu0 %v2978
        %v3234 = vpop.xlane.xlu0 %3233
        %3235 = vadd.xlane.f32.xlu0 %v2980
        %v3236 = vpop.xlane.xlu0 %3235
        %3237 = vadd.xlane.f32.xlu0 %v2982
        %v3238 = vpop.xlane.xlu0 %3237
        %3239 = vadd.xlane.f32.xlu0 %v2984
        %v3240 = vpop.xlane.xlu0 %3239
        %3241 = vadd.xlane.f32.xlu0 %v2986
        %v3242 = vpop.xlane.xlu0 %3241
        %3243 = vadd.xlane.f32.xlu0 %v2988
        %v3244 = vpop.xlane.xlu0 %3243
        %3245 = vadd.xlane.f32.xlu0 %v2990
        %v3246 = vpop.xlane.xlu0 %3245
        %3247 = vadd.xlane.f32.xlu0 %v2992
        %v3248 = vpop.xlane.xlu0 %3247
        %3249 = vadd.xlane.f32.xlu0 %v2994
        %v3250 = vpop.xlane.xlu0 %3249
        %3251 = vadd.xlane.f32.xlu0 %v2996
        %v3252 = vpop.xlane.xlu0 %3251
        %3253 = vadd.xlane.f32.xlu0 %v2998
        %v3254 = vpop.xlane.xlu0 %3253
        %3255 = vadd.xlane.f32.xlu0 %v3000
        %v3256 = vpop.xlane.xlu0 %3255
        %3257 = vadd.xlane.f32.xlu0 %v3002
        %v3258 = vpop.xlane.xlu0 %3257
        %3259 = vadd.xlane.f32.xlu0 %v3004
        %v3260 = vpop.xlane.xlu0 %3259
        %3261 = vadd.xlane.f32.xlu0 %v3006
        %v3262 = vpop.xlane.xlu0 %3261
        %3263 = vadd.xlane.f32.xlu0 %v3008
        %v3264 = vpop.xlane.xlu0 %3263
        %3265 = vadd.xlane.f32.xlu0 %v3010
        %v3266 = vpop.xlane.xlu0 %3265
        %3267 = vadd.xlane.f32.xlu0 %v3012
        %v3268 = vpop.xlane.xlu0 %3267
        %3269 = vadd.xlane.f32.xlu0 %v3014
        %v3270 = vpop.xlane.xlu0 %3269
        %3271 = vadd.xlane.f32.xlu0 %v3016
        %v3272 = vpop.xlane.xlu0 %3271
        %3273 = vadd.xlane.f32.xlu0 %v3018
        %v3274 = vpop.xlane.xlu0 %3273
        %3275 = vadd.xlane.f32.xlu0 %v3020
        %v3276 = vpop.xlane.xlu0 %3275
        %3277 = vadd.xlane.f32.xlu0 %v3022
        %v3278 = vpop.xlane.xlu0 %3277
        %3279 = vadd.xlane.f32.xlu0 %v3024
        %v3280 = vpop.xlane.xlu0 %3279
        %3281 = vadd.xlane.f32.xlu0 %v3026
        %v3282 = vpop.xlane.xlu0 %3281
        %3283 = vadd.xlane.f32.xlu0 %v3028
        %v3284 = vpop.xlane.xlu0 %3283
        %3285 = vadd.xlane.f32.xlu0 %v3030
        %v3286 = vpop.xlane.xlu0 %3285
        %3287 = vadd.xlane.f32.xlu0 %v3032
        %v3288 = vpop.xlane.xlu0 %3287
        %3289 = vadd.xlane.f32.xlu0 %v3034
        %v3290 = vpop.xlane.xlu0 %3289
        %3291 = vadd.xlane.f32.xlu0 %v3036
        %v3292 = vpop.xlane.xlu0 %3291
        %3293 = vadd.xlane.f32.xlu0 %v3038
        %v3294 = vpop.xlane.xlu0 %3293
        %3295 = vadd.xlane.f32.xlu0 %v3040
        %v3296 = vpop.xlane.xlu0 %3295
        %3297 = vadd.xlane.f32.xlu0 %v3042
        %v3298 = vpop.xlane.xlu0 %3297
        %3299 = vadd.xlane.f32.xlu0 %v3044
        %v3300 = vpop.xlane.xlu0 %3299
        %3301 = vadd.xlane.f32.xlu0 %v3046
        %v3302 = vpop.xlane.xlu0 %3301
        %3303 = vadd.xlane.f32.xlu0 %v3048
        %v3304 = vpop.xlane.xlu0 %3303
        %3305 = vadd.xlane.f32.xlu0 %v3050
        %v3306 = vpop.xlane.xlu0 %3305
        %3307 = vadd.xlane.f32.xlu0 %v3052
        %v3308 = vpop.xlane.xlu0 %3307
        %3309 = vadd.xlane.f32.xlu0 %v3054
        %v3310 = vpop.xlane.xlu0 %3309
        %3311 = vadd.xlane.f32.xlu0 %v3056
        %v3312 = vpop.xlane.xlu0 %3311
        %3313 = vadd.xlane.f32.xlu0 %v3058
        %v3314 = vpop.xlane.xlu0 %3313
        %3315 = vadd.xlane.f32.xlu0 %v3060
        %v3316 = vpop.xlane.xlu0 %3315
        %3317 = vadd.xlane.f32.xlu0 %v3062
        %v3318 = vpop.xlane.xlu0 %3317
        %3319 = vadd.xlane.f32.xlu0 %v3064
        %v3320 = vpop.xlane.xlu0 %3319
        %3321 = vadd.xlane.f32.xlu0 %v3066
        %v3322 = vpop.xlane.xlu0 %3321
        %3323 = vadd.xlane.f32.xlu0 %v3068
        %v3324 = vpop.xlane.xlu0 %3323
        %3325 = vadd.xlane.f32.xlu0 %v3070
        %v3326 = vpop.xlane.xlu0 %3325
        %3327 = vadd.xlane.f32.xlu0 %v3072
        %v3328 = vpop.xlane.xlu0 %3327
        %3329 = vadd.xlane.f32.xlu0 %v3074
        %v3330 = vpop.xlane.xlu0 %3329
        %3331 = vadd.xlane.f32.xlu0 %v3076
        %v3332 = vpop.xlane.xlu0 %3331
        %3333 = vadd.xlane.f32.xlu0 %v3078
        %v3334 = vpop.xlane.xlu0 %3333
        %3335 = vadd.xlane.f32.xlu0 %v3080
        %v3336 = vpop.xlane.xlu0 %3335
        %3337 = vadd.xlane.f32.xlu0 %v3082
        %v3338 = vpop.xlane.xlu0 %3337
        %3339 = vadd.xlane.f32.xlu0 %v3084
        %v3340 = vpop.xlane.xlu0 %3339
        %3341 = vadd.xlane.f32.xlu0 %v3086
        %v3342 = vpop.xlane.xlu0 %3341
        %3343 = vadd.xlane.f32.xlu0 %v3088
        %v3344 = vpop.xlane.xlu0 %3343
        %3345 = vadd.xlane.f32.xlu0 %v3090
        %v3346 = vpop.xlane.xlu0 %3345
        %3347 = vadd.xlane.f32.xlu0 %v3092
        %v3348 = vpop.xlane.xlu0 %3347
        %3349 = vadd.xlane.f32.xlu0 %v3094
        %v3350 = vpop.xlane.xlu0 %3349
        %3351 = vadd.xlane.f32.xlu0 %v3096
        %v3352 = vpop.xlane.xlu0 %3351
        %3353 = vadd.xlane.f32.xlu0 %v3098
        %v3354 = vpop.xlane.xlu0 %3353
        %3355 = vadd.xlane.f32.xlu0 %v3100
        %v3356 = vpop.xlane.xlu0 %3355
        %3357 = vadd.xlane.f32.xlu0 %v3102
        %v3358 = vpop.xlane.xlu0 %3357
        %3359 = vadd.xlane.f32.xlu0 %v3104
        %v3360 = vpop.xlane.xlu0 %3359
        %3361 = vadd.xlane.f32.xlu0 %v3106
        %v3362 = vpop.xlane.xlu0 %3361
        %3363 = vadd.xlane.f32.xlu0 %v3108
        %v3364 = vpop.xlane.xlu0 %3363
        %3365 = vadd.xlane.f32.xlu0 %v3110
        %v3366 = vpop.xlane.xlu0 %3365
        %3367 = vadd.xlane.f32.xlu0 %v3112
        %v3368 = vpop.xlane.xlu0 %3367
        %3369 = vadd.xlane.f32.xlu0 %v3114
        %v3370 = vpop.xlane.xlu0 %3369
        %3371 = vadd.xlane.f32.xlu0 %v3116
        %v3372 = vpop.xlane.xlu0 %3371
        %3373 = vadd.xlane.f32.xlu0 %v3118
        %v3374 = vpop.xlane.xlu0 %3373
        %3375 = vadd.xlane.f32.xlu0 %v3120
        %v3376 = vpop.xlane.xlu0 %3375
        %3377 = vadd.xlane.f32.xlu0 %v3122
        %v3378 = vpop.xlane.xlu0 %3377
        %3379 = vadd.xlane.f32.xlu0 %v3124
        %v3380 = vpop.xlane.xlu0 %3379
        %3381 = vadd.xlane.f32.xlu0 %v3126
        %v3382 = vpop.xlane.xlu0 %3381
        %3383 = vadd.xlane.f32.xlu0 %v3128
        %v3384 = vpop.xlane.xlu0 %3383
        %3385 = vadd.xlane.f32.xlu0 %v3130
        %v3386 = vpop.xlane.xlu0 %3385
        %3387 = vadd.xlane.f32.xlu0 %v3132
        %v3388 = vpop.xlane.xlu0 %3387
        %3389 = vadd.xlane.f32.xlu0 %v3134
        %v3390 = vpop.xlane.xlu0 %3389
        %3391 = vadd.xlane.f32.xlu0 %v3136
        %v3392 = vpop.xlane.xlu0 %3391
        %3393 = vadd.xlane.f32.xlu0 %v3138
        %v3394 = vpop.xlane.xlu0 %3393
        %3395 = vadd.xlane.f32.xlu0 %v3140
        %v3396 = vpop.xlane.xlu0 %3395
        %3397 = vadd.xlane.f32.xlu0 %v3142
        %v3398 = vpop.xlane.xlu0 %3397
        %3399 = vadd.xlane.f32.xlu0 %v3144
        %v3400 = vpop.xlane.xlu0 %3399
        %3401 = vadd.xlane.f32.xlu0 %v3146
        %v3402 = vpop.xlane.xlu0 %3401
        %3403 = vadd.xlane.f32.xlu0 %v3148
        %v3404 = vpop.xlane.xlu0 %3403
        %3405 = vadd.xlane.f32.xlu0 %v3150
        %v3406 = vpop.xlane.xlu0 %3405
        %3407 = vadd.xlane.f32.xlu0 %v3152
        %v3408 = vpop.xlane.xlu0 %3407
        %3409 = vadd.xlane.f32.xlu0 %v3154
        %v3410 = vpop.xlane.xlu0 %3409
        %3411 = vadd.xlane.f32.xlu0 %v3156
        %v3412 = vpop.xlane.xlu0 %3411
        %3413 = vadd.xlane.f32.xlu0 %v3158
        %v3414 = vpop.xlane.xlu0 %3413
        %3415 = vadd.xlane.f32.xlu0 %v3160
        %v3416 = vpop.xlane.xlu0 %3415
        %3417 = vadd.xlane.f32.xlu0 %v3162
        %v3418 = vpop.xlane.xlu0 %3417
        %3419 = vadd.xlane.f32.xlu0 %v3164
        %v3420 = vpop.xlane.xlu0 %3419
        %3421 = vadd.xlane.f32.xlu0 %v3166
        %v3422 = vpop.xlane.xlu0 %3421
        %3423 = vadd.xlane.f32.xlu0 %v3168
        %v3424 = vpop.xlane.xlu0 %3423
        %3425 = vadd.xlane.f32.xlu0 %v3170
        %v3426 = vpop.xlane.xlu0 %3425
        %3427 = vadd.xlane.f32.xlu0 %v3172
        %v3428 = vpop.xlane.xlu0 %3427
        %3429 = vadd.xlane.f32.xlu0 %v3174
        %v3430 = vpop.xlane.xlu0 %3429
        %3431 = vadd.xlane.f32.xlu0 %v3176
        %v3432 = vpop.xlane.xlu0 %3431
        %3433 = vadd.xlane.f32.xlu0 %v3178
        %v3434 = vpop.xlane.xlu0 %3433
        %3435 = vadd.xlane.f32.xlu0 %v3180
        %v3436 = vpop.xlane.xlu0 %3435
        %3437 = vadd.xlane.f32.xlu0 %v3182
        %v3438 = vpop.xlane.xlu0 %3437
        %3439 = vadd.xlane.f32.xlu0 %v3184
        %v3440 = vpop.xlane.xlu0 %3439
        %3441 = vadd.xlane.f32.xlu0 %v3186
        %v3442 = vpop.xlane.xlu0 %3441
        %3443 = vadd.xlane.f32.xlu0 %v3188
        %v3444 = vpop.xlane.xlu0 %3443
        %v3445 = vrcp.pop %v3190
        %v3446 = vrcp.pop %v3192
        %v3447 = vrcp.pop %v3194
        %v3448 = vrcp.pop %v3196
        %v3449 = vrcp.pop %v3198
        %v3450 = vrcp.pop %v3200
        %v3451 = vrcp.pop %v3202
        %v3452 = vrcp.pop %v3204
        %v3453 = vrcp.pop %v3206
        %v3454 = vrcp.pop %v3208
        %v3455 = vrcp.pop %v3210
        %v3456 = vrcp.pop %v3212
        %v3457 = vrcp.pop %v3214
        %v3458 = vrcp.pop %v3216
        %v3459 = vrcp.pop %v3218
        %v3460 = vrcp.pop %v3220
        %v3461 = vrcp.pop %v3222
        %v3462 = vrcp.pop %v3224
        %v3463 = vrcp.pop %v3226
        %v3464 = vrcp.pop %v3228
        %v3465 = vrcp.pop %v3230
        %v3466 = vrcp.pop %v3232
        %v3467 = vrcp.pop %v3234
        %v3468 = vrcp.pop %v3236
        %v3469 = vrcp.pop %v3238
        %v3470 = vrcp.pop %v3240
        %v3471 = vrcp.pop %v3242
        %v3472 = vrcp.pop %v3244
        %v3473 = vrcp.pop %v3246
        %v3474 = vrcp.pop %v3248
        %v3475 = vrcp.pop %v3250
        %v3476 = vrcp.pop %v3252
        %v3477 = vrcp.pop %v3254
        %v3478 = vrcp.pop %v3256
        %v3479 = vrcp.pop %v3258
        %v3480 = vrcp.pop %v3260
        %v3481 = vrcp.pop %v3262
        %v3482 = vrcp.pop %v3264
        %v3483 = vrcp.pop %v3266
        %v3484 = vrcp.pop %v3268
        %v3485 = vrcp.pop %v3270
        %v3486 = vrcp.pop %v3272
        %v3487 = vrcp.pop %v3274
        %v3488 = vrcp.pop %v3276
        %v3489 = vrcp.pop %v3278
        %v3490 = vrcp.pop %v3280
        %v3491 = vrcp.pop %v3282
        %v3492 = vrcp.pop %v3284
        %v3493 = vrcp.pop %v3286
        %v3494 = vrcp.pop %v3288
        %v3495 = vrcp.pop %v3290
        %v3496 = vrcp.pop %v3292
        %v3497 = vrcp.pop %v3294
        %v3498 = vrcp.pop %v3296
        %v3499 = vrcp.pop %v3298
        %v3500 = vrcp.pop %v3300
        %v3501 = vrcp.pop %v3302
        %v3502 = vrcp.pop %v3304
        %v3503 = vrcp.pop %v3306
        %v3504 = vrcp.pop %v3308
        %v3505 = vrcp.pop %v3310
        %v3506 = vrcp.pop %v3312
        %v3507 = vrcp.pop %v3314
        %v3508 = vrcp.pop %v3316
        %v3509 = vrcp.pop %v3318
        %v3510 = vrcp.pop %v3320
        %v3511 = vrcp.pop %v3322
        %v3512 = vrcp.pop %v3324
        %v3513 = vrcp.pop %v3326
        %v3514 = vrcp.pop %v3328
        %v3515 = vrcp.pop %v3330
        %v3516 = vrcp.pop %v3332
        %v3517 = vrcp.pop %v3334
        %v3518 = vrcp.pop %v3336
        %v3519 = vrcp.pop %v3338
        %v3520 = vrcp.pop %v3340
        %v3521 = vrcp.pop %v3342
        %v3522 = vrcp.pop %v3344
        %v3523 = vrcp.pop %v3346
        %v3524 = vrcp.pop %v3348
        %v3525 = vrcp.pop %v3350
        %v3526 = vrcp.pop %v3352
        %v3527 = vrcp.pop %v3354
        %v3528 = vrcp.pop %v3356
        %v3529 = vrcp.pop %v3358
        %v3530 = vrcp.pop %v3360
        %v3531 = vrcp.pop %v3362
        %v3532 = vrcp.pop %v3364
        %v3533 = vrcp.pop %v3366
        %v3534 = vrcp.pop %v3368
        %v3535 = vrcp.pop %v3370
        %v3536 = vrcp.pop %v3372
        %v3537 = vrcp.pop %v3374
        %v3538 = vrcp.pop %v3376
        %v3539 = vrcp.pop %v3378
        %v3540 = vrcp.pop %v3380
        %v3541 = vrcp.pop %v3382
        %v3542 = vrcp.pop %v3384
        %v3543 = vrcp.pop %v3386
        %v3544 = vrcp.pop %v3388
        %v3545 = vrcp.pop %v3390
        %v3546 = vrcp.pop %v3392
        %v3547 = vrcp.pop %v3394
        %v3548 = vrcp.pop %v3396
        %v3549 = vrcp.pop %v3398
        %v3550 = vrcp.pop %v3400
        %v3551 = vrcp.pop %v3402
        %v3552 = vrcp.pop %v3404
        %v3553 = vrcp.pop %v3406
        %v3554 = vrcp.pop %v3408
        %v3555 = vrcp.pop %v3410
        %v3556 = vrcp.pop %v3412
        %v3557 = vrcp.pop %v3414
        %v3558 = vrcp.pop %v3416
        %v3559 = vrcp.pop %v3418
        %v3560 = vrcp.pop %v3420
        %v3561 = vrcp.pop %v3422
        %v3562 = vrcp.pop %v3424
        %v3563 = vrcp.pop %v3426
        %v3564 = vrcp.pop %v3428
        %v3565 = vrcp.pop %v3430
        %v3566 = vrcp.pop %v3432
        %v3567 = vrcp.pop %v3434
        %v3568 = vrcp.pop %v3436
        %v3569 = vrcp.pop %v3438
        %v3570 = vrcp.pop %v3440
        %v3571 = vrcp.pop %v3442
        %v3572 = vrcp.pop %v3444
        %v3573 = vmul.f32 %v2934, %v3445
        %v3574 = vmul.f32 %v2936, %v3446
        %v3575 = vmul.f32 %v2938, %v3447
        %v3576 = vmul.f32 %v2940, %v3448
        %v3577 = vmul.f32 %v2942, %v3449
        %v3578 = vmul.f32 %v2944, %v3450
        %v3579 = vmul.f32 %v2946, %v3451
        %v3580 = vmul.f32 %v2948, %v3452
        %v3581 = vmul.f32 %v2950, %v3453
        %v3582 = vmul.f32 %v2952, %v3454
        %v3583 = vmul.f32 %v2954, %v3455
        %v3584 = vmul.f32 %v2956, %v3456
        %v3585 = vmul.f32 %v2958, %v3457
        %v3586 = vmul.f32 %v2960, %v3458
        %v3587 = vmul.f32 %v2962, %v3459
        %v3588 = vmul.f32 %v2964, %v3460
        %v3589 = vmul.f32 %v2966, %v3461
        %v3590 = vmul.f32 %v2968, %v3462
        %v3591 = vmul.f32 %v2970, %v3463
        %v3592 = vmul.f32 %v2972, %v3464
        %v3593 = vmul.f32 %v2974, %v3465
        %v3594 = vmul.f32 %v2976, %v3466
        %v3595 = vmul.f32 %v2978, %v3467
        %v3596 = vmul.f32 %v2980, %v3468
        %v3597 = vmul.f32 %v2982, %v3469
        %v3598 = vmul.f32 %v2984, %v3470
        %v3599 = vmul.f32 %v2986, %v3471
        %v3600 = vmul.f32 %v2988, %v3472
        %v3601 = vmul.f32 %v2990, %v3473
        %v3602 = vmul.f32 %v2992, %v3474
        %v3603 = vmul.f32 %v2994, %v3475
        %v3604 = vmul.f32 %v2996, %v3476
        %v3605 = vmul.f32 %v2998, %v3477
        %v3606 = vmul.f32 %v3000, %v3478
        %v3607 = vmul.f32 %v3002, %v3479
        %v3608 = vmul.f32 %v3004, %v3480
        %v3609 = vmul.f32 %v3006, %v3481
        %v3610 = vmul.f32 %v3008, %v3482
        %v3611 = vmul.f32 %v3010, %v3483
        %v3612 = vmul.f32 %v3012, %v3484
        %v3613 = vmul.f32 %v3014, %v3485
        %v3614 = vmul.f32 %v3016, %v3486
        %v3615 = vmul.f32 %v3018, %v3487
        %v3616 = vmul.f32 %v3020, %v3488
        %v3617 = vmul.f32 %v3022, %v3489
        %v3618 = vmul.f32 %v3024, %v3490
        %v3619 = vmul.f32 %v3026, %v3491
        %v3620 = vmul.f32 %v3028, %v3492
        %v3621 = vmul.f32 %v3030, %v3493
        %v3622 = vmul.f32 %v3032, %v3494
        %v3623 = vmul.f32 %v3034, %v3495
        %v3624 = vmul.f32 %v3036, %v3496
        %v3625 = vmul.f32 %v3038, %v3497
        %v3626 = vmul.f32 %v3040, %v3498
        %v3627 = vmul.f32 %v3042, %v3499
        %v3628 = vmul.f32 %v3044, %v3500
        %v3629 = vmul.f32 %v3046, %v3501
        %v3630 = vmul.f32 %v3048, %v3502
        %v3631 = vmul.f32 %v3050, %v3503
        %v3632 = vmul.f32 %v3052, %v3504
        %v3633 = vmul.f32 %v3054, %v3505
        %v3634 = vmul.f32 %v3056, %v3506
        %v3635 = vmul.f32 %v3058, %v3507
        %v3636 = vmul.f32 %v3060, %v3508
        %v3637 = vmul.f32 %v3062, %v3509
        %v3638 = vmul.f32 %v3064, %v3510
        %v3639 = vmul.f32 %v3066, %v3511
        %v3640 = vmul.f32 %v3068, %v3512
        %v3641 = vmul.f32 %v3070, %v3513
        %v3642 = vmul.f32 %v3072, %v3514
        %v3643 = vmul.f32 %v3074, %v3515
        %v3644 = vmul.f32 %v3076, %v3516
        %v3645 = vmul.f32 %v3078, %v3517
        %v3646 = vmul.f32 %v3080, %v3518
        %v3647 = vmul.f32 %v3082, %v3519
        %v3648 = vmul.f32 %v3084, %v3520
        %v3649 = vmul.f32 %v3086, %v3521
        %v3650 = vmul.f32 %v3088, %v3522
        %v3651 = vmul.f32 %v3090, %v3523
        %v3652 = vmul.f32 %v3092, %v3524
        %v3653 = vmul.f32 %v3094, %v3525
        %v3654 = vmul.f32 %v3096, %v3526
        %v3655 = vmul.f32 %v3098, %v3527
        %v3656 = vmul.f32 %v3100, %v3528
        %v3657 = vmul.f32 %v3102, %v3529
        %v3658 = vmul.f32 %v3104, %v3530
        %v3659 = vmul.f32 %v3106, %v3531
        %v3660 = vmul.f32 %v3108, %v3532
        %v3661 = vmul.f32 %v3110, %v3533
        %v3662 = vmul.f32 %v3112, %v3534
        %v3663 = vmul.f32 %v3114, %v3535
        %v3664 = vmul.f32 %v3116, %v3536
        %v3665 = vmul.f32 %v3118, %v3537
        %v3666 = vmul.f32 %v3120, %v3538
        %v3667 = vmul.f32 %v3122, %v3539
        %v3668 = vmul.f32 %v3124, %v3540
        %v3669 = vmul.f32 %v3126, %v3541
        %v3670 = vmul.f32 %v3128, %v3542
        %v3671 = vmul.f32 %v3130, %v3543
        %v3672 = vmul.f32 %v3132, %v3544
        %v3673 = vmul.f32 %v3134, %v3545
        %v3674 = vmul.f32 %v3136, %v3546
        %v3675 = vmul.f32 %v3138, %v3547
        %v3676 = vmul.f32 %v3140, %v3548
        %v3677 = vmul.f32 %v3142, %v3549
        %v3678 = vmul.f32 %v3144, %v3550
        %v3679 = vmul.f32 %v3146, %v3551
        %v3680 = vmul.f32 %v3148, %v3552
        %v3681 = vmul.f32 %v3150, %v3553
        %v3682 = vmul.f32 %v3152, %v3554
        %v3683 = vmul.f32 %v3154, %v3555
        %v3684 = vmul.f32 %v3156, %v3556
        %v3685 = vmul.f32 %v3158, %v3557
        %v3686 = vmul.f32 %v3160, %v3558
        %v3687 = vmul.f32 %v3162, %v3559
        %v3688 = vmul.f32 %v3164, %v3560
        %v3689 = vmul.f32 %v3166, %v3561
        %v3690 = vmul.f32 %v3168, %v3562
        %v3691 = vmul.f32 %v3170, %v3563
        %v3692 = vmul.f32 %v3172, %v3564
        %v3693 = vmul.f32 %v3174, %v3565
        %v3694 = vmul.f32 %v3176, %v3566
        %v3695 = vmul.f32 %v3178, %v3567
        %v3696 = vmul.f32 %v3180, %v3568
        %v3697 = vmul.f32 %v3182, %v3569
        %v3698 = vmul.f32 %v3184, %v3570
        %v3699 = vmul.f32 %v3186, %v3571
        %v3700 = vmul.f32 %v3188, %v3572
        %v3701 = vpack.c.bf16 %v3574, %v3573
        %v3702 = vpack.c.bf16 %v3576, %v3575
        %v3703 = vpack.c.bf16 %v3578, %v3577
        %v3704 = vpack.c.bf16 %v3580, %v3579
        %v3705 = vpack.c.bf16 %v3582, %v3581
        %v3706 = vpack.c.bf16 %v3584, %v3583
        %v3707 = vpack.c.bf16 %v3586, %v3585
        %v3708 = vpack.c.bf16 %v3588, %v3587
        %v3709 = vpack.c.bf16 %v3590, %v3589
        %v3710 = vpack.c.bf16 %v3592, %v3591
        %v3711 = vpack.c.bf16 %v3594, %v3593
        %v3712 = vpack.c.bf16 %v3596, %v3595
        %v3713 = vpack.c.bf16 %v3598, %v3597
        %v3714 = vpack.c.bf16 %v3600, %v3599
        %v3715 = vpack.c.bf16 %v3602, %v3601
        %v3716 = vpack.c.bf16 %v3604, %v3603
        %v3717 = vpack.c.bf16 %v3606, %v3605
        %v3718 = vpack.c.bf16 %v3608, %v3607
        %v3719 = vpack.c.bf16 %v3610, %v3609
        %v3720 = vpack.c.bf16 %v3612, %v3611
        %v3721 = vpack.c.bf16 %v3614, %v3613
        %v3722 = vpack.c.bf16 %v3616, %v3615
        %v3723 = vpack.c.bf16 %v3618, %v3617
        %v3724 = vpack.c.bf16 %v3620, %v3619
        %v3725 = vpack.c.bf16 %v3622, %v3621
        %v3726 = vpack.c.bf16 %v3624, %v3623
        %v3727 = vpack.c.bf16 %v3626, %v3625
        %v3728 = vpack.c.bf16 %v3628, %v3627
        %v3729 = vpack.c.bf16 %v3630, %v3629
        %v3730 = vpack.c.bf16 %v3632, %v3631
        %v3731 = vpack.c.bf16 %v3634, %v3633
        %v3732 = vpack.c.bf16 %v3636, %v3635
        %v3733 = vpack.c.bf16 %v3638, %v3637
        %v3734 = vpack.c.bf16 %v3640, %v3639
        %v3735 = vpack.c.bf16 %v3642, %v3641
        %v3736 = vpack.c.bf16 %v3644, %v3643
        %v3737 = vpack.c.bf16 %v3646, %v3645
        %v3738 = vpack.c.bf16 %v3648, %v3647
        %v3739 = vpack.c.bf16 %v3650, %v3649
        %v3740 = vpack.c.bf16 %v3652, %v3651
        %v3741 = vpack.c.bf16 %v3654, %v3653
        %v3742 = vpack.c.bf16 %v3656, %v3655
        %v3743 = vpack.c.bf16 %v3658, %v3657
        %v3744 = vpack.c.bf16 %v3660, %v3659
        %v3745 = vpack.c.bf16 %v3662, %v3661
        %v3746 = vpack.c.bf16 %v3664, %v3663
        %v3747 = vpack.c.bf16 %v3666, %v3665
        %v3748 = vpack.c.bf16 %v3668, %v3667
        %v3749 = vpack.c.bf16 %v3670, %v3669
        %v3750 = vpack.c.bf16 %v3672, %v3671
        %v3751 = vpack.c.bf16 %v3674, %v3673
        %v3752 = vpack.c.bf16 %v3676, %v3675
        %v3753 = vpack.c.bf16 %v3678, %v3677
        %v3754 = vpack.c.bf16 %v3680, %v3679
        %v3755 = vpack.c.bf16 %v3682, %v3681
        %v3756 = vpack.c.bf16 %v3684, %v3683
        %v3757 = vpack.c.bf16 %v3686, %v3685
        %v3758 = vpack.c.bf16 %v3688, %v3687
        %v3759 = vpack.c.bf16 %v3690, %v3689
        %v3760 = vpack.c.bf16 %v3692, %v3691
        %v3761 = vpack.c.bf16 %v3694, %v3693
        %v3762 = vpack.c.bf16 %v3696, %v3695
        %v3763 = vpack.c.bf16 %v3698, %v3697
        %v3764 = vpack.c.bf16 %v3700, %v3699
        %3765 = vmatprep.subr.bf16.mxu0 0
        %3766 = vmatpush1.bf16.msra.mxu0 %v957
        %3767 = vmatprep.subr.bf16.mxu0 0
        %3768 = vmatpush1.bf16.msra.mxu0 %v959
        %3769 = vmatprep.subr.bf16.mxu0 0
        %3770 = vmatpush1.bf16.msra.mxu0 %v961
        %3771 = vmatprep.subr.bf16.mxu0 0
        %3772 = vmatpush1.bf16.msra.mxu0 %v963
        %3773 = vmatprep.subr.bf16.mxu0 0
        %3774 = vmatpush1.bf16.msra.mxu0 %v965
        %3775 = vmatprep.subr.bf16.mxu0 0
        %3776 = vmatpush1.bf16.msra.mxu0 %v967
        %3777 = vmatprep.subr.bf16.mxu0 0
        %3778 = vmatpush1.bf16.msra.mxu0 %v969
        %3779 = vmatprep.subr.bf16.mxu0 0
        %3780 = vmatpush1.bf16.msra.mxu0 %v971
        %3781 = vmatprep.subr.bf16.mxu0 0
        %3782 = vmatpush1.bf16.msra.mxu0 0
        %3783 = vmatprep.subr.bf16.mxu0 0
        %3784 = vmatpush1.bf16.msra.mxu0 0
        %3785 = vmatprep.subr.bf16.mxu0 0
        %3786 = vmatpush1.bf16.msra.mxu0 0
        %3787 = vmatprep.subr.bf16.mxu0 0
        %3788 = vmatpush1.bf16.msra.mxu0 0
        %3789 = vmatprep.subr.bf16.mxu0 0
        %3790 = vmatpush1.bf16.msra.mxu0 0
        %3791 = vmatprep.subr.bf16.mxu0 0
        %3792 = vmatpush1.bf16.msra.mxu0 0
        %3793 = vmatprep.subr.bf16.mxu0 0
        %3794 = vmatpush1.bf16.msra.mxu0 0
        %3795 = vmatprep.subr.bf16.mxu0 0
        %3796 = vmatpush1.bf16.msra.mxu0 0
        %3797 = vmatprep.mubr.bf16.mxu0 0
        %3798 = vmatmul.mubr.bf16.gmra.mrb[0].mxu0 %v3701
        %v3799 = vpop.f32.mrb[0].mxu0
        %v3800 = vadd.f32 0.0, %v3799
        %v3801 = vpop.f32.mrb[0].mxu0
        %v3802 = vpop.f32.mrb[0].mxu0
        %v3803 = vadd.f32 0.0, %v3802
        %v3804 = vpop.f32.mrb[0].mxu0
        %3805 = vmatprep.mubr.bf16.mxu0 0
        %3806 = vmatmul.mubr.bf16.gmra.mrb[0].mxu0 %v3702
        %v3807 = vpop.f32.mrb[0].mxu0
        %v3808 = vadd.f32 0.0, %v3807
        %v3809 = vpop.f32.mrb[0].mxu0
        %v3810 = vpop.f32.mrb[0].mxu0
        %v3811 = vadd.f32 0.0, %v3810
        %v3812 = vpop.f32.mrb[0].mxu0
        %3813 = vmatprep.mubr.bf16.mxu0 0
        %3814 = vmatmul.mubr.bf16.gmra.mrb[0].mxu0 %v3703
        %v3815 = vpop.f32.mrb[0].mxu0
        %v3816 = vadd.f32 0.0, %v3815
        %v3817 = vpop.f32.mrb[0].mxu0
        %v3818 = vpop.f32.mrb[0].mxu0
        %v3819 = vadd.f32 0.0, %v3818
        %v3820 = vpop.f32.mrb[0].mxu0
        %3821 = vmatprep.mubr.bf16.mxu0 0
        %3822 = vmatmul.mubr.bf16.gmra.mrb[0].mxu0 %v3704
        %v3823 = vpop.f32.mrb[0].mxu0
        %v3824 = vadd.f32 0.0, %v3823
        %v3825 = vpop.f32.mrb[0].mxu0
        %v3826 = vpop.f32.mrb[0].mxu0
        %v3827 = vadd.f32 0.0, %v3826
        %v3828 = vpop.f32.mrb[0].mxu0
        %3829 = vmatprep.mubr.bf16.mxu0 0
        %3830 = vmatmul.mubr.bf16.gmra.mrb[0].mxu0 %v3705
        %v3831 = vpop.f32.mrb[0].mxu0
        %v3832 = vadd.f32 0.0, %v3831
        %v3833 = vpop.f32.mrb[0].mxu0
        %v3834 = vpop.f32.mrb[0].mxu0
        %v3835 = vadd.f32 0.0, %v3834
        %v3836 = vpop.f32.mrb[0].mxu0
        %3837 = vmatprep.mubr.bf16.mxu0 0
        %3838 = vmatmul.mubr.bf16.gmra.mrb[0].mxu0 %v3706
        %v3839 = vpop.f32.mrb[0].mxu0
        %v3840 = vadd.f32 0.0, %v3839
        %v3841 = vpop.f32.mrb[0].mxu0
        %v3842 = vpop.f32.mrb[0].mxu0
        %v3843 = vadd.f32 0.0, %v3842
        %v3844 = vpop.f32.mrb[0].mxu0
        %3845 = vmatprep.mubr.bf16.mxu0 0
        %3846 = vmatmul.mubr.bf16.gmra.mrb[0].mxu0 %v3707
        %v3847 = vpop.f32.mrb[0].mxu0
        %v3848 = vadd.f32 0.0, %v3847
        %v3849 = vpop.f32.mrb[0].mxu0
        %v3850 = vpop.f32.mrb[0].mxu0
        %v3851 = vadd.f32 0.0, %v3850
        %v3852 = vpop.f32.mrb[0].mxu0
        %3853 = vmatprep.mubr.bf16.mxu0 0
        %3854 = vmatmul.mubr.bf16.gmra.mrb[0].mxu0 %v3708
        %v3855 = vpop.f32.mrb[0].mxu0
        %v3856 = vadd.f32 0.0, %v3855
        %v3857 = vpop.f32.mrb[0].mxu0
        %v3858 = vpop.f32.mrb[0].mxu0
        %v3859 = vadd.f32 0.0, %v3858
        %v3860 = vpop.f32.mrb[0].mxu0
        %3861 = vdwg.mxu0
        %3862 = vmatprep.subr.bf16.mxu0 0
        %3863 = vmatpush1.bf16.msra.mxu0 %v1221
        %3864 = vmatprep.subr.bf16.mxu0 0
        %3865 = vmatpush1.bf16.msra.mxu0 %v1223
        %3866 = vmatprep.subr.bf16.mxu0 0
        %3867 = vmatpush1.bf16.msra.mxu0 %v1225
        %3868 = vmatprep.subr.bf16.mxu0 0
        %3869 = vmatpush1.bf16.msra.mxu0 %v1227
        %3870 = vmatprep.subr.bf16.mxu0 0
        %3871 = vmatpush1.bf16.msra.mxu0 %v1229
        %3872 = vmatprep.subr.bf16.mxu0 0
        %3873 = vmatpush1.bf16.msra.mxu0 %v1231
        %3874 = vmatprep.subr.bf16.mxu0 0
        %3875 = vmatpush1.bf16.msra.mxu0 %v1233
        %3876 = vmatprep.subr.bf16.mxu0 0
        %3877 = vmatpush1.bf16.msra.mxu0 %v1235
        %3878 = vmatprep.subr.bf16.mxu0 0
        %3879 = vmatpush1.bf16.msra.mxu0 0
        %3880 = vmatprep.subr.bf16.mxu0 0
        %3881 = vmatpush1.bf16.msra.mxu0 0
        %3882 = vmatprep.subr.bf16.mxu0 0
        %3883 = vmatpush1.bf16.msra.mxu0 0
        %3884 = vmatprep.subr.bf16.mxu0 0
        %3885 = vmatpush1.bf16.msra.mxu0 0
        %3886 = vmatprep.subr.bf16.mxu0 0
        %3887 = vmatpush1.bf16.msra.mxu0 0
        %3888 = vmatprep.subr.bf16.mxu0 0
        %3889 = vmatpush1.bf16.msra.mxu0 0
        %3890 = vmatprep.subr.bf16.mxu0 0
        %3891 = vmatpush1.bf16.msra.mxu0 0
        %3892 = vmatprep.subr.bf16.mxu0 0
        %3893 = vmatpush1.bf16.msra.mxu0 0
        %3894 = vmatprep.mubr.bf16.mxu0 0
        %3895 = vmatmul.mubr.bf16.gmra.mrb[0].mxu0 %v3709
        %v3896 = vpop.f32.mrb[0].mxu0
        %v3897 = vadd.f32 0.0, %v3896
        %v3898 = vpop.f32.mrb[0].mxu0
        %v3899 = vpop.f32.mrb[0].mxu0
        %v3900 = vadd.f32 0.0, %v3899
        %v3901 = vpop.f32.mrb[0].mxu0
        %3902 = vmatprep.mubr.bf16.mxu0 0
        %3903 = vmatmul.mubr.bf16.gmra.mrb[0].mxu0 %v3710
        %v3904 = vpop.f32.mrb[0].mxu0
        %v3905 = vadd.f32 0.0, %v3904
        %v3906 = vpop.f32.mrb[0].mxu0
        %v3907 = vpop.f32.mrb[0].mxu0
        %v3908 = vadd.f32 0.0, %v3907
        %v3909 = vpop.f32.mrb[0].mxu0
        %3910 = vmatprep.mubr.bf16.mxu0 0
        %3911 = vmatmul.mubr.bf16.gmra.mrb[0].mxu0 %v3711
        %v3912 = vpop.f32.mrb[0].mxu0
        %v3913 = vadd.f32 0.0, %v3912
        %v3914 = vpop.f32.mrb[0].mxu0
        %v3915 = vpop.f32.mrb[0].mxu0
        %v3916 = vadd.f32 0.0, %v3915
        %v3917 = vpop.f32.mrb[0].mxu0
        %3918 = vmatprep.mubr.bf16.mxu0 0
        %3919 = vmatmul.mubr.bf16.gmra.mrb[0].mxu0 %v3712
        %v3920 = vpop.f32.mrb[0].mxu0
        %v3921 = vadd.f32 0.0, %v3920
        %v3922 = vpop.f32.mrb[0].mxu0
        %v3923 = vpop.f32.mrb[0].mxu0
        %v3924 = vadd.f32 0.0, %v3923
        %v3925 = vpop.f32.mrb[0].mxu0
        %3926 = vmatprep.mubr.bf16.mxu0 0
        %3927 = vmatmul.mubr.bf16.gmra.mrb[0].mxu0 %v3713
        %v3928 = vpop.f32.mrb[0].mxu0
        %v3929 = vadd.f32 0.0, %v3928
        %v3930 = vpop.f32.mrb[0].mxu0
        %v3931 = vpop.f32.mrb[0].mxu0
        %v3932 = vadd.f32 0.0, %v3931
        %v3933 = vpop.f32.mrb[0].mxu0
        %3934 = vmatprep.mubr.bf16.mxu0 0
        %3935 = vmatmul.mubr.bf16.gmra.mrb[0].mxu0 %v3714
        %v3936 = vpop.f32.mrb[0].mxu0
        %v3937 = vadd.f32 0.0, %v3936
        %v3938 = vpop.f32.mrb[0].mxu0
        %v3939 = vpop.f32.mrb[0].mxu0
        %v3940 = vadd.f32 0.0, %v3939
        %v3941 = vpop.f32.mrb[0].mxu0
        %3942 = vmatprep.mubr.bf16.mxu0 0
        %3943 = vmatmul.mubr.bf16.gmra.mrb[0].mxu0 %v3715
        %v3944 = vpop.f32.mrb[0].mxu0
        %v3945 = vadd.f32 0.0, %v3944
        %v3946 = vpop.f32.mrb[0].mxu0
        %v3947 = vpop.f32.mrb[0].mxu0
        %v3948 = vadd.f32 0.0, %v3947
        %v3949 = vpop.f32.mrb[0].mxu0
        %3950 = vmatprep.mubr.bf16.mxu0 0
        %3951 = vmatmul.mubr.bf16.gmra.mrb[0].mxu0 %v3716
        %v3952 = vpop.f32.mrb[0].mxu0
        %v3953 = vadd.f32 0.0, %v3952
        %v3954 = vpop.f32.mrb[0].mxu0
        %v3955 = vpop.f32.mrb[0].mxu0
        %v3956 = vadd.f32 0.0, %v3955
        %v3957 = vpop.f32.mrb[0].mxu0
        %3958 = vdwg.mxu0
        %3959 = vmatprep.subr.bf16.mxu0 0
        %3960 = vmatpush1.bf16.msra.mxu0 %v1245
        %3961 = vmatprep.subr.bf16.mxu0 0
        %3962 = vmatpush1.bf16.msra.mxu0 %v1247
        %3963 = vmatprep.subr.bf16.mxu0 0
        %3964 = vmatpush1.bf16.msra.mxu0 %v1249
        %3965 = vmatprep.subr.bf16.mxu0 0
        %3966 = vmatpush1.bf16.msra.mxu0 %v1251
        %3967 = vmatprep.subr.bf16.mxu0 0
        %3968 = vmatpush1.bf16.msra.mxu0 %v1253
        %3969 = vmatprep.subr.bf16.mxu0 0
        %3970 = vmatpush1.bf16.msra.mxu0 %v1255
        %3971 = vmatprep.subr.bf16.mxu0 0
        %3972 = vmatpush1.bf16.msra.mxu0 %v1257
        %3973 = vmatprep.subr.bf16.mxu0 0
        %3974 = vmatpush1.bf16.msra.mxu0 %v1259
        %3975 = vmatprep.subr.bf16.mxu0 0
        %3976 = vmatpush1.bf16.msra.mxu0 0
        %3977 = vmatprep.subr.bf16.mxu0 0
        %3978 = vmatpush1.bf16.msra.mxu0 0
        %3979 = vmatprep.subr.bf16.mxu0 0
        %3980 = vmatpush1.bf16.msra.mxu0 0
        %3981 = vmatprep.subr.bf16.mxu0 0
        %3982 = vmatpush1.bf16.msra.mxu0 0
        %3983 = vmatprep.subr.bf16.mxu0 0
        %3984 = vmatpush1.bf16.msra.mxu0 0
        %3985 = vmatprep.subr.bf16.mxu0 0
        %3986 = vmatpush1.bf16.msra.mxu0 0
        %3987 = vmatprep.subr.bf16.mxu0 0
        %3988 = vmatpush1.bf16.msra.mxu0 0
        %3989 = vmatprep.subr.bf16.mxu0 0
        %3990 = vmatpush1.bf16.msra.mxu0 0
        %3991 = vmatprep.mubr.bf16.mxu0 0
        %3992 = vmatmul.mubr.bf16.gmra.mrb[0].mxu0 %v3717
        %v3993 = vpop.f32.mrb[0].mxu0
        %v3994 = vadd.f32 0.0, %v3993
        %v3995 = vpop.f32.mrb[0].mxu0
        %v3996 = vpop.f32.mrb[0].mxu0
        %v3997 = vadd.f32 0.0, %v3996
        %v3998 = vpop.f32.mrb[0].mxu0
        %3999 = vmatprep.mubr.bf16.mxu0 0
        %4000 = vmatmul.mubr.bf16.gmra.mrb[0].mxu0 %v3718
        %v4001 = vpop.f32.mrb[0].mxu0
        %v4002 = vadd.f32 0.0, %v4001
        %v4003 = vpop.f32.mrb[0].mxu0
        %v4004 = vpop.f32.mrb[0].mxu0
        %v4005 = vadd.f32 0.0, %v4004
        %v4006 = vpop.f32.mrb[0].mxu0
        %4007 = vmatprep.mubr.bf16.mxu0 0
        %4008 = vmatmul.mubr.bf16.gmra.mrb[0].mxu0 %v3719
        %v4009 = vpop.f32.mrb[0].mxu0
        %v4010 = vadd.f32 0.0, %v4009
        %v4011 = vpop.f32.mrb[0].mxu0
        %v4012 = vpop.f32.mrb[0].mxu0
        %v4013 = vadd.f32 0.0, %v4012
        %v4014 = vpop.f32.mrb[0].mxu0
        %4015 = vmatprep.mubr.bf16.mxu0 0
        %4016 = vmatmul.mubr.bf16.gmra.mrb[0].mxu0 %v3720
        %v4017 = vpop.f32.mrb[0].mxu0
        %v4018 = vadd.f32 0.0, %v4017
        %v4019 = vpop.f32.mrb[0].mxu0
        %v4020 = vpop.f32.mrb[0].mxu0
        %v4021 = vadd.f32 0.0, %v4020
        %v4022 = vpop.f32.mrb[0].mxu0
        %4023 = vmatprep.mubr.bf16.mxu0 0
        %4024 = vmatmul.mubr.bf16.gmra.mrb[0].mxu0 %v3721
        %v4025 = vpop.f32.mrb[0].mxu0
        %v4026 = vadd.f32 0.0, %v4025
        %v4027 = vpop.f32.mrb[0].mxu0
        %v4028 = vpop.f32.mrb[0].mxu0
        %v4029 = vadd.f32 0.0, %v4028
        %v4030 = vpop.f32.mrb[0].mxu0
        %4031 = vmatprep.mubr.bf16.mxu0 0
        %4032 = vmatmul.mubr.bf16.gmra.mrb[0].mxu0 %v3722
        %v4033 = vpop.f32.mrb[0].mxu0
        %v4034 = vadd.f32 0.0, %v4033
        %v4035 = vpop.f32.mrb[0].mxu0
        %v4036 = vpop.f32.mrb[0].mxu0
        %v4037 = vadd.f32 0.0, %v4036
        %v4038 = vpop.f32.mrb[0].mxu0
        %4039 = vmatprep.mubr.bf16.mxu0 0
        %4040 = vmatmul.mubr.bf16.gmra.mrb[0].mxu0 %v3723
        %v4041 = vpop.f32.mrb[0].mxu0
        %v4042 = vadd.f32 0.0, %v4041
        %v4043 = vpop.f32.mrb[0].mxu0
        %v4044 = vpop.f32.mrb[0].mxu0
        %v4045 = vadd.f32 0.0, %v4044
        %v4046 = vpop.f32.mrb[0].mxu0
        %4047 = vmatprep.mubr.bf16.mxu0 0
        %4048 = vmatmul.mubr.bf16.gmra.mrb[0].mxu0 %v3724
        %v4049 = vpop.f32.mrb[0].mxu0
        %v4050 = vadd.f32 0.0, %v4049
        %v4051 = vpop.f32.mrb[0].mxu0
        %v4052 = vpop.f32.mrb[0].mxu0
        %v4053 = vadd.f32 0.0, %v4052
        %v4054 = vpop.f32.mrb[0].mxu0
        %4055 = vdwg.mxu0
        %4056 = vmatprep.subr.bf16.mxu0 0
        %4057 = vmatpush1.bf16.msra.mxu0 %v1269
        %4058 = vmatprep.subr.bf16.mxu0 0
        %4059 = vmatpush1.bf16.msra.mxu0 %v1271
        %4060 = vmatprep.subr.bf16.mxu0 0
        %4061 = vmatpush1.bf16.msra.mxu0 %v1273
        %4062 = vmatprep.subr.bf16.mxu0 0
        %4063 = vmatpush1.bf16.msra.mxu0 %v1275
        %4064 = vmatprep.subr.bf16.mxu0 0
        %4065 = vmatpush1.bf16.msra.mxu0 %v1277
        %4066 = vmatprep.subr.bf16.mxu0 0
        %4067 = vmatpush1.bf16.msra.mxu0 %v1279
        %4068 = vmatprep.subr.bf16.mxu0 0
        %4069 = vmatpush1.bf16.msra.mxu0 %v1281
        %4070 = vmatprep.subr.bf16.mxu0 0
        %4071 = vmatpush1.bf16.msra.mxu0 %v1283
        %4072 = vmatprep.subr.bf16.mxu0 0
        %4073 = vmatpush1.bf16.msra.mxu0 0
        %4074 = vmatprep.subr.bf16.mxu0 0
        %4075 = vmatpush1.bf16.msra.mxu0 0
        %4076 = vmatprep.subr.bf16.mxu0 0
        %4077 = vmatpush1.bf16.msra.mxu0 0
        %4078 = vmatprep.subr.bf16.mxu0 0
        %4079 = vmatpush1.bf16.msra.mxu0 0
        %4080 = vmatprep.subr.bf16.mxu0 0
        %4081 = vmatpush1.bf16.msra.mxu0 0
        %4082 = vmatprep.subr.bf16.mxu0 0
        %4083 = vmatpush1.bf16.msra.mxu0 0
        %4084 = vmatprep.subr.bf16.mxu0 0
        %4085 = vmatpush1.bf16.msra.mxu0 0
        %4086 = vmatprep.subr.bf16.mxu0 0
        %4087 = vmatpush1.bf16.msra.mxu0 0
        %4088 = vmatprep.mubr.bf16.mxu0 0
        %4089 = vmatmul.mubr.bf16.gmra.mrb[0].mxu0 %v3725
        %v4090 = vpop.f32.mrb[0].mxu0
        %v4091 = vadd.f32 0.0, %v4090
        %v4092 = vpop.f32.mrb[0].mxu0
        %v4093 = vpop.f32.mrb[0].mxu0
        %v4094 = vadd.f32 0.0, %v4093
        %v4095 = vpop.f32.mrb[0].mxu0
        %4096 = vmatprep.mubr.bf16.mxu0 0
        %4097 = vmatmul.mubr.bf16.gmra.mrb[0].mxu0 %v3726
        %v4098 = vpop.f32.mrb[0].mxu0
        %v4099 = vadd.f32 0.0, %v4098
        %v4100 = vpop.f32.mrb[0].mxu0
        %v4101 = vpop.f32.mrb[0].mxu0
        %v4102 = vadd.f32 0.0, %v4101
        %v4103 = vpop.f32.mrb[0].mxu0
        %4104 = vmatprep.mubr.bf16.mxu0 0
        %4105 = vmatmul.mubr.bf16.gmra.mrb[0].mxu0 %v3727
        %v4106 = vpop.f32.mrb[0].mxu0
        %v4107 = vadd.f32 0.0, %v4106
        %v4108 = vpop.f32.mrb[0].mxu0
        %v4109 = vpop.f32.mrb[0].mxu0
        %v4110 = vadd.f32 0.0, %v4109
        %v4111 = vpop.f32.mrb[0].mxu0
        %4112 = vmatprep.mubr.bf16.mxu0 0
        %4113 = vmatmul.mubr.bf16.gmra.mrb[0].mxu0 %v3728
        %v4114 = vpop.f32.mrb[0].mxu0
        %v4115 = vadd.f32 0.0, %v4114
        %v4116 = vpop.f32.mrb[0].mxu0
        %v4117 = vpop.f32.mrb[0].mxu0
        %v4118 = vadd.f32 0.0, %v4117
        %v4119 = vpop.f32.mrb[0].mxu0
        %4120 = vmatprep.mubr.bf16.mxu0 0
        %4121 = vmatmul.mubr.bf16.gmra.mrb[0].mxu0 %v3729
        %v4122 = vpop.f32.mrb[0].mxu0
        %v4123 = vadd.f32 0.0, %v4122
        %v4124 = vpop.f32.mrb[0].mxu0
        %v4125 = vpop.f32.mrb[0].mxu0
        %v4126 = vadd.f32 0.0, %v4125
        %v4127 = vpop.f32.mrb[0].mxu0
        %4128 = vmatprep.mubr.bf16.mxu0 0
        %4129 = vmatmul.mubr.bf16.gmra.mrb[0].mxu0 %v3730
        %v4130 = vpop.f32.mrb[0].mxu0
        %v4131 = vadd.f32 0.0, %v4130
        %v4132 = vpop.f32.mrb[0].mxu0
        %v4133 = vpop.f32.mrb[0].mxu0
        %v4134 = vadd.f32 0.0, %v4133
        %v4135 = vpop.f32.mrb[0].mxu0
        %4136 = vmatprep.mubr.bf16.mxu0 0
        %4137 = vmatmul.mubr.bf16.gmra.mrb[0].mxu0 %v3731
        %v4138 = vpop.f32.mrb[0].mxu0
        %v4139 = vadd.f32 0.0, %v4138
        %v4140 = vpop.f32.mrb[0].mxu0
        %v4141 = vpop.f32.mrb[0].mxu0
        %v4142 = vadd.f32 0.0, %v4141
        %v4143 = vpop.f32.mrb[0].mxu0
        %4144 = vmatprep.mubr.bf16.mxu0 0
        %4145 = vmatmul.mubr.bf16.gmra.mrb[0].mxu0 %v3732
        %v4146 = vpop.f32.mrb[0].mxu0
        %v4147 = vadd.f32 0.0, %v4146
        %v4148 = vpop.f32.mrb[0].mxu0
        %v4149 = vpop.f32.mrb[0].mxu0
        %v4150 = vadd.f32 0.0, %v4149
        %v4151 = vpop.f32.mrb[0].mxu0
        %4152 = vdwg.mxu0
        %4153 = vmatprep.subr.bf16.mxu0 0
        %4154 = vmatpush1.bf16.msra.mxu0 %v1293
        %4155 = vmatprep.subr.bf16.mxu0 0
        %4156 = vmatpush1.bf16.msra.mxu0 %v1295
        %4157 = vmatprep.subr.bf16.mxu0 0
        %4158 = vmatpush1.bf16.msra.mxu0 %v1297
        %4159 = vmatprep.subr.bf16.mxu0 0
        %4160 = vmatpush1.bf16.msra.mxu0 %v1299
        %4161 = vmatprep.subr.bf16.mxu0 0
        %4162 = vmatpush1.bf16.msra.mxu0 %v1301
        %4163 = vmatprep.subr.bf16.mxu0 0
        %4164 = vmatpush1.bf16.msra.mxu0 %v1303
        %4165 = vmatprep.subr.bf16.mxu0 0
        %4166 = vmatpush1.bf16.msra.mxu0 %v1305
        %4167 = vmatprep.subr.bf16.mxu0 0
        %4168 = vmatpush1.bf16.msra.mxu0 %v1307
        %4169 = vmatprep.subr.bf16.mxu0 0
        %4170 = vmatpush1.bf16.msra.mxu0 0
        %4171 = vmatprep.subr.bf16.mxu0 0
        %4172 = vmatpush1.bf16.msra.mxu0 0
        %4173 = vmatprep.subr.bf16.mxu0 0
        %4174 = vmatpush1.bf16.msra.mxu0 0
        %4175 = vmatprep.subr.bf16.mxu0 0
        %4176 = vmatpush1.bf16.msra.mxu0 0
        %4177 = vmatprep.subr.bf16.mxu0 0
        %4178 = vmatpush1.bf16.msra.mxu0 0
        %4179 = vmatprep.subr.bf16.mxu0 0
        %4180 = vmatpush1.bf16.msra.mxu0 0
        %4181 = vmatprep.subr.bf16.mxu0 0
        %4182 = vmatpush1.bf16.msra.mxu0 0
        %4183 = vmatprep.subr.bf16.mxu0 0
        %4184 = vmatpush1.bf16.msra.mxu0 0
        %4185 = vmatprep.mubr.bf16.mxu0 0
        %4186 = vmatmul.mubr.bf16.gmra.mrb[0].mxu0 %v3733
        %v4187 = vpop.f32.mrb[0].mxu0
        %v4188 = vadd.f32 0.0, %v4187
        %v4189 = vpop.f32.mrb[0].mxu0
        %v4190 = vpop.f32.mrb[0].mxu0
        %v4191 = vadd.f32 0.0, %v4190
        %v4192 = vpop.f32.mrb[0].mxu0
        %4193 = vmatprep.mubr.bf16.mxu0 0
        %4194 = vmatmul.mubr.bf16.gmra.mrb[0].mxu0 %v3734
        %v4195 = vpop.f32.mrb[0].mxu0
        %v4196 = vadd.f32 0.0, %v4195
        %v4197 = vpop.f32.mrb[0].mxu0
        %v4198 = vpop.f32.mrb[0].mxu0
        %v4199 = vadd.f32 0.0, %v4198
        %v4200 = vpop.f32.mrb[0].mxu0
        %4201 = vmatprep.mubr.bf16.mxu0 0
        %4202 = vmatmul.mubr.bf16.gmra.mrb[0].mxu0 %v3735
        %v4203 = vpop.f32.mrb[0].mxu0
        %v4204 = vadd.f32 0.0, %v4203
        %v4205 = vpop.f32.mrb[0].mxu0
        %v4206 = vpop.f32.mrb[0].mxu0
        %v4207 = vadd.f32 0.0, %v4206
        %v4208 = vpop.f32.mrb[0].mxu0
        %4209 = vmatprep.mubr.bf16.mxu0 0
        %4210 = vmatmul.mubr.bf16.gmra.mrb[0].mxu0 %v3736
        %v4211 = vpop.f32.mrb[0].mxu0
        %v4212 = vadd.f32 0.0, %v4211
        %v4213 = vpop.f32.mrb[0].mxu0
        %v4214 = vpop.f32.mrb[0].mxu0
        %v4215 = vadd.f32 0.0, %v4214
        %v4216 = vpop.f32.mrb[0].mxu0
        %4217 = vmatprep.mubr.bf16.mxu0 0
        %4218 = vmatmul.mubr.bf16.gmra.mrb[0].mxu0 %v3737
        %v4219 = vpop.f32.mrb[0].mxu0
        %v4220 = vadd.f32 0.0, %v4219
        %v4221 = vpop.f32.mrb[0].mxu0
        %v4222 = vpop.f32.mrb[0].mxu0
        %v4223 = vadd.f32 0.0, %v4222
        %v4224 = vpop.f32.mrb[0].mxu0
        %4225 = vmatprep.mubr.bf16.mxu0 0
        %4226 = vmatmul.mubr.bf16.gmra.mrb[0].mxu0 %v3738
        %v4227 = vpop.f32.mrb[0].mxu0
        %v4228 = vadd.f32 0.0, %v4227
        %v4229 = vpop.f32.mrb[0].mxu0
        %v4230 = vpop.f32.mrb[0].mxu0
        %v4231 = vadd.f32 0.0, %v4230
        %v4232 = vpop.f32.mrb[0].mxu0
        %4233 = vmatprep.mubr.bf16.mxu0 0
        %4234 = vmatmul.mubr.bf16.gmra.mrb[0].mxu0 %v3739
        %v4235 = vpop.f32.mrb[0].mxu0
        %v4236 = vadd.f32 0.0, %v4235
        %v4237 = vpop.f32.mrb[0].mxu0
        %v4238 = vpop.f32.mrb[0].mxu0
        %v4239 = vadd.f32 0.0, %v4238
        %v4240 = vpop.f32.mrb[0].mxu0
        %4241 = vmatprep.mubr.bf16.mxu0 0
        %4242 = vmatmul.mubr.bf16.gmra.mrb[0].mxu0 %v3740
        %v4243 = vpop.f32.mrb[0].mxu0
        %v4244 = vadd.f32 0.0, %v4243
        %v4245 = vpop.f32.mrb[0].mxu0
        %v4246 = vpop.f32.mrb[0].mxu0
        %v4247 = vadd.f32 0.0, %v4246
        %v4248 = vpop.f32.mrb[0].mxu0
        %4249 = vdwg.mxu0
        %4250 = vmatprep.subr.bf16.mxu0 0
        %4251 = vmatpush1.bf16.msra.mxu0 %v1317
        %4252 = vmatprep.subr.bf16.mxu0 0
        %4253 = vmatpush1.bf16.msra.mxu0 %v1319
        %4254 = vmatprep.subr.bf16.mxu0 0
        %4255 = vmatpush1.bf16.msra.mxu0 %v1321
        %4256 = vmatprep.subr.bf16.mxu0 0
        %4257 = vmatpush1.bf16.msra.mxu0 %v1323
        %4258 = vmatprep.subr.bf16.mxu0 0
        %4259 = vmatpush1.bf16.msra.mxu0 %v1325
        %4260 = vmatprep.subr.bf16.mxu0 0
        %4261 = vmatpush1.bf16.msra.mxu0 %v1327
        %4262 = vmatprep.subr.bf16.mxu0 0
        %4263 = vmatpush1.bf16.msra.mxu0 %v1329
        %4264 = vmatprep.subr.bf16.mxu0 0
        %4265 = vmatpush1.bf16.msra.mxu0 %v1331
        %4266 = vmatprep.subr.bf16.mxu0 0
        %4267 = vmatpush1.bf16.msra.mxu0 0
        %4268 = vmatprep.subr.bf16.mxu0 0
        %4269 = vmatpush1.bf16.msra.mxu0 0
        %4270 = vmatprep.subr.bf16.mxu0 0
        %4271 = vmatpush1.bf16.msra.mxu0 0
        %4272 = vmatprep.subr.bf16.mxu0 0
        %4273 = vmatpush1.bf16.msra.mxu0 0
        %4274 = vmatprep.subr.bf16.mxu0 0
        %4275 = vmatpush1.bf16.msra.mxu0 0
        %4276 = vmatprep.subr.bf16.mxu0 0
        %4277 = vmatpush1.bf16.msra.mxu0 0
        %4278 = vmatprep.subr.bf16.mxu0 0
        %4279 = vmatpush1.bf16.msra.mxu0 0
        %4280 = vmatprep.subr.bf16.mxu0 0
        %4281 = vmatpush1.bf16.msra.mxu0 0
        %4282 = vmatprep.mubr.bf16.mxu0 0
        %4283 = vmatmul.mubr.bf16.gmra.mrb[0].mxu0 %v3741
        %v4284 = vpop.f32.mrb[0].mxu0
        %v4285 = vadd.f32 0.0, %v4284
        %v4286 = vpop.f32.mrb[0].mxu0
        %v4287 = vpop.f32.mrb[0].mxu0
        %v4288 = vadd.f32 0.0, %v4287
        %v4289 = vpop.f32.mrb[0].mxu0
        %4290 = vmatprep.mubr.bf16.mxu0 0
        %4291 = vmatmul.mubr.bf16.gmra.mrb[0].mxu0 %v3742
        %v4292 = vpop.f32.mrb[0].mxu0
        %v4293 = vadd.f32 0.0, %v4292
        %v4294 = vpop.f32.mrb[0].mxu0
        %v4295 = vpop.f32.mrb[0].mxu0
        %v4296 = vadd.f32 0.0, %v4295
        %v4297 = vpop.f32.mrb[0].mxu0
        %4298 = vmatprep.mubr.bf16.mxu0 0
        %4299 = vmatmul.mubr.bf16.gmra.mrb[0].mxu0 %v3743
        %v4300 = vpop.f32.mrb[0].mxu0
        %v4301 = vadd.f32 0.0, %v4300
        %v4302 = vpop.f32.mrb[0].mxu0
        %v4303 = vpop.f32.mrb[0].mxu0
        %v4304 = vadd.f32 0.0, %v4303
        %v4305 = vpop.f32.mrb[0].mxu0
        %4306 = vmatprep.mubr.bf16.mxu0 0
        %4307 = vmatmul.mubr.bf16.gmra.mrb[0].mxu0 %v3744
        %v4308 = vpop.f32.mrb[0].mxu0
        %v4309 = vadd.f32 0.0, %v4308
        %v4310 = vpop.f32.mrb[0].mxu0
        %v4311 = vpop.f32.mrb[0].mxu0
        %v4312 = vadd.f32 0.0, %v4311
        %v4313 = vpop.f32.mrb[0].mxu0
        %4314 = vmatprep.mubr.bf16.mxu0 0
        %4315 = vmatmul.mubr.bf16.gmra.mrb[0].mxu0 %v3745
        %v4316 = vpop.f32.mrb[0].mxu0
        %v4317 = vadd.f32 0.0, %v4316
        %v4318 = vpop.f32.mrb[0].mxu0
        %v4319 = vpop.f32.mrb[0].mxu0
        %v4320 = vadd.f32 0.0, %v4319
        %v4321 = vpop.f32.mrb[0].mxu0
        %4322 = vmatprep.mubr.bf16.mxu0 0
        %4323 = vmatmul.mubr.bf16.gmra.mrb[0].mxu0 %v3746
        %v4324 = vpop.f32.mrb[0].mxu0
        %v4325 = vadd.f32 0.0, %v4324
        %v4326 = vpop.f32.mrb[0].mxu0
        %v4327 = vpop.f32.mrb[0].mxu0
        %v4328 = vadd.f32 0.0, %v4327
        %v4329 = vpop.f32.mrb[0].mxu0
        %4330 = vmatprep.mubr.bf16.mxu0 0
        %4331 = vmatmul.mubr.bf16.gmra.mrb[0].mxu0 %v3747
        %v4332 = vpop.f32.mrb[0].mxu0
        %v4333 = vadd.f32 0.0, %v4332
        %v4334 = vpop.f32.mrb[0].mxu0
        %v4335 = vpop.f32.mrb[0].mxu0
        %v4336 = vadd.f32 0.0, %v4335
        %v4337 = vpop.f32.mrb[0].mxu0
        %4338 = vmatprep.mubr.bf16.mxu0 0
        %4339 = vmatmul.mubr.bf16.gmra.mrb[0].mxu0 %v3748
        %v4340 = vpop.f32.mrb[0].mxu0
        %v4341 = vadd.f32 0.0, %v4340
        %v4342 = vpop.f32.mrb[0].mxu0
        %v4343 = vpop.f32.mrb[0].mxu0
        %v4344 = vadd.f32 0.0, %v4343
        %v4345 = vpop.f32.mrb[0].mxu0
        %4346 = vdwg.mxu0
        %4347 = vmatprep.subr.bf16.mxu0 0
        %4348 = vmatpush1.bf16.msra.mxu0 %v1341
        %4349 = vmatprep.subr.bf16.mxu0 0
        %4350 = vmatpush1.bf16.msra.mxu0 %v1343
        %4351 = vmatprep.subr.bf16.mxu0 0
        %4352 = vmatpush1.bf16.msra.mxu0 %v1345
        %4353 = vmatprep.subr.bf16.mxu0 0
        %4354 = vmatpush1.bf16.msra.mxu0 %v1347
        %4355 = vmatprep.subr.bf16.mxu0 0
        %4356 = vmatpush1.bf16.msra.mxu0 %v1349
        %4357 = vmatprep.subr.bf16.mxu0 0
        %4358 = vmatpush1.bf16.msra.mxu0 %v1351
        %4359 = vmatprep.subr.bf16.mxu0 0
        %4360 = vmatpush1.bf16.msra.mxu0 %v1353
        %4361 = vmatprep.subr.bf16.mxu0 0
        %4362 = vmatpush1.bf16.msra.mxu0 %v1355
        %4363 = vmatprep.subr.bf16.mxu0 0
        %4364 = vmatpush1.bf16.msra.mxu0 0
        %4365 = vmatprep.subr.bf16.mxu0 0
        %4366 = vmatpush1.bf16.msra.mxu0 0
        %4367 = vmatprep.subr.bf16.mxu0 0
        %4368 = vmatpush1.bf16.msra.mxu0 0
        %4369 = vmatprep.subr.bf16.mxu0 0
        %4370 = vmatpush1.bf16.msra.mxu0 0
        %4371 = vmatprep.subr.bf16.mxu0 0
        %4372 = vmatpush1.bf16.msra.mxu0 0
        %4373 = vmatprep.subr.bf16.mxu0 0
        %4374 = vmatpush1.bf16.msra.mxu0 0
        %4375 = vmatprep.subr.bf16.mxu0 0
        %4376 = vmatpush1.bf16.msra.mxu0 0
        %4377 = vmatprep.subr.bf16.mxu0 0
        %4378 = vmatpush1.bf16.msra.mxu0 0
        %4379 = vmatprep.mubr.bf16.mxu0 0
        %4380 = vmatmul.mubr.bf16.gmra.mrb[0].mxu0 %v3749
        %v4381 = vpop.f32.mrb[0].mxu0
        %v4382 = vadd.f32 0.0, %v4381
        %v4383 = vpop.f32.mrb[0].mxu0
        %v4384 = vpop.f32.mrb[0].mxu0
        %v4385 = vadd.f32 0.0, %v4384
        %v4386 = vpop.f32.mrb[0].mxu0
        %4387 = vmatprep.mubr.bf16.mxu0 0
        %4388 = vmatmul.mubr.bf16.gmra.mrb[0].mxu0 %v3750
        %v4389 = vpop.f32.mrb[0].mxu0
        %v4390 = vadd.f32 0.0, %v4389
        %v4391 = vpop.f32.mrb[0].mxu0
        %v4392 = vpop.f32.mrb[0].mxu0
        %v4393 = vadd.f32 0.0, %v4392
        %v4394 = vpop.f32.mrb[0].mxu0
        %4395 = vmatprep.mubr.bf16.mxu0 0
        %4396 = vmatmul.mubr.bf16.gmra.mrb[0].mxu0 %v3751
        %v4397 = vpop.f32.mrb[0].mxu0
        %v4398 = vadd.f32 0.0, %v4397
        %v4399 = vpop.f32.mrb[0].mxu0
        %v4400 = vpop.f32.mrb[0].mxu0
        %v4401 = vadd.f32 0.0, %v4400
        %v4402 = vpop.f32.mrb[0].mxu0
        %4403 = vmatprep.mubr.bf16.mxu0 0
        %4404 = vmatmul.mubr.bf16.gmra.mrb[0].mxu0 %v3752
        %v4405 = vpop.f32.mrb[0].mxu0
        %v4406 = vadd.f32 0.0, %v4405
        %v4407 = vpop.f32.mrb[0].mxu0
        %v4408 = vpop.f32.mrb[0].mxu0
        %v4409 = vadd.f32 0.0, %v4408
        %v4410 = vpop.f32.mrb[0].mxu0
        %4411 = vmatprep.mubr.bf16.mxu0 0
        %4412 = vmatmul.mubr.bf16.gmra.mrb[0].mxu0 %v3753
        %v4413 = vpop.f32.mrb[0].mxu0
        %v4414 = vadd.f32 0.0, %v4413
        %v4415 = vpop.f32.mrb[0].mxu0
        %v4416 = vpop.f32.mrb[0].mxu0
        %v4417 = vadd.f32 0.0, %v4416
        %v4418 = vpop.f32.mrb[0].mxu0
        %4419 = vmatprep.mubr.bf16.mxu0 0
        %4420 = vmatmul.mubr.bf16.gmra.mrb[0].mxu0 %v3754
        %v4421 = vpop.f32.mrb[0].mxu0
        %v4422 = vadd.f32 0.0, %v4421
        %v4423 = vpop.f32.mrb[0].mxu0
        %v4424 = vpop.f32.mrb[0].mxu0
        %v4425 = vadd.f32 0.0, %v4424
        %v4426 = vpop.f32.mrb[0].mxu0
        %4427 = vmatprep.mubr.bf16.mxu0 0
        %4428 = vmatmul.mubr.bf16.gmra.mrb[0].mxu0 %v3755
        %v4429 = vpop.f32.mrb[0].mxu0
        %v4430 = vadd.f32 0.0, %v4429
        %v4431 = vpop.f32.mrb[0].mxu0
        %v4432 = vpop.f32.mrb[0].mxu0
        %v4433 = vadd.f32 0.0, %v4432
        %v4434 = vpop.f32.mrb[0].mxu0
        %4435 = vmatprep.mubr.bf16.mxu0 0
        %4436 = vmatmul.mubr.bf16.gmra.mrb[0].mxu0 %v3756
        %v4437 = vpop.f32.mrb[0].mxu0
        %v4438 = vadd.f32 0.0, %v4437
        %v4439 = vpop.f32.mrb[0].mxu0
        %v4440 = vpop.f32.mrb[0].mxu0
        %v4441 = vadd.f32 0.0, %v4440
        %v4442 = vpop.f32.mrb[0].mxu0
        %4443 = vdwg.mxu0
        %4444 = vmatprep.subr.bf16.mxu0 0
        %4445 = vmatpush1.bf16.msra.mxu0 %v1365
        %4446 = vmatprep.subr.bf16.mxu0 0
        %4447 = vmatpush1.bf16.msra.mxu0 %v1367
        %4448 = vmatprep.subr.bf16.mxu0 0
        %4449 = vmatpush1.bf16.msra.mxu0 %v1369
        %4450 = vmatprep.subr.bf16.mxu0 0
        %4451 = vmatpush1.bf16.msra.mxu0 %v1371
        %4452 = vmatprep.subr.bf16.mxu0 0
        %4453 = vmatpush1.bf16.msra.mxu0 %v1373
        %4454 = vmatprep.subr.bf16.mxu0 0
        %4455 = vmatpush1.bf16.msra.mxu0 %v1375
        %4456 = vmatprep.subr.bf16.mxu0 0
        %4457 = vmatpush1.bf16.msra.mxu0 %v1377
        %4458 = vmatprep.subr.bf16.mxu0 0
        %4459 = vmatpush1.bf16.msra.mxu0 %v1379
        %4460 = vmatprep.subr.bf16.mxu0 0
        %4461 = vmatpush1.bf16.msra.mxu0 0
        %4462 = vmatprep.subr.bf16.mxu0 0
        %4463 = vmatpush1.bf16.msra.mxu0 0
        %4464 = vmatprep.subr.bf16.mxu0 0
        %4465 = vmatpush1.bf16.msra.mxu0 0
        %4466 = vmatprep.subr.bf16.mxu0 0
        %4467 = vmatpush1.bf16.msra.mxu0 0
        %4468 = vmatprep.subr.bf16.mxu0 0
        %4469 = vmatpush1.bf16.msra.mxu0 0
        %4470 = vmatprep.subr.bf16.mxu0 0
        %4471 = vmatpush1.bf16.msra.mxu0 0
        %4472 = vmatprep.subr.bf16.mxu0 0
        %4473 = vmatpush1.bf16.msra.mxu0 0
        %4474 = vmatprep.subr.bf16.mxu0 0
        %4475 = vmatpush1.bf16.msra.mxu0 0
        %4476 = vmatprep.mubr.bf16.mxu0 0
        %4477 = vmatmul.mubr.bf16.gmra.mrb[0].mxu0 %v3757
        %v4478 = vpop.f32.mrb[0].mxu0
        %v4479 = vadd.f32 0.0, %v4478
        %v4480 = vpop.f32.mrb[0].mxu0
        %v4481 = vpop.f32.mrb[0].mxu0
        %v4482 = vadd.f32 0.0, %v4481
        %v4483 = vpop.f32.mrb[0].mxu0
        %4484 = vmatprep.mubr.bf16.mxu0 0
        %4485 = vmatmul.mubr.bf16.gmra.mrb[0].mxu0 %v3758
        %v4486 = vpop.f32.mrb[0].mxu0
        %v4487 = vadd.f32 0.0, %v4486
        %v4488 = vpop.f32.mrb[0].mxu0
        %v4489 = vpop.f32.mrb[0].mxu0
        %v4490 = vadd.f32 0.0, %v4489
        %v4491 = vpop.f32.mrb[0].mxu0
        %4492 = vmatprep.mubr.bf16.mxu0 0
        %4493 = vmatmul.mubr.bf16.gmra.mrb[0].mxu0 %v3759
        %v4494 = vpop.f32.mrb[0].mxu0
        %v4495 = vadd.f32 0.0, %v4494
        %v4496 = vpop.f32.mrb[0].mxu0
        %v4497 = vpop.f32.mrb[0].mxu0
        %v4498 = vadd.f32 0.0, %v4497
        %v4499 = vpop.f32.mrb[0].mxu0
        %4500 = vmatprep.mubr.bf16.mxu0 0
        %4501 = vmatmul.mubr.bf16.gmra.mrb[0].mxu0 %v3760
        %v4502 = vpop.f32.mrb[0].mxu0
        %v4503 = vadd.f32 0.0, %v4502
        %v4504 = vpop.f32.mrb[0].mxu0
        %v4505 = vpop.f32.mrb[0].mxu0
        %v4506 = vadd.f32 0.0, %v4505
        %v4507 = vpop.f32.mrb[0].mxu0
        %4508 = vmatprep.mubr.bf16.mxu0 0
        %4509 = vmatmul.mubr.bf16.gmra.mrb[0].mxu0 %v3761
        %v4510 = vpop.f32.mrb[0].mxu0
        %v4511 = vadd.f32 0.0, %v4510
        %v4512 = vpop.f32.mrb[0].mxu0
        %v4513 = vpop.f32.mrb[0].mxu0
        %v4514 = vadd.f32 0.0, %v4513
        %v4515 = vpop.f32.mrb[0].mxu0
        %4516 = vmatprep.mubr.bf16.mxu0 0
        %4517 = vmatmul.mubr.bf16.gmra.mrb[0].mxu0 %v3762
        %v4518 = vpop.f32.mrb[0].mxu0
        %v4519 = vadd.f32 0.0, %v4518
        %v4520 = vpop.f32.mrb[0].mxu0
        %v4521 = vpop.f32.mrb[0].mxu0
        %v4522 = vadd.f32 0.0, %v4521
        %v4523 = vpop.f32.mrb[0].mxu0
        %4524 = vmatprep.mubr.bf16.mxu0 0
        %4525 = vmatmul.mubr.bf16.gmra.mrb[0].mxu0 %v3763
        %v4526 = vpop.f32.mrb[0].mxu0
        %v4527 = vadd.f32 0.0, %v4526
        %v4528 = vpop.f32.mrb[0].mxu0
        %v4529 = vpop.f32.mrb[0].mxu0
        %v4530 = vadd.f32 0.0, %v4529
        %v4531 = vpop.f32.mrb[0].mxu0
        %4532 = vmatprep.mubr.bf16.mxu0 0
        %4533 = vmatmul.mubr.bf16.gmra.mrb[0].mxu0 %v3764
        %v4534 = vpop.f32.mrb[0].mxu0
        %v4535 = vadd.f32 0.0, %v4534
        %v4536 = vpop.f32.mrb[0].mxu0
        %v4537 = vpop.f32.mrb[0].mxu0
        %v4538 = vadd.f32 0.0, %v4537
        %v4539 = vpop.f32.mrb[0].mxu0
        %4540 = vdwg.mxu0
        %4557 = vrot.lane.b32.xlu0 %v3897, 16
        %v4558 = vpop.permute.xlu0 %4557
        %4559 = vrot.lane.b32.xlu0 %v3900, 16
        %v4560 = vpop.permute.xlu0 %4559
        %4561 = vrot.lane.b32.xlu0 %v3905, 16
        %v4562 = vpop.permute.xlu0 %4561
        %4563 = vrot.lane.b32.xlu0 %v3908, 16
        %v4564 = vpop.permute.xlu0 %4563
        %4565 = vrot.lane.b32.xlu0 %v3913, 16
        %v4566 = vpop.permute.xlu0 %4565
        %4567 = vrot.lane.b32.xlu0 %v3916, 16
        %v4568 = vpop.permute.xlu0 %4567
        %4569 = vrot.lane.b32.xlu0 %v3921, 16
        %v4570 = vpop.permute.xlu0 %4569
        %4571 = vrot.lane.b32.xlu0 %v3924, 16
        %v4572 = vpop.permute.xlu0 %4571
        %4573 = vrot.lane.b32.xlu0 %v3929, 16
        %v4574 = vpop.permute.xlu0 %4573
        %4575 = vrot.lane.b32.xlu0 %v3932, 16
        %v4576 = vpop.permute.xlu0 %4575
        %4577 = vrot.lane.b32.xlu0 %v3937, 16
        %v4578 = vpop.permute.xlu0 %4577
        %4579 = vrot.lane.b32.xlu0 %v3940, 16
        %v4580 = vpop.permute.xlu0 %4579
        %4581 = vrot.lane.b32.xlu0 %v3945, 16
        %v4582 = vpop.permute.xlu0 %4581
        %4583 = vrot.lane.b32.xlu0 %v3948, 16
        %v4584 = vpop.permute.xlu0 %4583
        %4585 = vrot.lane.b32.xlu0 %v3953, 16
        %v4586 = vpop.permute.xlu0 %4585
        %4587 = vrot.lane.b32.xlu0 %v3956, 16
        %v4588 = vpop.permute.xlu0 %4587
        %4621 = vrot.lane.b32.xlu0 %v3994, 32
        %v4622 = vpop.permute.xlu0 %4621
        %4623 = vrot.lane.b32.xlu0 %v3997, 32
        %v4624 = vpop.permute.xlu0 %4623
        %4625 = vrot.lane.b32.xlu0 %v4002, 32
        %v4626 = vpop.permute.xlu0 %4625
        %4627 = vrot.lane.b32.xlu0 %v4005, 32
        %v4628 = vpop.permute.xlu0 %4627
        %4629 = vrot.lane.b32.xlu0 %v4010, 32
        %v4630 = vpop.permute.xlu0 %4629
        %4631 = vrot.lane.b32.xlu0 %v4013, 32
        %v4632 = vpop.permute.xlu0 %4631
        %4633 = vrot.lane.b32.xlu0 %v4018, 32
        %v4634 = vpop.permute.xlu0 %4633
        %4635 = vrot.lane.b32.xlu0 %v4021, 32
        %v4636 = vpop.permute.xlu0 %4635
        %4637 = vrot.lane.b32.xlu0 %v4026, 32
        %v4638 = vpop.permute.xlu0 %4637
        %4639 = vrot.lane.b32.xlu0 %v4029, 32
        %v4640 = vpop.permute.xlu0 %4639
        %4641 = vrot.lane.b32.xlu0 %v4034, 32
        %v4642 = vpop.permute.xlu0 %4641
        %4643 = vrot.lane.b32.xlu0 %v4037, 32
        %v4644 = vpop.permute.xlu0 %4643
        %4645 = vrot.lane.b32.xlu0 %v4042, 32
        %v4646 = vpop.permute.xlu0 %4645
        %4647 = vrot.lane.b32.xlu0 %v4045, 32
        %v4648 = vpop.permute.xlu0 %4647
        %4649 = vrot.lane.b32.xlu0 %v4050, 32
        %v4650 = vpop.permute.xlu0 %4649
        %4651 = vrot.lane.b32.xlu0 %v4053, 32
        %v4652 = vpop.permute.xlu0 %4651
        %4685 = vrot.lane.b32.xlu0 %v4091, 48
        %v4686 = vpop.permute.xlu0 %4685
        %4687 = vrot.lane.b32.xlu0 %v4094, 48
        %v4688 = vpop.permute.xlu0 %4687
        %4689 = vrot.lane.b32.xlu0 %v4099, 48
        %v4690 = vpop.permute.xlu0 %4689
        %4691 = vrot.lane.b32.xlu0 %v4102, 48
        %v4692 = vpop.permute.xlu0 %4691
        %4693 = vrot.lane.b32.xlu0 %v4107, 48
        %v4694 = vpop.permute.xlu0 %4693
        %4695 = vrot.lane.b32.xlu0 %v4110, 48
        %v4696 = vpop.permute.xlu0 %4695
        %4697 = vrot.lane.b32.xlu0 %v4115, 48
        %v4698 = vpop.permute.xlu0 %4697
        %4699 = vrot.lane.b32.xlu0 %v4118, 48
        %v4700 = vpop.permute.xlu0 %4699
        %4701 = vrot.lane.b32.xlu0 %v4123, 48
        %v4702 = vpop.permute.xlu0 %4701
        %4703 = vrot.lane.b32.xlu0 %v4126, 48
        %v4704 = vpop.permute.xlu0 %4703
        %4705 = vrot.lane.b32.xlu0 %v4131, 48
        %v4706 = vpop.permute.xlu0 %4705
        %4707 = vrot.lane.b32.xlu0 %v4134, 48
        %v4708 = vpop.permute.xlu0 %4707
        %4709 = vrot.lane.b32.xlu0 %v4139, 48
        %v4710 = vpop.permute.xlu0 %4709
        %4711 = vrot.lane.b32.xlu0 %v4142, 48
        %v4712 = vpop.permute.xlu0 %4711
        %4713 = vrot.lane.b32.xlu0 %v4147, 48
        %v4714 = vpop.permute.xlu0 %4713
        %4715 = vrot.lane.b32.xlu0 %v4150, 48
        %v4716 = vpop.permute.xlu0 %4715
        %4749 = vrot.lane.b32.xlu0 %v4188, 64
        %v4750 = vpop.permute.xlu0 %4749
        %4751 = vrot.lane.b32.xlu0 %v4191, 64
        %v4752 = vpop.permute.xlu0 %4751
        %4753 = vrot.lane.b32.xlu0 %v4196, 64
        %v4754 = vpop.permute.xlu0 %4753
        %4755 = vrot.lane.b32.xlu0 %v4199, 64
        %v4756 = vpop.permute.xlu0 %4755
        %4757 = vrot.lane.b32.xlu0 %v4204, 64
        %v4758 = vpop.permute.xlu0 %4757
        %4759 = vrot.lane.b32.xlu0 %v4207, 64
        %v4760 = vpop.permute.xlu0 %4759
        %4761 = vrot.lane.b32.xlu0 %v4212, 64
        %v4762 = vpop.permute.xlu0 %4761
        %4763 = vrot.lane.b32.xlu0 %v4215, 64
        %v4764 = vpop.permute.xlu0 %4763
        %4765 = vrot.lane.b32.xlu0 %v4220, 64
        %v4766 = vpop.permute.xlu0 %4765
        %4767 = vrot.lane.b32.xlu0 %v4223, 64
        %v4768 = vpop.permute.xlu0 %4767
        %4769 = vrot.lane.b32.xlu0 %v4228, 64
        %v4770 = vpop.permute.xlu0 %4769
        %4771 = vrot.lane.b32.xlu0 %v4231, 64
        %v4772 = vpop.permute.xlu0 %4771
        %4773 = vrot.lane.b32.xlu0 %v4236, 64
        %v4774 = vpop.permute.xlu0 %4773
        %4775 = vrot.lane.b32.xlu0 %v4239, 64
        %v4776 = vpop.permute.xlu0 %4775
        %4777 = vrot.lane.b32.xlu0 %v4244, 64
        %v4778 = vpop.permute.xlu0 %4777
        %4779 = vrot.lane.b32.xlu0 %v4247, 64
        %v4780 = vpop.permute.xlu0 %4779
        %4813 = vrot.lane.b32.xlu0 %v4285, 80
        %v4814 = vpop.permute.xlu0 %4813
        %4815 = vrot.lane.b32.xlu0 %v4288, 80
        %v4816 = vpop.permute.xlu0 %4815
        %4817 = vrot.lane.b32.xlu0 %v4293, 80
        %v4818 = vpop.permute.xlu0 %4817
        %4819 = vrot.lane.b32.xlu0 %v4296, 80
        %v4820 = vpop.permute.xlu0 %4819
        %4821 = vrot.lane.b32.xlu0 %v4301, 80
        %v4822 = vpop.permute.xlu0 %4821
        %4823 = vrot.lane.b32.xlu0 %v4304, 80
        %v4824 = vpop.permute.xlu0 %4823
        %4825 = vrot.lane.b32.xlu0 %v4309, 80
        %v4826 = vpop.permute.xlu0 %4825
        %4827 = vrot.lane.b32.xlu0 %v4312, 80
        %v4828 = vpop.permute.xlu0 %4827
        %4829 = vrot.lane.b32.xlu0 %v4317, 80
        %v4830 = vpop.permute.xlu0 %4829
        %4831 = vrot.lane.b32.xlu0 %v4320, 80
        %v4832 = vpop.permute.xlu0 %4831
        %4833 = vrot.lane.b32.xlu0 %v4325, 80
        %v4834 = vpop.permute.xlu0 %4833
        %4835 = vrot.lane.b32.xlu0 %v4328, 80
        %v4836 = vpop.permute.xlu0 %4835
        %4837 = vrot.lane.b32.xlu0 %v4333, 80
        %v4838 = vpop.permute.xlu0 %4837
        %4839 = vrot.lane.b32.xlu0 %v4336, 80
        %v4840 = vpop.permute.xlu0 %4839
        %4841 = vrot.lane.b32.xlu0 %v4341, 80
        %v4842 = vpop.permute.xlu0 %4841
        %4843 = vrot.lane.b32.xlu0 %v4344, 80
        %v4844 = vpop.permute.xlu0 %4843
        %4877 = vrot.lane.b32.xlu0 %v4382, 96
        %v4878 = vpop.permute.xlu0 %4877
        %4879 = vrot.lane.b32.xlu0 %v4385, 96
        %v4880 = vpop.permute.xlu0 %4879
        %4881 = vrot.lane.b32.xlu0 %v4390, 96
        %v4882 = vpop.permute.xlu0 %4881
        %4883 = vrot.lane.b32.xlu0 %v4393, 96
        %v4884 = vpop.permute.xlu0 %4883
        %4885 = vrot.lane.b32.xlu0 %v4398, 96
        %v4886 = vpop.permute.xlu0 %4885
        %4887 = vrot.lane.b32.xlu0 %v4401, 96
        %v4888 = vpop.permute.xlu0 %4887
        %4889 = vrot.lane.b32.xlu0 %v4406, 96
        %v4890 = vpop.permute.xlu0 %4889
        %4891 = vrot.lane.b32.xlu0 %v4409, 96
        %v4892 = vpop.permute.xlu0 %4891
        %4893 = vrot.lane.b32.xlu0 %v4414, 96
        %v4894 = vpop.permute.xlu0 %4893
        %4895 = vrot.lane.b32.xlu0 %v4417, 96
        %v4896 = vpop.permute.xlu0 %4895
        %4897 = vrot.lane.b32.xlu0 %v4422, 96
        %v4898 = vpop.permute.xlu0 %4897
        %4899 = vrot.lane.b32.xlu0 %v4425, 96
        %v4900 = vpop.permute.xlu0 %4899
        %4901 = vrot.lane.b32.xlu0 %v4430, 96
        %v4902 = vpop.permute.xlu0 %4901
        %4903 = vrot.lane.b32.xlu0 %v4433, 96
        %v4904 = vpop.permute.xlu0 %4903
        %4905 = vrot.lane.b32.xlu0 %v4438, 96
        %v4906 = vpop.permute.xlu0 %4905
        %4907 = vrot.lane.b32.xlu0 %v4441, 96
        %v4908 = vpop.permute.xlu0 %4907
        %4941 = vrot.lane.b32.xlu0 %v4479, 112
        %v4942 = vpop.permute.xlu0 %4941
        %4943 = vrot.lane.b32.xlu0 %v4482, 112
        %v4944 = vpop.permute.xlu0 %4943
        %4945 = vrot.lane.b32.xlu0 %v4487, 112
        %v4946 = vpop.permute.xlu0 %4945
        %4947 = vrot.lane.b32.xlu0 %v4490, 112
        %v4948 = vpop.permute.xlu0 %4947
        %4949 = vrot.lane.b32.xlu0 %v4495, 112
        %v4950 = vpop.permute.xlu0 %4949
        %4951 = vrot.lane.b32.xlu0 %v4498, 112
        %v4952 = vpop.permute.xlu0 %4951
        %4953 = vrot.lane.b32.xlu0 %v4503, 112
        %v4954 = vpop.permute.xlu0 %4953
        %4955 = vrot.lane.b32.xlu0 %v4506, 112
        %v4956 = vpop.permute.xlu0 %4955
        %4957 = vrot.lane.b32.xlu0 %v4511, 112
        %v4958 = vpop.permute.xlu0 %4957
        %4959 = vrot.lane.b32.xlu0 %v4514, 112
        %v4960 = vpop.permute.xlu0 %4959
        %4961 = vrot.lane.b32.xlu0 %v4519, 112
        %v4962 = vpop.permute.xlu0 %4961
        %4963 = vrot.lane.b32.xlu0 %v4522, 112
        %v4964 = vpop.permute.xlu0 %4963
        %4965 = vrot.lane.b32.xlu0 %v4527, 112
        %v4966 = vpop.permute.xlu0 %4965
        %4967 = vrot.lane.b32.xlu0 %v4530, 112
        %v4968 = vpop.permute.xlu0 %4967
        %4969 = vrot.lane.b32.xlu0 %v4535, 112
        %v4970 = vpop.permute.xlu0 %4969
        %4971 = vrot.lane.b32.xlu0 %v4538, 112
        %v4972 = vpop.permute.xlu0 %4971
        %v4989 = vsel %vm1388, %v3800, %v4558
        %v4990 = vsel %vm1388, %v3803, %v4560
        %v4991 = vsel %vm1388, %v3808, %v4562
        %v4992 = vsel %vm1388, %v3811, %v4564
        %v4993 = vsel %vm1388, %v3816, %v4566
        %v4994 = vsel %vm1388, %v3819, %v4568
        %v4995 = vsel %vm1388, %v3824, %v4570
        %v4996 = vsel %vm1388, %v3827, %v4572
        %v4997 = vsel %vm1388, %v3832, %v4574
        %v4998 = vsel %vm1388, %v3835, %v4576
        %v4999 = vsel %vm1388, %v3840, %v4578
        %v5000 = vsel %vm1388, %v3843, %v4580
        %v5001 = vsel %vm1388, %v3848, %v4582
        %v5002 = vsel %vm1388, %v3851, %v4584
        %v5003 = vsel %vm1388, %v3856, %v4586
        %v5004 = vsel %vm1388, %v3859, %v4588
        %vm5005 = vcmask 261120
        %v5006 = vsel %vm5005, %v4989, %v4622
        %v5007 = vsel %vm5005, %v4990, %v4624
        %v5008 = vsel %vm5005, %v4991, %v4626
        %v5009 = vsel %vm5005, %v4992, %v4628
        %v5010 = vsel %vm5005, %v4993, %v4630
        %v5011 = vsel %vm5005, %v4994, %v4632
        %v5012 = vsel %vm5005, %v4995, %v4634
        %v5013 = vsel %vm5005, %v4996, %v4636
        %v5014 = vsel %vm5005, %v4997, %v4638
        %v5015 = vsel %vm5005, %v4998, %v4640
        %v5016 = vsel %vm5005, %v4999, %v4642
        %v5017 = vsel %vm5005, %v5000, %v4644
        %v5018 = vsel %vm5005, %v5001, %v4646
        %v5019 = vsel %vm5005, %v5002, %v4648
        %v5020 = vsel %vm5005, %v5003, %v4650
        %v5021 = vsel %vm5005, %v5004, %v4652
        %vm5022 = vcmask 392192
        %v5023 = vsel %vm5022, %v5006, %v4686
        %v5024 = vsel %vm5022, %v5007, %v4688
        %v5025 = vsel %vm5022, %v5008, %v4690
        %v5026 = vsel %vm5022, %v5009, %v4692
        %v5027 = vsel %vm5022, %v5010, %v4694
        %v5028 = vsel %vm5022, %v5011, %v4696
        %v5029 = vsel %vm5022, %v5012, %v4698
        %v5030 = vsel %vm5022, %v5013, %v4700
        %v5031 = vsel %vm5022, %v5014, %v4702
        %v5032 = vsel %vm5022, %v5015, %v4704
        %v5033 = vsel %vm5022, %v5016, %v4706
        %v5034 = vsel %vm5022, %v5017, %v4708
        %v5035 = vsel %vm5022, %v5018, %v4710
        %v5036 = vsel %vm5022, %v5019, %v4712
        %v5037 = vsel %vm5022, %v5020, %v4714
        %v5038 = vsel %vm5022, %v5021, %v4716
        %vm5039 = vcmask 523264
        %v5040 = vsel %vm5039, %v5023, %v4750
        %v5041 = vsel %vm5039, %v5024, %v4752
        %v5042 = vsel %vm5039, %v5025, %v4754
        %v5043 = vsel %vm5039, %v5026, %v4756
        %v5044 = vsel %vm5039, %v5027, %v4758
        %v5045 = vsel %vm5039, %v5028, %v4760
        %v5046 = vsel %vm5039, %v5029, %v4762
        %v5047 = vsel %vm5039, %v5030, %v4764
        %v5048 = vsel %vm5039, %v5031, %v4766
        %v5049 = vsel %vm5039, %v5032, %v4768
        %v5050 = vsel %vm5039, %v5033, %v4770
        %v5051 = vsel %vm5039, %v5034, %v4772
        %v5052 = vsel %vm5039, %v5035, %v4774
        %v5053 = vsel %vm5039, %v5036, %v4776
        %v5054 = vsel %vm5039, %v5037, %v4778
        %v5055 = vsel %vm5039, %v5038, %v4780
        %vm5056 = vcmask 654336
        %v5057 = vsel %vm5056, %v5040, %v4814
        %v5058 = vsel %vm5056, %v5041, %v4816
        %v5059 = vsel %vm5056, %v5042, %v4818
        %v5060 = vsel %vm5056, %v5043, %v4820
        %v5061 = vsel %vm5056, %v5044, %v4822
        %v5062 = vsel %vm5056, %v5045, %v4824
        %v5063 = vsel %vm5056, %v5046, %v4826
        %v5064 = vsel %vm5056, %v5047, %v4828
        %v5065 = vsel %vm5056, %v5048, %v4830
        %v5066 = vsel %vm5056, %v5049, %v4832
        %v5067 = vsel %vm5056, %v5050, %v4834
        %v5068 = vsel %vm5056, %v5051, %v4836
        %v5069 = vsel %vm5056, %v5052, %v4838
        %v5070 = vsel %vm5056, %v5053, %v4840
        %v5071 = vsel %vm5056, %v5054, %v4842
        %v5072 = vsel %vm5056, %v5055, %v4844
        %vm5073 = vcmask 785408
        %v5074 = vsel %vm5073, %v5057, %v4878
        %v5075 = vsel %vm5073, %v5058, %v4880
        %v5076 = vsel %vm5073, %v5059, %v4882
        %v5077 = vsel %vm5073, %v5060, %v4884
        %v5078 = vsel %vm5073, %v5061, %v4886
        %v5079 = vsel %vm5073, %v5062, %v4888
        %v5080 = vsel %vm5073, %v5063, %v4890
        %v5081 = vsel %vm5073, %v5064, %v4892
        %v5082 = vsel %vm5073, %v5065, %v4894
        %v5083 = vsel %vm5073, %v5066, %v4896
        %v5084 = vsel %vm5073, %v5067, %v4898
        %v5085 = vsel %vm5073, %v5068, %v4900
        %v5086 = vsel %vm5073, %v5069, %v4902
        %v5087 = vsel %vm5073, %v5070, %v4904
        %v5088 = vsel %vm5073, %v5071, %v4906
        %v5089 = vsel %vm5073, %v5072, %v4908
        %vm5090 = vcmask 916480
        %v5091 = vsel %vm5090, %v5074, %v4942
        %v5092 = vsel %vm5090, %v5075, %v4944
        %v5093 = vsel %vm5090, %v5076, %v4946
        %v5094 = vsel %vm5090, %v5077, %v4948
        %v5095 = vsel %vm5090, %v5078, %v4950
        %v5096 = vsel %vm5090, %v5079, %v4952
        %v5097 = vsel %vm5090, %v5080, %v4954
        %v5098 = vsel %vm5090, %v5081, %v4956
        %v5099 = vsel %vm5090, %v5082, %v4958
        %v5100 = vsel %vm5090, %v5083, %v4960
        %v5101 = vsel %vm5090, %v5084, %v4962
        %v5102 = vsel %vm5090, %v5085, %v4964
        %v5103 = vsel %vm5090, %v5086, %v4966
        %v5104 = vsel %vm5090, %v5087, %v4968
        %v5105 = vsel %vm5090, %v5088, %v4970
        %v5106 = vsel %vm5090, %v5089, %v4972
        %v5107 = vpack.c.bf16 %v5092, %v5091
        %v5108 = vpack.c.bf16 %v5094, %v5093
        %v5109 = vpack.c.bf16 %v5096, %v5095
        %v5110 = vpack.c.bf16 %v5098, %v5097
        %v5111 = vpack.c.bf16 %v5100, %v5099
        %v5112 = vpack.c.bf16 %v5102, %v5101
        %v5113 = vpack.c.bf16 %v5104, %v5103
        %v5114 = vpack.c.bf16 %v5106, %v5105
        %v5115 = vld [vmem:[#allocation8] sm:$0xf]
        %v5116 = vld [vmem:[#allocation8 + $0x4] sm:$0xf]
        %v5117 = vld [vmem:[#allocation8 + $0x8] sm:$0xf]
        %v5118 = vld [vmem:[#allocation8 + $0xc] sm:$0xf]
        %v5119 = vld [vmem:[#allocation8 + $0x10] sm:$0xf]
        %v5120 = vld [vmem:[#allocation8 + $0x14] sm:$0xf]
        %v5121 = vld [vmem:[#allocation8 + $0x18] sm:$0xf]
        %v5122 = vld [vmem:[#allocation8 + $0x1c] sm:$0xf]
        %v5123 = vld [vmem:[#allocation8 + $0x20] sm:$0xf]
        %v5124 = vld [vmem:[#allocation8 + $0x24] sm:$0xf]
        %v5125 = vld [vmem:[#allocation8 + $0x28] sm:$0xf]
        %v5126 = vld [vmem:[#allocation8 + $0x2c] sm:$0xf]
        %v5127 = vld [vmem:[#allocation8 + $0x30] sm:$0xf]
        %v5128 = vld [vmem:[#allocation8 + $0x34] sm:$0xf]
        %v5129 = vld [vmem:[#allocation8 + $0x38] sm:$0xf]
        %v5130 = vld [vmem:[#allocation8 + $0x3c] sm:$0xf]
        %v5131 = vld [vmem:[%s4] sm:$0x1]
        %v5133 = vlaneseq
        %v5134 = vshrl.u32 %v5133, 7
        %v5135 = vsub.s32 0, %v5134
        %v5136 = vrot.slane %v5131, %v5135
        %v5154 = vunpack.c.l.b16 %v5115
        %v5155 = vunpack.c.l.b16 %v5116
        %v5156 = vunpack.c.l.b16 %v5117
        %v5157 = vunpack.c.l.b16 %v5118
        %v5158 = vunpack.c.l.b16 %v5119
        %v5159 = vunpack.c.l.b16 %v5120
        %v5160 = vunpack.c.l.b16 %v5121
        %v5161 = vunpack.c.l.b16 %v5122
        %v5162 = vunpack.c.l.b16 %v5123
        %v5163 = vunpack.c.l.b16 %v5124
        %v5164 = vunpack.c.l.b16 %v5125
        %v5165 = vunpack.c.l.b16 %v5126
        %v5166 = vunpack.c.l.b16 %v5127
        %v5167 = vunpack.c.l.b16 %v5128
        %v5168 = vunpack.c.l.b16 %v5129
        %v5169 = vunpack.c.l.b16 %v5130
        %v5170 = vpack.c.b16 %v5155, %v5154
        %v5171 = vpack.c.b16 %v5157, %v5156
        %v5172 = vpack.c.b16 %v5159, %v5158
        %v5173 = vpack.c.b16 %v5161, %v5160
        %v5174 = vpack.c.b16 %v5163, %v5162
        %v5175 = vpack.c.b16 %v5165, %v5164
        %v5176 = vpack.c.b16 %v5167, %v5166
        %v5177 = vpack.c.b16 %v5169, %v5168
        %5186 = vmatprep.subr.bf16.mxu0 0
        %5187 = vmatpush1.bf16.msra.mxu0 %v5170
        %5188 = vmatprep.subr.bf16.mxu0 0
        %5189 = vmatpush1.bf16.msra.mxu0 %v5171
        %5190 = vmatprep.subr.bf16.mxu0 0
        %5191 = vmatpush1.bf16.msra.mxu0 %v5172
        %5192 = vmatprep.subr.bf16.mxu0 0
        %5193 = vmatpush1.bf16.msra.mxu0 %v5173
        %5194 = vmatprep.subr.bf16.mxu0 0
        %5195 = vmatpush1.bf16.msra.mxu0 %v5174
        %5196 = vmatprep.subr.bf16.mxu0 0
        %5197 = vmatpush1.bf16.msra.mxu0 %v5175
        %5198 = vmatprep.subr.bf16.mxu0 0
        %5199 = vmatpush1.bf16.msra.mxu0 %v5176
        %5200 = vmatprep.subr.bf16.mxu0 0
        %5201 = vmatpush1.bf16.msra.mxu0 %v5177
        %5202 = vmatprep.subr.bf16.mxu0 0
        %5203 = vmatpush1.bf16.msra.mxu0 0
        %5204 = vmatprep.subr.bf16.mxu0 0
        %5205 = vmatpush1.bf16.msra.mxu0 0
        %5206 = vmatprep.subr.bf16.mxu0 0
        %5207 = vmatpush1.bf16.msra.mxu0 0
        %5208 = vmatprep.subr.bf16.mxu0 0
        %5209 = vmatpush1.bf16.msra.mxu0 0
        %5210 = vmatprep.subr.bf16.mxu0 0
        %5211 = vmatpush1.bf16.msra.mxu0 0
        %5212 = vmatprep.subr.bf16.mxu0 0
        %5213 = vmatpush1.bf16.msra.mxu0 0
        %5214 = vmatprep.subr.bf16.mxu0 0
        %5215 = vmatpush1.bf16.msra.mxu0 0
        %5216 = vmatprep.subr.bf16.mxu0 0
        %5217 = vmatpush1.bf16.msra.mxu0 0
        %5218 = vmatprep.mubr.bf16.mxu0 0
        %5219 = vmatmul.mubr.bf16.gmra.mrb[0].mxu0 %v5107
        %v5220 = vpop.f32.mrb[0].mxu0
        %v5221 = vadd.f32 %v5136, %v5220
        %v5222 = vpop.f32.mrb[0].mxu0
        %v5223 = vpop.f32.mrb[0].mxu0
        %v5224 = vadd.f32 %v5136, %v5223
        %v5225 = vpop.f32.mrb[0].mxu0
        %5226 = vmatprep.mubr.bf16.mxu0 0
        %5227 = vmatmul.mubr.bf16.gmra.mrb[0].mxu0 %v5108
        %v5228 = vpop.f32.mrb[0].mxu0
        %v5229 = vadd.f32 %v5136, %v5228
        %v5230 = vpop.f32.mrb[0].mxu0
        %v5231 = vpop.f32.mrb[0].mxu0
        %v5232 = vadd.f32 %v5136, %v5231
        %v5233 = vpop.f32.mrb[0].mxu0
        %5234 = vmatprep.mubr.bf16.mxu0 0
        %5235 = vmatmul.mubr.bf16.gmra.mrb[0].mxu0 %v5109
        %v5236 = vpop.f32.mrb[0].mxu0
        %v5237 = vadd.f32 %v5136, %v5236
        %v5238 = vpop.f32.mrb[0].mxu0
        %v5239 = vpop.f32.mrb[0].mxu0
        %v5240 = vadd.f32 %v5136, %v5239
        %v5241 = vpop.f32.mrb[0].mxu0
        %5242 = vmatprep.mubr.bf16.mxu0 0
        %5243 = vmatmul.mubr.bf16.gmra.mrb[0].mxu0 %v5110
        %v5244 = vpop.f32.mrb[0].mxu0
        %v5245 = vadd.f32 %v5136, %v5244
        %v5246 = vpop.f32.mrb[0].mxu0
        %v5247 = vpop.f32.mrb[0].mxu0
        %v5248 = vadd.f32 %v5136, %v5247
        %v5249 = vpop.f32.mrb[0].mxu0
        %5250 = vmatprep.mubr.bf16.mxu0 0
        %5251 = vmatmul.mubr.bf16.gmra.mrb[0].mxu0 %v5111
        %v5252 = vpop.f32.mrb[0].mxu0
        %v5253 = vadd.f32 %v5136, %v5252
        %v5254 = vpop.f32.mrb[0].mxu0
        %v5255 = vpop.f32.mrb[0].mxu0
        %v5256 = vadd.f32 %v5136, %v5255
        %v5257 = vpop.f32.mrb[0].mxu0
        %5258 = vmatprep.mubr.bf16.mxu0 0
        %5259 = vmatmul.mubr.bf16.gmra.mrb[0].mxu0 %v5112
        %v5260 = vpop.f32.mrb[0].mxu0
        %v5261 = vadd.f32 %v5136, %v5260
        %v5262 = vpop.f32.mrb[0].mxu0
        %v5263 = vpop.f32.mrb[0].mxu0
        %v5264 = vadd.f32 %v5136, %v5263
        %v5265 = vpop.f32.mrb[0].mxu0
        %5266 = vmatprep.mubr.bf16.mxu0 0
        %5267 = vmatmul.mubr.bf16.gmra.mrb[0].mxu0 %v5113
        %v5268 = vpop.f32.mrb[0].mxu0
        %v5269 = vadd.f32 %v5136, %v5268
        %v5270 = vpop.f32.mrb[0].mxu0
        %v5271 = vpop.f32.mrb[0].mxu0
        %v5272 = vadd.f32 %v5136, %v5271
        %v5273 = vpop.f32.mrb[0].mxu0
        %5274 = vmatprep.mubr.bf16.mxu0 0
        %5275 = vmatmul.mubr.bf16.gmra.mrb[0].mxu0 %v5114
        %v5276 = vpop.f32.mrb[0].mxu0
        %v5277 = vadd.f32 %v5136, %v5276
        %v5278 = vpop.f32.mrb[0].mxu0
        %v5279 = vpop.f32.mrb[0].mxu0
        %v5280 = vadd.f32 %v5136, %v5279
        %v5281 = vpop.f32.mrb[0].mxu0
        %5282 = vdwg.mxu0
        %s5283 = scalar_lea.vmem %s422, %s942 [#allocation3]
        %v5284 = vld [vmem:[%s5283] sm:$0xff]
        %v5285 = vld [vmem:[%s5283 + $0x8] sm:$0xff]
        %v5286 = vld [vmem:[%s5283 + $0x10] sm:$0xff]
        %v5287 = vld [vmem:[%s5283 + $0x18] sm:$0xff]
        %v5288 = vld [vmem:[%s5283 + $0x20] sm:$0xff]
        %v5289 = vld [vmem:[%s5283 + $0x28] sm:$0xff]
        %v5290 = vld [vmem:[%s5283 + $0x30] sm:$0xff]
        %v5291 = vld [vmem:[%s5283 + $0x38] sm:$0xff]
        %v5292 = vld [vmem:[%s5283 + $0x40] sm:$0xff]
        %v5293 = vld [vmem:[%s5283 + $0x48] sm:$0xff]
        %v5294 = vld [vmem:[%s5283 + $0x50] sm:$0xff]
        %v5295 = vld [vmem:[%s5283 + $0x58] sm:$0xff]
        %v5296 = vld [vmem:[%s5283 + $0x60] sm:$0xff]
        %v5297 = vld [vmem:[%s5283 + $0x68] sm:$0xff]
        %v5298 = vld [vmem:[%s5283 + $0x70] sm:$0xff]
        %v5299 = vld [vmem:[%s5283 + $0x78] sm:$0xff]
        %v5300 = vadd.f32 %v5284, %v5221
        %v5301 = vadd.f32 %v5285, %v5224
        %v5302 = vadd.f32 %v5286, %v5229
        %v5303 = vadd.f32 %v5287, %v5232
        %v5304 = vadd.f32 %v5288, %v5237
        %v5305 = vadd.f32 %v5289, %v5240
        %v5306 = vadd.f32 %v5290, %v5245
        %v5307 = vadd.f32 %v5291, %v5248
        %v5308 = vadd.f32 %v5292, %v5253
        %v5309 = vadd.f32 %v5293, %v5256
        %v5310 = vadd.f32 %v5294, %v5261
        %v5311 = vadd.f32 %v5295, %v5264
        %v5312 = vadd.f32 %v5296, %v5269
        %v5313 = vadd.f32 %v5297, %v5272
        %v5314 = vadd.f32 %v5298, %v5277
        %v5315 = vadd.f32 %v5299, %v5280
        %5316 = vadd.xlane.f32.xlu0 %v5300
        %v5317 = vpop.xlane.xlu0 %5316
        %5318 = vadd.xlane.f32.xlu0 %v5301
        %v5319 = vpop.xlane.xlu0 %5318
        %5320 = vadd.xlane.f32.xlu0 %v5302
        %v5321 = vpop.xlane.xlu0 %5320
        %5322 = vadd.xlane.f32.xlu0 %v5303
        %v5323 = vpop.xlane.xlu0 %5322
        %5324 = vadd.xlane.f32.xlu0 %v5304
        %v5325 = vpop.xlane.xlu0 %5324
        %5326 = vadd.xlane.f32.xlu0 %v5305
        %v5327 = vpop.xlane.xlu0 %5326
        %5328 = vadd.xlane.f32.xlu0 %v5306
        %v5329 = vpop.xlane.xlu0 %5328
        %5330 = vadd.xlane.f32.xlu0 %v5307
        %v5331 = vpop.xlane.xlu0 %5330
        %5332 = vadd.xlane.f32.xlu0 %v5308
        %v5333 = vpop.xlane.xlu0 %5332
        %5334 = vadd.xlane.f32.xlu0 %v5309
        %v5335 = vpop.xlane.xlu0 %5334
        %5336 = vadd.xlane.f32.xlu0 %v5310
        %v5337 = vpop.xlane.xlu0 %5336
        %5338 = vadd.xlane.f32.xlu0 %v5311
        %v5339 = vpop.xlane.xlu0 %5338
        %5340 = vadd.xlane.f32.xlu0 %v5312
        %v5341 = vpop.xlane.xlu0 %5340
        %5342 = vadd.xlane.f32.xlu0 %v5313
        %v5343 = vpop.xlane.xlu0 %5342
        %5344 = vadd.xlane.f32.xlu0 %v5314
        %v5345 = vpop.xlane.xlu0 %5344
        %5346 = vadd.xlane.f32.xlu0 %v5315
        %v5347 = vpop.xlane.xlu0 %5346
        %v5348 = vrcp.pop 128.0
        %v5349 = vmul.f32 %v5317, %v5348
        %v5350 = vmul.f32 %v5319, %v5348
        %v5351 = vmul.f32 %v5321, %v5348
        %v5352 = vmul.f32 %v5323, %v5348
        %v5353 = vmul.f32 %v5325, %v5348
        %v5354 = vmul.f32 %v5327, %v5348
        %v5355 = vmul.f32 %v5329, %v5348
        %v5356 = vmul.f32 %v5331, %v5348
        %v5357 = vmul.f32 %v5333, %v5348
        %v5358 = vmul.f32 %v5335, %v5348
        %v5359 = vmul.f32 %v5337, %v5348
        %v5360 = vmul.f32 %v5339, %v5348
        %v5361 = vmul.f32 %v5341, %v5348
        %v5362 = vmul.f32 %v5343, %v5348
        %v5363 = vmul.f32 %v5345, %v5348
        %v5364 = vmul.f32 %v5347, %v5348
        %v5365 = vsub.f32 %v5300, %v5349
        %v5366 = vsub.f32 %v5301, %v5350
        %v5367 = vsub.f32 %v5302, %v5351
        %v5368 = vsub.f32 %v5303, %v5352
        %v5369 = vsub.f32 %v5304, %v5353
        %v5370 = vsub.f32 %v5305, %v5354
        %v5371 = vsub.f32 %v5306, %v5355
        %v5372 = vsub.f32 %v5307, %v5356
        %v5373 = vsub.f32 %v5308, %v5357
        %v5374 = vsub.f32 %v5309, %v5358
        %v5375 = vsub.f32 %v5310, %v5359
        %v5376 = vsub.f32 %v5311, %v5360
        %v5377 = vsub.f32 %v5312, %v5361
        %v5378 = vsub.f32 %v5313, %v5362
        %v5379 = vsub.f32 %v5314, %v5363
        %v5380 = vsub.f32 %v5315, %v5364
        %v5381 = vmul.f32 %v5365, %v5365
        %v5382 = vmul.f32 %v5366, %v5366
        %v5383 = vmul.f32 %v5367, %v5367
        %v5384 = vmul.f32 %v5368, %v5368
        %v5385 = vmul.f32 %v5369, %v5369
        %v5386 = vmul.f32 %v5370, %v5370
        %v5387 = vmul.f32 %v5371, %v5371
        %v5388 = vmul.f32 %v5372, %v5372
        %v5389 = vmul.f32 %v5373, %v5373
        %v5390 = vmul.f32 %v5374, %v5374
        %v5391 = vmul.f32 %v5375, %v5375
        %v5392 = vmul.f32 %v5376, %v5376
        %v5393 = vmul.f32 %v5377, %v5377
        %v5394 = vmul.f32 %v5378, %v5378
        %v5395 = vmul.f32 %v5379, %v5379
        %v5396 = vmul.f32 %v5380, %v5380
        %5397 = vadd.xlane.f32.xlu0 %v5381
        %v5398 = vpop.xlane.xlu0 %5397
        %5399 = vadd.xlane.f32.xlu0 %v5382
        %v5400 = vpop.xlane.xlu0 %5399
        %5401 = vadd.xlane.f32.xlu0 %v5383
        %v5402 = vpop.xlane.xlu0 %5401
        %5403 = vadd.xlane.f32.xlu0 %v5384
        %v5404 = vpop.xlane.xlu0 %5403
        %5405 = vadd.xlane.f32.xlu0 %v5385
        %v5406 = vpop.xlane.xlu0 %5405
        %5407 = vadd.xlane.f32.xlu0 %v5386
        %v5408 = vpop.xlane.xlu0 %5407
        %5409 = vadd.xlane.f32.xlu0 %v5387
        %v5410 = vpop.xlane.xlu0 %5409
        %5411 = vadd.xlane.f32.xlu0 %v5388
        %v5412 = vpop.xlane.xlu0 %5411
        %5413 = vadd.xlane.f32.xlu0 %v5389
        %v5414 = vpop.xlane.xlu0 %5413
        %5415 = vadd.xlane.f32.xlu0 %v5390
        %v5416 = vpop.xlane.xlu0 %5415
        %5417 = vadd.xlane.f32.xlu0 %v5391
        %v5418 = vpop.xlane.xlu0 %5417
        %5419 = vadd.xlane.f32.xlu0 %v5392
        %v5420 = vpop.xlane.xlu0 %5419
        %5421 = vadd.xlane.f32.xlu0 %v5393
        %v5422 = vpop.xlane.xlu0 %5421
        %5423 = vadd.xlane.f32.xlu0 %v5394
        %v5424 = vpop.xlane.xlu0 %5423
        %5425 = vadd.xlane.f32.xlu0 %v5395
        %v5426 = vpop.xlane.xlu0 %5425
        %5427 = vadd.xlane.f32.xlu0 %v5396
        %v5428 = vpop.xlane.xlu0 %5427
        %v5429 = vmul.f32 %v5398, %v5348
        %v5430 = vmul.f32 %v5400, %v5348
        %v5431 = vmul.f32 %v5402, %v5348
        %v5432 = vmul.f32 %v5404, %v5348
        %v5433 = vmul.f32 %v5406, %v5348
        %v5434 = vmul.f32 %v5408, %v5348
        %v5435 = vmul.f32 %v5410, %v5348
        %v5436 = vmul.f32 %v5412, %v5348
        %v5437 = vmul.f32 %v5414, %v5348
        %v5438 = vmul.f32 %v5416, %v5348
        %v5439 = vmul.f32 %v5418, %v5348
        %v5440 = vmul.f32 %v5420, %v5348
        %v5441 = vmul.f32 %v5422, %v5348
        %v5442 = vmul.f32 %v5424, %v5348
        %v5443 = vmul.f32 %v5426, %v5348
        %v5444 = vmul.f32 %v5428, %v5348
        %v5445 = vadd.f32 %v5429, 1e-05
        %v5446 = vadd.f32 %v5430, 1e-05
        %v5447 = vadd.f32 %v5431, 1e-05
        %v5448 = vadd.f32 %v5432, 1e-05
        %v5449 = vadd.f32 %v5433, 1e-05
        %v5450 = vadd.f32 %v5434, 1e-05
        %v5451 = vadd.f32 %v5435, 1e-05
        %v5452 = vadd.f32 %v5436, 1e-05
        %v5453 = vadd.f32 %v5437, 1e-05
        %v5454 = vadd.f32 %v5438, 1e-05
        %v5455 = vadd.f32 %v5439, 1e-05
        %v5456 = vadd.f32 %v5440, 1e-05
        %v5457 = vadd.f32 %v5441, 1e-05
        %v5458 = vadd.f32 %v5442, 1e-05
        %v5459 = vadd.f32 %v5443, 1e-05
        %v5460 = vadd.f32 %v5444, 1e-05
        %v5461 = vrsqrt.pop %v5445
        %v5462 = vrsqrt.pop %v5446
        %v5463 = vrsqrt.pop %v5447
        %v5464 = vrsqrt.pop %v5448
        %v5465 = vrsqrt.pop %v5449
        %v5466 = vrsqrt.pop %v5450
        %v5467 = vrsqrt.pop %v5451
        %v5468 = vrsqrt.pop %v5452
        %v5469 = vrsqrt.pop %v5453
        %v5470 = vrsqrt.pop %v5454
        %v5471 = vrsqrt.pop %v5455
        %v5472 = vrsqrt.pop %v5456
        %v5473 = vrsqrt.pop %v5457
        %v5474 = vrsqrt.pop %v5458
        %v5475 = vrsqrt.pop %v5459
        %v5476 = vrsqrt.pop %v5460
        %v5477 = vmul.f32 %v5365, %v5461
        %v5478 = vmul.f32 %v5366, %v5462
        %v5479 = vmul.f32 %v5367, %v5463
        %v5480 = vmul.f32 %v5368, %v5464
        %v5481 = vmul.f32 %v5369, %v5465
        %v5482 = vmul.f32 %v5370, %v5466
        %v5483 = vmul.f32 %v5371, %v5467
        %v5484 = vmul.f32 %v5372, %v5468
        %v5485 = vmul.f32 %v5373, %v5469
        %v5486 = vmul.f32 %v5374, %v5470
        %v5487 = vmul.f32 %v5375, %v5471
        %v5488 = vmul.f32 %v5376, %v5472
        %v5489 = vmul.f32 %v5377, %v5473
        %v5490 = vmul.f32 %v5378, %v5474
        %v5491 = vmul.f32 %v5379, %v5475
        %v5492 = vmul.f32 %v5380, %v5476
        %v5493 = vld [vmem:[%s5] sm:$0x1]
        %v5495 = vlaneseq
        %v5496 = vshrl.u32 %v5495, 7
        %v5497 = vsub.s32 0, %v5496
        %v5498 = vrot.slane %v5493, %v5497
        %v5500 = vmul.f32 %v5477, %v5498
        %v5501 = vmul.f32 %v5478, %v5498
        %v5502 = vmul.f32 %v5479, %v5498
        %v5503 = vmul.f32 %v5480, %v5498
        %v5504 = vmul.f32 %v5481, %v5498
        %v5505 = vmul.f32 %v5482, %v5498
        %v5506 = vmul.f32 %v5483, %v5498
        %v5507 = vmul.f32 %v5484, %v5498
        %v5508 = vmul.f32 %v5485, %v5498
        %v5509 = vmul.f32 %v5486, %v5498
        %v5510 = vmul.f32 %v5487, %v5498
        %v5511 = vmul.f32 %v5488, %v5498
        %v5512 = vmul.f32 %v5489, %v5498
        %v5513 = vmul.f32 %v5490, %v5498
        %v5514 = vmul.f32 %v5491, %v5498
        %v5515 = vmul.f32 %v5492, %v5498
        %v5516 = vld [vmem:[%s6] sm:$0x1]
        %v5518 = vlaneseq
        %v5519 = vshrl.u32 %v5518, 7
        %v5520 = vsub.s32 0, %v5519
        %v5521 = vrot.slane %v5516, %v5520
        %v5523 = vadd.f32 %v5500, %v5521
        %v5524 = vadd.f32 %v5501, %v5521
        %v5525 = vadd.f32 %v5502, %v5521
        %v5526 = vadd.f32 %v5503, %v5521
        %v5527 = vadd.f32 %v5504, %v5521
        %v5528 = vadd.f32 %v5505, %v5521
        %v5529 = vadd.f32 %v5506, %v5521
        %v5530 = vadd.f32 %v5507, %v5521
        %v5531 = vadd.f32 %v5508, %v5521
        %v5532 = vadd.f32 %v5509, %v5521
        %v5533 = vadd.f32 %v5510, %v5521
        %v5534 = vadd.f32 %v5511, %v5521
        %v5535 = vadd.f32 %v5512, %v5521
        %v5536 = vadd.f32 %v5513, %v5521
        %v5537 = vadd.f32 %v5514, %v5521
        %v5538 = vadd.f32 %v5515, %v5521
        %v5539 = vpack.c.bf16 %v5524, %v5523
        %v5540 = vpack.c.bf16 %v5526, %v5525
        %v5541 = vpack.c.bf16 %v5528, %v5527
        %v5542 = vpack.c.bf16 %v5530, %v5529
        %v5543 = vpack.c.bf16 %v5532, %v5531
        %v5544 = vpack.c.bf16 %v5534, %v5533
        %v5545 = vpack.c.bf16 %v5536, %v5535
        %v5546 = vpack.c.bf16 %v5538, %v5537
        %v5547 = vld [vmem:[#allocation9] sm:$0xf]
        %v5548 = vld [vmem:[#allocation9 + $0x4] sm:$0xf]
        %v5549 = vld [vmem:[#allocation9 + $0x8] sm:$0xf]
        %v5550 = vld [vmem:[#allocation9 + $0xc] sm:$0xf]
        %v5551 = vld [vmem:[#allocation9 + $0x10] sm:$0xf]
        %v5552 = vld [vmem:[#allocation9 + $0x14] sm:$0xf]
        %v5553 = vld [vmem:[#allocation9 + $0x18] sm:$0xf]
        %v5554 = vld [vmem:[#allocation9 + $0x1c] sm:$0xf]
        %v5555 = vld [vmem:[#allocation9 + $0x20] sm:$0xf]
        %v5556 = vld [vmem:[#allocation9 + $0x24] sm:$0xf]
        %v5557 = vld [vmem:[#allocation9 + $0x28] sm:$0xf]
        %v5558 = vld [vmem:[#allocation9 + $0x2c] sm:$0xf]
        %v5559 = vld [vmem:[#allocation9 + $0x30] sm:$0xf]
        %v5560 = vld [vmem:[#allocation9 + $0x34] sm:$0xf]
        %v5561 = vld [vmem:[#allocation9 + $0x38] sm:$0xf]
        %v5562 = vld [vmem:[#allocation9 + $0x3c] sm:$0xf]
        %v5563 = vld [vmem:[%s8] sm:$0x1]
        %v5565 = vlaneseq
        %v5566 = vshrl.u32 %v5565, 7
        %v5567 = vsub.s32 0, %v5566
        %v5568 = vrot.slane %v5563, %v5567
        %v5586 = vunpack.c.l.b16 %v5547
        %v5587 = vunpack.c.l.b16 %v5548
        %v5588 = vunpack.c.l.b16 %v5549
        %v5589 = vunpack.c.l.b16 %v5550
        %v5590 = vunpack.c.l.b16 %v5551
        %v5591 = vunpack.c.l.b16 %v5552
        %v5592 = vunpack.c.l.b16 %v5553
        %v5593 = vunpack.c.l.b16 %v5554
        %v5594 = vunpack.c.l.b16 %v5555
        %v5595 = vunpack.c.l.b16 %v5556
        %v5596 = vunpack.c.l.b16 %v5557
        %v5597 = vunpack.c.l.b16 %v5558
        %v5598 = vunpack.c.l.b16 %v5559
        %v5599 = vunpack.c.l.b16 %v5560
        %v5600 = vunpack.c.l.b16 %v5561
        %v5601 = vunpack.c.l.b16 %v5562
        %v5602 = vpack.c.b16 %v5587, %v5586
        %v5603 = vpack.c.b16 %v5589, %v5588
        %v5604 = vpack.c.b16 %v5591, %v5590
        %v5605 = vpack.c.b16 %v5593, %v5592
        %v5606 = vpack.c.b16 %v5595, %v5594
        %v5607 = vpack.c.b16 %v5597, %v5596
        %v5608 = vpack.c.b16 %v5599, %v5598
        %v5609 = vpack.c.b16 %v5601, %v5600
        %5618 = vmatprep.subr.bf16.mxu0 0
        %5619 = vmatpush1.bf16.msra.mxu0 %v5602
        %5620 = vmatprep.subr.bf16.mxu0 0
        %5621 = vmatpush1.bf16.msra.mxu0 %v5603
        %5622 = vmatprep.subr.bf16.mxu0 0
        %5623 = vmatpush1.bf16.msra.mxu0 %v5604
        %5624 = vmatprep.subr.bf16.mxu0 0
        %5625 = vmatpush1.bf16.msra.mxu0 %v5605
        %5626 = vmatprep.subr.bf16.mxu0 0
        %5627 = vmatpush1.bf16.msra.mxu0 %v5606
        %5628 = vmatprep.subr.bf16.mxu0 0
        %5629 = vmatpush1.bf16.msra.mxu0 %v5607
        %5630 = vmatprep.subr.bf16.mxu0 0
        %5631 = vmatpush1.bf16.msra.mxu0 %v5608
        %5632 = vmatprep.subr.bf16.mxu0 0
        %5633 = vmatpush1.bf16.msra.mxu0 %v5609
        %5634 = vmatprep.subr.bf16.mxu0 0
        %5635 = vmatpush1.bf16.msra.mxu0 0
        %5636 = vmatprep.subr.bf16.mxu0 0
        %5637 = vmatpush1.bf16.msra.mxu0 0
        %5638 = vmatprep.subr.bf16.mxu0 0
        %5639 = vmatpush1.bf16.msra.mxu0 0
        %5640 = vmatprep.subr.bf16.mxu0 0
        %5641 = vmatpush1.bf16.msra.mxu0 0
        %5642 = vmatprep.subr.bf16.mxu0 0
        %5643 = vmatpush1.bf16.msra.mxu0 0
        %5644 = vmatprep.subr.bf16.mxu0 0
        %5645 = vmatpush1.bf16.msra.mxu0 0
        %5646 = vmatprep.subr.bf16.mxu0 0
        %5647 = vmatpush1.bf16.msra.mxu0 0
        %5648 = vmatprep.subr.bf16.mxu0 0
        %5649 = vmatpush1.bf16.msra.mxu0 0
        %5650 = vmatprep.mubr.bf16.mxu0 0
        %5651 = vmatmul.mubr.bf16.gmra.mrb[0].mxu0 %v5539
        %v5652 = vpop.f32.mrb[0].mxu0
        %v5653 = vadd.f32 %v5568, %v5652
        %v5654 = vpop.f32.mrb[0].mxu0
        %v5655 = vpop.f32.mrb[0].mxu0
        %v5656 = vadd.f32 %v5568, %v5655
        %v5657 = vpop.f32.mrb[0].mxu0
        %5658 = vmatprep.mubr.bf16.mxu0 0
        %5659 = vmatmul.mubr.bf16.gmra.mrb[0].mxu0 %v5540
        %v5660 = vpop.f32.mrb[0].mxu0
        %v5661 = vadd.f32 %v5568, %v5660
        %v5662 = vpop.f32.mrb[0].mxu0
        %v5663 = vpop.f32.mrb[0].mxu0
        %v5664 = vadd.f32 %v5568, %v5663
        %v5665 = vpop.f32.mrb[0].mxu0
        %5666 = vmatprep.mubr.bf16.mxu0 0
        %5667 = vmatmul.mubr.bf16.gmra.mrb[0].mxu0 %v5541
        %v5668 = vpop.f32.mrb[0].mxu0
        %v5669 = vadd.f32 %v5568, %v5668
        %v5670 = vpop.f32.mrb[0].mxu0
        %v5671 = vpop.f32.mrb[0].mxu0
        %v5672 = vadd.f32 %v5568, %v5671
        %v5673 = vpop.f32.mrb[0].mxu0
        %5674 = vmatprep.mubr.bf16.mxu0 0
        %5675 = vmatmul.mubr.bf16.gmra.mrb[0].mxu0 %v5542
        %v5676 = vpop.f32.mrb[0].mxu0
        %v5677 = vadd.f32 %v5568, %v5676
        %v5678 = vpop.f32.mrb[0].mxu0
        %v5679 = vpop.f32.mrb[0].mxu0
        %v5680 = vadd.f32 %v5568, %v5679
        %v5681 = vpop.f32.mrb[0].mxu0
        %5682 = vmatprep.mubr.bf16.mxu0 0
        %5683 = vmatmul.mubr.bf16.gmra.mrb[0].mxu0 %v5543
        %v5684 = vpop.f32.mrb[0].mxu0
        %v5685 = vadd.f32 %v5568, %v5684
        %v5686 = vpop.f32.mrb[0].mxu0
        %v5687 = vpop.f32.mrb[0].mxu0
        %v5688 = vadd.f32 %v5568, %v5687
        %v5689 = vpop.f32.mrb[0].mxu0
        %5690 = vmatprep.mubr.bf16.mxu0 0
        %5691 = vmatmul.mubr.bf16.gmra.mrb[0].mxu0 %v5544
        %v5692 = vpop.f32.mrb[0].mxu0
        %v5693 = vadd.f32 %v5568, %v5692
        %v5694 = vpop.f32.mrb[0].mxu0
        %v5695 = vpop.f32.mrb[0].mxu0
        %v5696 = vadd.f32 %v5568, %v5695
        %v5697 = vpop.f32.mrb[0].mxu0
        %5698 = vmatprep.mubr.bf16.mxu0 0
        %5699 = vmatmul.mubr.bf16.gmra.mrb[0].mxu0 %v5545
        %v5700 = vpop.f32.mrb[0].mxu0
        %v5701 = vadd.f32 %v5568, %v5700
        %v5702 = vpop.f32.mrb[0].mxu0
        %v5703 = vpop.f32.mrb[0].mxu0
        %v5704 = vadd.f32 %v5568, %v5703
        %v5705 = vpop.f32.mrb[0].mxu0
        %5706 = vmatprep.mubr.bf16.mxu0 0
        %5707 = vmatmul.mubr.bf16.gmra.mrb[0].mxu0 %v5546
        %v5708 = vpop.f32.mrb[0].mxu0
        %v5709 = vadd.f32 %v5568, %v5708
        %v5710 = vpop.f32.mrb[0].mxu0
        %v5711 = vpop.f32.mrb[0].mxu0
        %v5712 = vadd.f32 %v5568, %v5711
        %v5713 = vpop.f32.mrb[0].mxu0
        %5714 = vdwg.mxu0
        %v5715 = vmax.f32 %v5653, 0.0
        %v5716 = vmax.f32 %v5656, 0.0
        %v5717 = vmax.f32 %v5661, 0.0
        %v5718 = vmax.f32 %v5664, 0.0
        %v5719 = vmax.f32 %v5669, 0.0
        %v5720 = vmax.f32 %v5672, 0.0
        %v5721 = vmax.f32 %v5677, 0.0
        %v5722 = vmax.f32 %v5680, 0.0
        %v5723 = vmax.f32 %v5685, 0.0
        %v5724 = vmax.f32 %v5688, 0.0
        %v5725 = vmax.f32 %v5693, 0.0
        %v5726 = vmax.f32 %v5696, 0.0
        %v5727 = vmax.f32 %v5701, 0.0
        %v5728 = vmax.f32 %v5704, 0.0
        %v5729 = vmax.f32 %v5709, 0.0
        %v5730 = vmax.f32 %v5712, 0.0
        %v5731 = vpack.c.bf16 %v5716, %v5715
        %v5732 = vpack.c.bf16 %v5718, %v5717
        %v5733 = vpack.c.bf16 %v5720, %v5719
        %v5734 = vpack.c.bf16 %v5722, %v5721
        %v5735 = vpack.c.bf16 %v5724, %v5723
        %v5736 = vpack.c.bf16 %v5726, %v5725
        %v5737 = vpack.c.bf16 %v5728, %v5727
        %v5738 = vpack.c.bf16 %v5730, %v5729
        %v5739 = vld [vmem:[#allocation11] sm:$0xf]
        %v5740 = vld [vmem:[#allocation11 + $0x4] sm:$0xf]
        %v5741 = vld [vmem:[#allocation11 + $0x8] sm:$0xf]
        %v5742 = vld [vmem:[#allocation11 + $0xc] sm:$0xf]
        %v5743 = vld [vmem:[#allocation11 + $0x10] sm:$0xf]
        %v5744 = vld [vmem:[#allocation11 + $0x14] sm:$0xf]
        %v5745 = vld [vmem:[#allocation11 + $0x18] sm:$0xf]
        %v5746 = vld [vmem:[#allocation11 + $0x1c] sm:$0xf]
        %v5747 = vld [vmem:[#allocation11 + $0x20] sm:$0xf]
        %v5748 = vld [vmem:[#allocation11 + $0x24] sm:$0xf]
        %v5749 = vld [vmem:[#allocation11 + $0x28] sm:$0xf]
        %v5750 = vld [vmem:[#allocation11 + $0x2c] sm:$0xf]
        %v5751 = vld [vmem:[#allocation11 + $0x30] sm:$0xf]
        %v5752 = vld [vmem:[#allocation11 + $0x34] sm:$0xf]
        %v5753 = vld [vmem:[#allocation11 + $0x38] sm:$0xf]
        %v5754 = vld [vmem:[#allocation11 + $0x3c] sm:$0xf]
        %v5755 = vld [vmem:[%s10] sm:$0x1]
        %v5757 = vlaneseq
        %v5758 = vshrl.u32 %v5757, 7
        %v5759 = vsub.s32 0, %v5758
        %v5760 = vrot.slane %v5755, %v5759
        %v5778 = vunpack.c.l.b16 %v5739
        %v5779 = vunpack.c.l.b16 %v5740
        %v5780 = vunpack.c.l.b16 %v5741
        %v5781 = vunpack.c.l.b16 %v5742
        %v5782 = vunpack.c.l.b16 %v5743
        %v5783 = vunpack.c.l.b16 %v5744
        %v5784 = vunpack.c.l.b16 %v5745
        %v5785 = vunpack.c.l.b16 %v5746
        %v5786 = vunpack.c.l.b16 %v5747
        %v5787 = vunpack.c.l.b16 %v5748
        %v5788 = vunpack.c.l.b16 %v5749
        %v5789 = vunpack.c.l.b16 %v5750
        %v5790 = vunpack.c.l.b16 %v5751
        %v5791 = vunpack.c.l.b16 %v5752
        %v5792 = vunpack.c.l.b16 %v5753
        %v5793 = vunpack.c.l.b16 %v5754
        %v5794 = vpack.c.b16 %v5779, %v5778
        %v5795 = vpack.c.b16 %v5781, %v5780
        %v5796 = vpack.c.b16 %v5783, %v5782
        %v5797 = vpack.c.b16 %v5785, %v5784
        %v5798 = vpack.c.b16 %v5787, %v5786
        %v5799 = vpack.c.b16 %v5789, %v5788
        %v5800 = vpack.c.b16 %v5791, %v5790
        %v5801 = vpack.c.b16 %v5793, %v5792
        %5810 = vmatprep.subr.bf16.mxu0 0
        %5811 = vmatpush1.bf16.msra.mxu0 %v5794
        %5812 = vmatprep.subr.bf16.mxu0 0
        %5813 = vmatpush1.bf16.msra.mxu0 %v5795
        %5814 = vmatprep.subr.bf16.mxu0 0
        %5815 = vmatpush1.bf16.msra.mxu0 %v5796
        %5816 = vmatprep.subr.bf16.mxu0 0
        %5817 = vmatpush1.bf16.msra.mxu0 %v5797
        %5818 = vmatprep.subr.bf16.mxu0 0
        %5819 = vmatpush1.bf16.msra.mxu0 %v5798
        %5820 = vmatprep.subr.bf16.mxu0 0
        %5821 = vmatpush1.bf16.msra.mxu0 %v5799
        %5822 = vmatprep.subr.bf16.mxu0 0
        %5823 = vmatpush1.bf16.msra.mxu0 %v5800
        %5824 = vmatprep.subr.bf16.mxu0 0
        %5825 = vmatpush1.bf16.msra.mxu0 %v5801
        %5826 = vmatprep.subr.bf16.mxu0 0
        %5827 = vmatpush1.bf16.msra.mxu0 0
        %5828 = vmatprep.subr.bf16.mxu0 0
        %5829 = vmatpush1.bf16.msra.mxu0 0
        %5830 = vmatprep.subr.bf16.mxu0 0
        %5831 = vmatpush1.bf16.msra.mxu0 0
        %5832 = vmatprep.subr.bf16.mxu0 0
        %5833 = vmatpush1.bf16.msra.mxu0 0
        %5834 = vmatprep.subr.bf16.mxu0 0
        %5835 = vmatpush1.bf16.msra.mxu0 0
        %5836 = vmatprep.subr.bf16.mxu0 0
        %5837 = vmatpush1.bf16.msra.mxu0 0
        %5838 = vmatprep.subr.bf16.mxu0 0
        %5839 = vmatpush1.bf16.msra.mxu0 0
        %5840 = vmatprep.subr.bf16.mxu0 0
        %5841 = vmatpush1.bf16.msra.mxu0 0
        %5842 = vmatprep.mubr.bf16.mxu0 0
        %5843 = vmatmul.mubr.bf16.gmra.mrb[0].mxu0 %v5731
        %v5844 = vpop.f32.mrb[0].mxu0
        %v5845 = vadd.f32 %v5760, %v5844
        %v5846 = vpop.f32.mrb[0].mxu0
        %v5847 = vpop.f32.mrb[0].mxu0
        %v5848 = vadd.f32 %v5760, %v5847
        %v5849 = vpop.f32.mrb[0].mxu0
        %5850 = vmatprep.mubr.bf16.mxu0 0
        %5851 = vmatmul.mubr.bf16.gmra.mrb[0].mxu0 %v5732
        %v5852 = vpop.f32.mrb[0].mxu0
        %v5853 = vadd.f32 %v5760, %v5852
        %v5854 = vpop.f32.mrb[0].mxu0
        %v5855 = vpop.f32.mrb[0].mxu0
        %v5856 = vadd.f32 %v5760, %v5855
        %v5857 = vpop.f32.mrb[0].mxu0
        %5858 = vmatprep.mubr.bf16.mxu0 0
        %5859 = vmatmul.mubr.bf16.gmra.mrb[0].mxu0 %v5733
        %v5860 = vpop.f32.mrb[0].mxu0
        %v5861 = vadd.f32 %v5760, %v5860
        %v5862 = vpop.f32.mrb[0].mxu0
        %v5863 = vpop.f32.mrb[0].mxu0
        %v5864 = vadd.f32 %v5760, %v5863
        %v5865 = vpop.f32.mrb[0].mxu0
        %5866 = vmatprep.mubr.bf16.mxu0 0
        %5867 = vmatmul.mubr.bf16.gmra.mrb[0].mxu0 %v5734
        %v5868 = vpop.f32.mrb[0].mxu0
        %v5869 = vadd.f32 %v5760, %v5868
        %v5870 = vpop.f32.mrb[0].mxu0
        %v5871 = vpop.f32.mrb[0].mxu0
        %v5872 = vadd.f32 %v5760, %v5871
        %v5873 = vpop.f32.mrb[0].mxu0
        %5874 = vmatprep.mubr.bf16.mxu0 0
        %5875 = vmatmul.mubr.bf16.gmra.mrb[0].mxu0 %v5735
        %v5876 = vpop.f32.mrb[0].mxu0
        %v5877 = vadd.f32 %v5760, %v5876
        %v5878 = vpop.f32.mrb[0].mxu0
        %v5879 = vpop.f32.mrb[0].mxu0
        %v5880 = vadd.f32 %v5760, %v5879
        %v5881 = vpop.f32.mrb[0].mxu0
        %5882 = vmatprep.mubr.bf16.mxu0 0
        %5883 = vmatmul.mubr.bf16.gmra.mrb[0].mxu0 %v5736
        %v5884 = vpop.f32.mrb[0].mxu0
        %v5885 = vadd.f32 %v5760, %v5884
        %v5886 = vpop.f32.mrb[0].mxu0
        %v5887 = vpop.f32.mrb[0].mxu0
        %v5888 = vadd.f32 %v5760, %v5887
        %v5889 = vpop.f32.mrb[0].mxu0
        %5890 = vmatprep.mubr.bf16.mxu0 0
        %5891 = vmatmul.mubr.bf16.gmra.mrb[0].mxu0 %v5737
        %v5892 = vpop.f32.mrb[0].mxu0
        %v5893 = vadd.f32 %v5760, %v5892
        %v5894 = vpop.f32.mrb[0].mxu0
        %v5895 = vpop.f32.mrb[0].mxu0
        %v5896 = vadd.f32 %v5760, %v5895
        %v5897 = vpop.f32.mrb[0].mxu0
        %5898 = vmatprep.mubr.bf16.mxu0 0
        %5899 = vmatmul.mubr.bf16.gmra.mrb[0].mxu0 %v5738
        %v5900 = vpop.f32.mrb[0].mxu0
        %v5901 = vadd.f32 %v5760, %v5900
        %v5902 = vpop.f32.mrb[0].mxu0
        %v5903 = vpop.f32.mrb[0].mxu0
        %v5904 = vadd.f32 %v5760, %v5903
        %v5905 = vpop.f32.mrb[0].mxu0
        %5906 = vdwg.mxu0
        %v5907 = vmax.f32 %v5845, 0.0
        %v5908 = vmax.f32 %v5848, 0.0
        %v5909 = vmax.f32 %v5853, 0.0
        %v5910 = vmax.f32 %v5856, 0.0
        %v5911 = vmax.f32 %v5861, 0.0
        %v5912 = vmax.f32 %v5864, 0.0
        %v5913 = vmax.f32 %v5869, 0.0
        %v5914 = vmax.f32 %v5872, 0.0
        %v5915 = vmax.f32 %v5877, 0.0
        %v5916 = vmax.f32 %v5880, 0.0
        %v5917 = vmax.f32 %v5885, 0.0
        %v5918 = vmax.f32 %v5888, 0.0
        %v5919 = vmax.f32 %v5893, 0.0
        %v5920 = vmax.f32 %v5896, 0.0
        %v5921 = vmax.f32 %v5901, 0.0
        %v5922 = vmax.f32 %v5904, 0.0
        %v5923 = vadd.f32 %v5907, %v5523
        %v5924 = vadd.f32 %v5908, %v5524
        %v5925 = vadd.f32 %v5909, %v5525
        %v5926 = vadd.f32 %v5910, %v5526
        %v5927 = vadd.f32 %v5911, %v5527
        %v5928 = vadd.f32 %v5912, %v5528
        %v5929 = vadd.f32 %v5913, %v5529
        %v5930 = vadd.f32 %v5914, %v5530
        %v5931 = vadd.f32 %v5915, %v5531
        %v5932 = vadd.f32 %v5916, %v5532
        %v5933 = vadd.f32 %v5917, %v5533
        %v5934 = vadd.f32 %v5918, %v5534
        %v5935 = vadd.f32 %v5919, %v5535
        %v5936 = vadd.f32 %v5920, %v5536
        %v5937 = vadd.f32 %v5921, %v5537
        %v5938 = vadd.f32 %v5922, %v5538
        %5939 = vst [vmem:[%s476] sm:$0xff] %v5923
        %5940 = vst [vmem:[%s476 + $0x8] sm:$0xff] %v5924
        %5941 = vst [vmem:[%s476 + $0x10] sm:$0xff] %v5925
        %5942 = vst [vmem:[%s476 + $0x18] sm:$0xff] %v5926
        %5943 = vst [vmem:[%s476 + $0x20] sm:$0xff] %v5927
        %5944 = vst [vmem:[%s476 + $0x28] sm:$0xff] %v5928
        %5945 = vst [vmem:[%s476 + $0x30] sm:$0xff] %v5929
        %5946 = vst [vmem:[%s476 + $0x38] sm:$0xff] %v5930
        %5947 = vst [vmem:[%s476 + $0x40] sm:$0xff] %v5931
        %5948 = vst [vmem:[%s476 + $0x48] sm:$0xff] %v5932
        %5949 = vst [vmem:[%s476 + $0x50] sm:$0xff] %v5933
        %5950 = vst [vmem:[%s476 + $0x58] sm:$0xff] %v5934
        %5951 = vst [vmem:[%s476 + $0x60] sm:$0xff] %v5935
        %5952 = vst [vmem:[%s476 + $0x68] sm:$0xff] %v5936
        %5953 = vst [vmem:[%s476 + $0x70] sm:$0xff] %v5937
        %5954 = vst [vmem:[%s476 + $0x78] sm:$0xff] %v5938
        %s5955 = sand.u32 %s288, 1
        %s5956 = scalar_lea.sflag [#allocation5], %s5955
        %s5957 = sand.u32 %s288, 1
        %s5958 = smul.addr %s5957, 128
        %s5959 = scalar_lea.vmem [#allocation12], %s5958
        // Predicated region
        $region89: #{tpu_custom_call.1} parent=63 // pred_check
          %p5960 = pneg %p298
        $region90: #{tpu_custom_call.1} parent=63 // pred_check_branch
          %5962 = sbr.rel (%p5960) target = $region92
        $region91: #{tpu_custom_call.1} parent=63 // pred_region
          %s5963 = smul.u32 16, %s35
          %s5965 = ssub.s32 2048, 2048
          %5966 = vsyncadd %s5956, %s5965
          %s5967 = smul.addr %s34, 16
          %s5968 = sadd.s32 %s5963, %s5967
          %s5969 = smul.addr %s5968, 128
          %s5970 = scalar_lea.hbm %s11, %s5969
          %s5971 = sshll.u32 %s5959, 4
          %s5972 = int_to_ptr.vmem [resolvable:$true] %s5971
          %5977 = dma.vmem_to_hbm [thread:$0]  %s5972, 2048, %s5970, %s5956, 128, 128, 8
        $region92: #{tpu_custom_call.1} parent=63 // pred_fallthru
          _
      $region64: #{tpu_custom_call.1} parent=5 // pred_fallthru
        _
      %p5978 = scmp.le.s32.totalorder 2, %s25
      // Predicated region
      $region93: #{tpu_custom_call.1} parent=5 // pred_check
        %p5979 = pneg %p5978
      $region94: #{tpu_custom_call.1} parent=5 // pred_check_branch
        %5981 = sbr.rel (%p5979) target = $region96
      $region95: #{tpu_custom_call.1} parent=5 // pred_region
        %s5982 = ssub.s32 %s25, 2
        // Predicated region
        $region97: #{tpu_custom_call.1} parent=95 // pred_check
          %p5983 = pneg %p304
        $region98: #{tpu_custom_call.1} parent=95 // pred_check_branch
          %5985 = sbr.rel (%p5983) target = $region100
        $region99: #{tpu_custom_call.1} parent=95 // pred_region
          %s5986 = sand.u32 %s289, 1
          %s5987 = scalar_lea.sflag [#allocation5], %s5986
          %s5988 = sand.u32 %s289, 1
          %s5989 = smul.addr %s5988, 128
          %s5990 = scalar_lea.vmem [#allocation12], %s5989
          %5991 = dma.done %s5987, 2048
        $region100: #{tpu_custom_call.1} parent=95 // pred_fallthru
          _
      $region96: #{tpu_custom_call.1} parent=5 // pred_fallthru
        _
    $region6: #{tpu_custom_call.1} parent=1 // loop_footer
      %s29 = sadd.s32 1, %s25
    $region7: #{tpu_custom_call.1} parent=1 // loop_footer_branch
      %24 = sbr.rel target = $region3
    $region8: #{tpu_custom_call.1} parent=1 // loop_exit
      _
    %5992 = vsyncpa [#allocation4], 1
    %s5993 = scalar_lea.sflag [#allocation4], 1
    %5994 = vsyncpa %s5993, 1
    %5995 = vsyncpa [#allocation7], 1
    %5996 = vsyncpa [#allocation10], 1
    %5997 = vsyncpa [#allocation5], 1
    %s5998 = scalar_lea.sflag [#allocation5], 1
    %5999 = vsyncpa %s5998, 1

</llo_original>
